<compile_context>
chip_gen: v6e
topology: v6e:2x2x1
jax: 0.10.0
libtpu: 0.0.40
codegen_flags: <defaults>
</compile_context>

<pallas_src>
import functools

import jax
import jax.numpy as jnp
from jax.experimental import pallas as pl
from jax.experimental.pallas import tpu as pltpu


# ---------------------------------------------------------------------------
# Fused VAE forward kernel
# ---------------------------------------------------------------------------
def _vae_kernel(*refs, num_hidden, latent):
    it = iter(refs)

    def take(n):
        return [next(it) for _ in range(n)]

    def take_layers(n_pairs):
        return [(next(it), next(it)) for _ in range(n_pairs)]

    flat_std, flat_peds, flat_cars = take(3)
    eps_std, eps_peds, eps_cars = take(3)
    sum_peds, sum_cars = take(2)
    enc_std = take_layers(num_hidden + 1)
    enc_peds = take_layers(num_hidden + 1)
    enc_cars = take_layers(num_hidden + 1)
    attn = take_layers(3)
    dec_std = take_layers(num_hidden + 1)
    dec_peds = take_layers(num_hidden + 1)
    dec_cars = take_layers(num_hidden + 1)
    o_std, o_peds, o_cars, o_kl, o_wsum, o_wmu = take(6)

    f32 = jnp.float32

    def linear(x, wb, relu):
        w, b = wb
        y = jnp.dot(x, w[...], preferred_element_type=f32) + b[...]
        return jnp.maximum(y, 0.0) if relu else y

    # ---- encoder MLP stack: hidden layers -> fused (mu|logvar) -> reparam ----
    def encode(flat_ref, layers, eps_ref):
        x = flat_ref[...]
        for wb in layers[:-1]:
            x = linear(x, wb, relu=True)
        mv = linear(x, layers[-1], relu=False)          # (rows, 2*latent)
        mu = mv[:, :latent]
        lv = mv[:, latent:]
        z = mu + jnp.exp(0.5 * lv) * eps_ref[...]
        return z, mu, lv

    z_s, mu_s, lv_s = encode(flat_std, enc_std, eps_std)      # (B, L)
    z_pa, mu_pa, lv_pa = encode(flat_peds, enc_peds, eps_peds)  # (n_peds*B, L)
    z_ca, mu_ca, lv_ca = encode(flat_cars, enc_cars, eps_cars)  # (n_cars*B, L)

    # Sum over entities via a small selection-matrix matmul (MXU, no reshapes).
    sp = sum_peds[...]
    sc = sum_cars[...]

    def esum(m, x):
        return jnp.dot(m, x, preferred_element_type=f32)

    z_p, mu_p, lv_p = esum(sp, z_pa), esum(sp, mu_pa), esum(sp, lv_pa)
    z_c, mu_c, lv_c = esum(sc, z_ca), esum(sc, mu_ca), esum(sc, lv_ca)

    # ---- KL: -0.5 * mean_{modality,latent}( sum_batch(1 + lv - mu^2 - e^lv) ) ----
    def kl_part(mu, lv):
        t = 1.0 + lv - mu * mu - jnp.exp(lv)
        s = jnp.sum(t, axis=0, keepdims=True)
        return jnp.sum(s, axis=1, keepdims=True)        # (1, 1)

    o_kl[...] = (-0.5 / (3.0 * latent)) * (
        kl_part(mu_s, lv_s) + kl_part(mu_p, lv_p) + kl_part(mu_c, lv_c))

    # ---- attention fusion (shared MLP weights; applied to zs and to mus) ----
    (w1, b1), (w2, b2), (w3, b3) = attn
    w1v = w1[...]                                       # (3L, L)
    w1a = w1v[0:latent]
    w1b = w1v[latent:2 * latent]
    w1c = w1v[2 * latent:3 * latent]
    b1v, w2v, b2v, w3v, b3v = b1[...], w2[...], b2[...], w3[...], b3[...]

    def fuse(a, bb, c):
        # concat([a,bb,c],1) @ W1  ==  a@W1a + bb@W1b + c@W1c  (no lane concat)
        h = (jnp.dot(a, w1a, preferred_element_type=f32)
             + jnp.dot(bb, w1b, preferred_element_type=f32)
             + jnp.dot(c, w1c, preferred_element_type=f32) + b1v)
        h = jnp.maximum(h, 0.0)
        h = jnp.maximum(jnp.dot(h, w2v, preferred_element_type=f32) + b2v, 0.0)
        logits = jnp.dot(h, w3v, preferred_element_type=f32) + b3v   # (B, 3)
        m = jnp.max(logits, axis=1, keepdims=True)
        e = jnp.exp(logits - m)
        inv = pl.reciprocal(jnp.sum(e, axis=1, keepdims=True), approx=True)
        wts = e * inv
        return wts[:, 0:1] * a + wts[:, 1:2] * bb + wts[:, 2:3] * c

    w_sum = fuse(z_s, z_p, z_c)
    w_mu = fuse(mu_s, mu_p, mu_c)
    o_wsum[...] = w_sum
    o_wmu[...] = w_mu

    # ---- decoders: all consume weighted_sum, exactly as the reference ----
    def decode(x, layers):
        for wb in layers[:-1]:
            x = linear(x, wb, relu=True)
        return linear(x, layers[-1], relu=False)

    o_std[...] = decode(w_sum, dec_std)
    o_peds[...] = decode(w_sum, dec_peds)
    o_cars[...] = decode(w_sum, dec_cars)


def _vmem_spec():
    return pl.BlockSpec(memory_space=pltpu.MemorySpace.VMEM)


def fused_vae_call(flat_std, flat_peds, flat_cars, eps_std, eps_peds, eps_cars,
                   sum_peds, sum_cars, enc_std, enc_peds, enc_cars, attn,
                   dec_std, dec_peds, dec_cars, *, num_hidden, latent,
                   out_dims, seq_len):
    B = flat_std.shape[0]
    flat_params = []
    for group in (enc_std, enc_peds, enc_cars, attn, dec_std, dec_peds, dec_cars):
        for (w, b) in group:
            flat_params += [w, b]
    args = [flat_std, flat_peds, flat_cars, eps_std, eps_peds, eps_cars,
            sum_peds, sum_cars] + flat_params

    out_shape = (
        jax.ShapeDtypeStruct((B, seq_len * out_dims[0]), jnp.float32),
        jax.ShapeDtypeStruct((B, seq_len * out_dims[1]), jnp.float32),
        jax.ShapeDtypeStruct((B, seq_len * out_dims[2]), jnp.float32),
        jax.ShapeDtypeStruct((1, 1), jnp.float32),
        jax.ShapeDtypeStruct((B, latent), jnp.float32),
        jax.ShapeDtypeStruct((B, latent), jnp.float32),
    )
    kernel = functools.partial(_vae_kernel, num_hidden=num_hidden, latent=latent)
    return pl.pallas_call(
        kernel,
        out_shape=out_shape,
        in_specs=[_vmem_spec() for _ in args],
        out_specs=tuple(_vmem_spec() for _ in out_shape),
    )(*args)


# ---------------------------------------------------------------------------
# Parameter init (deterministic, synthetic; TimeseriesEncoder/Decoder sources
# are not provided — realized as embedding + MLP stacks)
# ---------------------------------------------------------------------------
def _init_linear(key, d_in, d_out):
    kw, kb = jax.random.split(key)
    w = jax.random.normal(kw, (d_in, d_out), jnp.float32) / jnp.sqrt(float(d_in))
    b = 0.01 * jax.random.normal(kb, (1, d_out), jnp.float32)
    return w, b


def init_encoder(key, cont_dim, cat2_vocabs, cat1_vocab, emb_dim, seq_len,
                 hidden, latent, num_layers):
    n = len(cat2_vocabs)
    keys = jax.random.split(key, n + num_layers + 3)
    p = {"emb_cat2": [0.1 * jax.random.normal(keys[i], (v, emb_dim), jnp.float32)
                      for i, v in enumerate(cat2_vocabs)]}
    has_cat1 = cat1_vocab is not None
    if has_cat1:
        p["emb_cat1"] = 0.1 * jax.random.normal(keys[n], (cat1_vocab, emb_dim),
                                                jnp.float32)
    feat = cont_dim + emb_dim * (n + (1 if has_cat1 else 0))
    d = seq_len * feat
    layers = []
    for l in range(num_layers):
        layers.append(_init_linear(keys[n + 1 + l], d, hidden))
        d = hidden
    # fused mu|logvar projection: one lane-denser (hidden, 2*latent) matmul
    layers.append(_init_linear(keys[n + 1 + num_layers], hidden, 2 * latent))
    p["layers"] = layers
    return p


def init_decoder(key, latent, hidden, seq_len, out_dim, num_layers):
    keys = jax.random.split(key, num_layers + 1)
    layers = []
    d = latent
    for l in range(num_layers):
        layers.append(_init_linear(keys[l], d, hidden))
        d = hidden
    layers.append(_init_linear(keys[num_layers], hidden, seq_len * out_dim))
    return {"layers": layers}


def init_vae_params(key, seq_len, latent, hidden, num_layers, emb_dim):
    ks = jax.random.split(key, 9)
    std_cat = [11, 64, 11, 7, 7, 7, 3, 3, 6, 4, 4, 7]
    mcars_cat = [5, 5, 6, 6, 4]
    mpeds_cat = [3]
    return {
        "standard_encoder": init_encoder(ks[0], 35, std_cat, 8, emb_dim,
                                         seq_len, hidden, latent, num_layers),
        "standard_decoder": init_decoder(ks[1], latent, hidden, seq_len, 47, num_layers),
        # TODO(synk): module __init__ says mcars input_dim=10 but forward slices 9
        # continuous cols per car; we follow the forward (9).
        "mcars_encoder": init_encoder(ks[2], 9, mcars_cat, 8, emb_dim,
                                      seq_len, hidden, latent, num_layers),
        "mcars_decoder": init_decoder(ks[3], latent, hidden, seq_len, 15, num_layers),
        "mpeds_encoder": init_encoder(ks[4], 4, mpeds_cat, None, emb_dim,
                                      seq_len, hidden, latent, num_layers),
        "mpeds_decoder": init_decoder(ks[5], latent, hidden, seq_len, 5, num_layers),
        "attention": [
            _init_linear(ks[6], latent * 3, latent),
            _init_linear(ks[7], latent, latent),
            _init_linear(ks[8], latent, 3),
        ],
    }


# ---------------------------------------------------------------------------
# XLA-side feature prep: embedding gathers + flatten (layout plumbing only)
# ---------------------------------------------------------------------------
def _embed_and_flatten(enc_p, cont, cat1, cat2):
    B = cont.shape[0]
    feats = [cont]
    if cat1 is not None:
        feats.append(enc_p["emb_cat1"][cat1])            # (B, S, E)
    if cat2.ndim == 2:
        cat2 = cat2[..., None]
    for j, emb in enumerate(enc_p["emb_cat2"]):
        feats.append(emb[cat2[..., j]])                   # (B, S, E)
    return jnp.concatenate(feats, axis=-1).reshape(B, -1)  # (B, S*F)


# ---------------------------------------------------------------------------
# TimeseriesVAE forward (one fused Pallas kernel)
# ---------------------------------------------------------------------------
def timeseries_vae_forward(params, inputs, eps_key, *, latent, num_layers, seq_len):
    inp0, inp1, inp2, inp3, inp4, inp5, inp6, inp7 = inputs
    B = inp0.shape[0]
    n_peds = inp4.shape[2]
    n_cars = inp6.shape[2]
    assert n_peds >= 1 and n_cars >= 1  # TODO(synk): zero-entity path not modelled

    flat_std = _embed_and_flatten(params["standard_encoder"], inp0, inp1, inp2)
    flat_peds = jnp.concatenate(
        [_embed_and_flatten(params["mpeds_encoder"],
                            inp3[:, :, 4 * i:4 * i + 4], None, inp4[:, :, i])
         for i in range(n_peds)], axis=0)                 # (n_peds*B, D)
    flat_cars = jnp.concatenate(
        [_embed_and_flatten(params["mcars_encoder"],
                            inp5[:, :, 9 * i:9 * i + 9], inp6[:, :, i],
                            inp7[:, :, 5 * i:5 * i + 5])
         for i in range(n_cars)], axis=0)                 # (n_cars*B, D)

    k0, k1, k2 = jax.random.split(eps_key, 3)
    eps_std = jax.random.normal(k0, (B, latent), jnp.float32)
    eps_peds = jax.random.normal(k1, (n_peds * B, latent), jnp.float32)
    eps_cars = jax.random.normal(k2, (n_cars * B, latent), jnp.float32)

    eye = jnp.eye(B, dtype=jnp.float32)
    sum_peds = jnp.tile(eye, (1, n_peds))                 # entity sum as a matmul
    sum_cars = jnp.tile(eye, (1, n_cars))

    dec_std_flat, dec_peds_flat, dec_cars_flat, kl, w_sum, w_mu = fused_vae_call(
        flat_std, flat_peds, flat_cars, eps_std, eps_peds, eps_cars,
        sum_peds, sum_cars,
        params["standard_encoder"]["layers"],
        params["mpeds_encoder"]["layers"],
        params["mcars_encoder"]["layers"],
        params["attention"],
        params["standard_decoder"]["layers"],
        params["mpeds_decoder"]["layers"],
        params["mcars_decoder"]["layers"],
        num_hidden=num_layers, latent=latent, out_dims=(47, 5, 15), seq_len=seq_len)

    decoded_standard = dec_std_flat.reshape(B, seq_len, 47)
    dec_peds_one = dec_peds_flat.reshape(B, seq_len, 5)
    dec_cars_one = dec_cars_flat.reshape(B, seq_len, 15)
    # Reference decodes the SAME weighted_sum n times with identical params and
    # concatenates -> outputs are identical copies; compute once, replicate.
    decoded_mpeds = jnp.concatenate([dec_peds_one] * n_peds, axis=-1)
    decoded_mcars = jnp.concatenate([dec_cars_one] * n_cars, axis=-1)

    return ((decoded_standard, decoded_mpeds, decoded_mcars),
            kl[0, 0], w_sum, w_mu)


# ---------------------------------------------------------------------------
# Main
# ---------------------------------------------------------------------------
if __name__ == "__main__":
    B, S = 2, 8
    latent_dim, hidden_dim, num_layers, emb_dim = 16, 32, 2, 4
    n_peds, n_cars = 2, 2

    params = init_vae_params(jax.random.PRNGKey(42), S, latent_dim, hidden_dim,
                             num_layers, emb_dim)

    key = jax.random.PRNGKey(0)
    dk = jax.random.split(key, 8)
    std_vocabs = [11, 64, 11, 7, 7, 7, 3, 3, 6, 4, 4, 7]
    mcars_vocabs = [5, 5, 6, 6, 4]

    inp0 = jax.random.normal(dk[0], (B, S, 35), jnp.float32)
    inp1 = jax.random.randint(dk[1], (B, S), 0, 8)
    inp2 = jnp.stack(
        [jax.random.randint(jax.random.fold_in(dk[2], j), (B, S), 0, v)
         for j, v in enumerate(std_vocabs)], axis=-1)                     # (B, S, 12)
    inp3 = jax.random.normal(dk[3], (B, S, 4 * n_peds), jnp.float32)
    inp4 = jax.random.randint(dk[4], (B, S, n_peds), 0, 3)
    inp5 = jax.random.normal(dk[5], (B, S, 9 * n_cars), jnp.float32)
    inp6 = jax.random.randint(dk[6], (B, S, n_cars), 0, 8)
    inp7_cols = []
    for i in range(n_cars):
        for j, v in enumerate(mcars_vocabs):
            inp7_cols.append(jax.random.randint(jax.random.fold_in(dk[7], i * 5 + j),
                                                (B, S), 0, v))
    inp7 = jnp.stack(inp7_cols, axis=-1)                                  # (B, S, 10)

    inputs = (inp0, inp1, inp2, inp3, inp4, inp5, inp6, inp7)

    fwd = jax.jit(functools.partial(timeseries_vae_forward, latent=latent_dim,
                                    num_layers=num_layers, seq_len=S))
    out = fwd(params, inputs, jax.random.PRNGKey(7))
    jax.block_until_ready(out)

    (dec_std, dec_peds, dec_cars), kl, w_sum, w_mu = out
    assert dec_std.shape == (B, S, 47)
    assert dec_peds.shape == (B, S, 5 * n_peds)
    assert dec_cars.shape == (B, S, 15 * n_cars)
    assert w_sum.shape == (B, latent_dim) and w_mu.shape == (B, latent_dim)
    assert kl.shape == ()
    assert all(bool(jnp.all(jnp.isfinite(x)))
               for x in (dec_std, dec_peds, dec_cars, w_sum, w_mu))
    print("KERNEL_OK")
</pallas_src>

<mosaic_0001>
module attributes {stable_mosaic.version = 11 : i64} {
  func.func @_vae_kernel(%arg0: memref<2x696xf32, #tpu.memory_space<vmem>>, %arg1: memref<4x64xf32, #tpu.memory_space<vmem>>, %arg2: memref<4x264xf32, #tpu.memory_space<vmem>>, %arg3: memref<2x16xf32, #tpu.memory_space<vmem>>, %arg4: memref<4x16xf32, #tpu.memory_space<vmem>>, %arg5: memref<4x16xf32, #tpu.memory_space<vmem>>, %arg6: memref<2x4xf32, #tpu.memory_space<vmem>>, %arg7: memref<2x4xf32, #tpu.memory_space<vmem>>, %arg8: memref<696x32xf32, #tpu.memory_space<vmem>>, %arg9: memref<1x32xf32, #tpu.memory_space<vmem>>, %arg10: memref<32x32xf32, #tpu.memory_space<vmem>>, %arg11: memref<1x32xf32, #tpu.memory_space<vmem>>, %arg12: memref<32x32xf32, #tpu.memory_space<vmem>>, %arg13: memref<1x32xf32, #tpu.memory_space<vmem>>, %arg14: memref<64x32xf32, #tpu.memory_space<vmem>>, %arg15: memref<1x32xf32, #tpu.memory_space<vmem>>, %arg16: memref<32x32xf32, #tpu.memory_space<vmem>>, %arg17: memref<1x32xf32, #tpu.memory_space<vmem>>, %arg18: memref<32x32xf32, #tpu.memory_space<vmem>>, %arg19: memref<1x32xf32, #tpu.memory_space<vmem>>, %arg20: memref<264x32xf32, #tpu.memory_space<vmem>>, %arg21: memref<1x32xf32, #tpu.memory_space<vmem>>, %arg22: memref<32x32xf32, #tpu.memory_space<vmem>>, %arg23: memref<1x32xf32, #tpu.memory_space<vmem>>, %arg24: memref<32x32xf32, #tpu.memory_space<vmem>>, %arg25: memref<1x32xf32, #tpu.memory_space<vmem>>, %arg26: memref<48x16xf32, #tpu.memory_space<vmem>>, %arg27: memref<1x16xf32, #tpu.memory_space<vmem>>, %arg28: memref<16x16xf32, #tpu.memory_space<vmem>>, %arg29: memref<1x16xf32, #tpu.memory_space<vmem>>, %arg30: memref<16x3xf32, #tpu.memory_space<vmem>>, %arg31: memref<1x3xf32, #tpu.memory_space<vmem>>, %arg32: memref<16x32xf32, #tpu.memory_space<vmem>>, %arg33: memref<1x32xf32, #tpu.memory_space<vmem>>, %arg34: memref<32x32xf32, #tpu.memory_space<vmem>>, %arg35: memref<1x32xf32, #tpu.memory_space<vmem>>, %arg36: memref<32x376xf32, #tpu.memory_space<vmem>>, %arg37: memref<1x376xf32, #tpu.memory_space<vmem>>, %arg38: memref<16x32xf32, #tpu.memory_space<vmem>>, %arg39: memref<1x32xf32, #tpu.memory_space<vmem>>, %arg40: memref<32x32xf32, #tpu.memory_space<vmem>>, %arg41: memref<1x32xf32, #tpu.memory_space<vmem>>, %arg42: memref<32x40xf32, #tpu.memory_space<vmem>>, %arg43: memref<1x40xf32, #tpu.memory_space<vmem>>, %arg44: memref<16x32xf32, #tpu.memory_space<vmem>>, %arg45: memref<1x32xf32, #tpu.memory_space<vmem>>, %arg46: memref<32x32xf32, #tpu.memory_space<vmem>>, %arg47: memref<1x32xf32, #tpu.memory_space<vmem>>, %arg48: memref<32x120xf32, #tpu.memory_space<vmem>>, %arg49: memref<1x120xf32, #tpu.memory_space<vmem>>, %arg50: memref<2x376xf32, #tpu.memory_space<vmem>>, %arg51: memref<2x40xf32, #tpu.memory_space<vmem>>, %arg52: memref<2x120xf32, #tpu.memory_space<vmem>>, %arg53: memref<1x1xf32, #tpu.memory_space<vmem>>, %arg54: memref<2x16xf32, #tpu.memory_space<vmem>>, %arg55: memref<2x16xf32, #tpu.memory_space<vmem>>) attributes {dimension_semantics = [], scalar_prefetch = 0 : i64, scratch_operands = 0 : i64, tpu.core_type = #tpu.core_type<tc>} {
    %c0 = arith.constant 0 : index
    %c0_0 = arith.constant 0 : index
    %0 = vector.load %arg0[%c0, %c0_0] : memref<2x696xf32, #tpu.memory_space<vmem>>, vector<2x696xf32>
    %c0_1 = arith.constant 0 : index
    %c0_2 = arith.constant 0 : index
    %1 = vector.load %arg8[%c0_1, %c0_2] : memref<696x32xf32, #tpu.memory_space<vmem>>, vector<696x32xf32>
    %cst = arith.constant dense<0.000000e+00> : vector<2x32xf32>
    %2 = tpu.matmul %0, %1, %cst {dimension_numbers = #tpu.dot_dimension_numbers<[1], [0], [0], [1], [0, 0, 1, 1], [], []>} : vector<2x696xf32>, vector<696x32xf32>, vector<2x32xf32> -> vector<2x32xf32>
    %c0_3 = arith.constant 0 : index
    %c0_4 = arith.constant 0 : index
    %3 = vector.load %arg9[%c0_3, %c0_4] : memref<1x32xf32, #tpu.memory_space<vmem>>, vector<1x32xf32>
    %4 = vector.broadcast %3 : vector<1x32xf32> to vector<2x32xf32>
    %5 = arith.addf %2, %4 : vector<2x32xf32>
    %cst_5 = arith.constant 0.000000e+00 : f32
    %6 = vector.broadcast %cst_5 : f32 to vector<2x32xf32>
    %7 = arith.maximumf %5, %6 : vector<2x32xf32>
    %c0_6 = arith.constant 0 : index
    %c0_7 = arith.constant 0 : index
    %8 = vector.load %arg10[%c0_6, %c0_7] : memref<32x32xf32, #tpu.memory_space<vmem>>, vector<32x32xf32>
    %cst_8 = arith.constant dense<0.000000e+00> : vector<2x32xf32>
    %9 = tpu.matmul %7, %8, %cst_8 {dimension_numbers = #tpu.dot_dimension_numbers<[1], [0], [0], [1], [0, 0, 1, 1], [], []>} : vector<2x32xf32>, vector<32x32xf32>, vector<2x32xf32> -> vector<2x32xf32>
    %c0_9 = arith.constant 0 : index
    %c0_10 = arith.constant 0 : index
    %10 = vector.load %arg11[%c0_9, %c0_10] : memref<1x32xf32, #tpu.memory_space<vmem>>, vector<1x32xf32>
    %11 = vector.broadcast %10 : vector<1x32xf32> to vector<2x32xf32>
    %12 = arith.addf %9, %11 : vector<2x32xf32>
    %cst_11 = arith.constant 0.000000e+00 : f32
    %13 = vector.broadcast %cst_11 : f32 to vector<2x32xf32>
    %14 = arith.maximumf %12, %13 : vector<2x32xf32>
    %c0_12 = arith.constant 0 : index
    %c0_13 = arith.constant 0 : index
    %15 = vector.load %arg12[%c0_12, %c0_13] : memref<32x32xf32, #tpu.memory_space<vmem>>, vector<32x32xf32>
    %cst_14 = arith.constant dense<0.000000e+00> : vector<2x32xf32>
    %16 = tpu.matmul %14, %15, %cst_14 {dimension_numbers = #tpu.dot_dimension_numbers<[1], [0], [0], [1], [0, 0, 1, 1], [], []>} : vector<2x32xf32>, vector<32x32xf32>, vector<2x32xf32> -> vector<2x32xf32>
    %c0_15 = arith.constant 0 : index
    %c0_16 = arith.constant 0 : index
    %17 = vector.load %arg13[%c0_15, %c0_16] : memref<1x32xf32, #tpu.memory_space<vmem>>, vector<1x32xf32>
    %18 = vector.broadcast %17 : vector<1x32xf32> to vector<2x32xf32>
    %19 = arith.addf %16, %18 : vector<2x32xf32>
    %20 = vector.extract_strided_slice %19 {offsets = [0, 0], sizes = [2, 16], strides = [1, 1]} : vector<2x32xf32> to vector<2x16xf32>
    %21 = vector.extract_strided_slice %19 {offsets = [0, 16], sizes = [2, 16], strides = [1, 1]} : vector<2x32xf32> to vector<2x16xf32>
    %cst_17 = arith.constant 5.000000e-01 : f32
    %22 = vector.broadcast %cst_17 : f32 to vector<2x16xf32>
    %23 = arith.mulf %22, %21 : vector<2x16xf32>
    %24 = math.exp %23 : vector<2x16xf32>
    %c0_18 = arith.constant 0 : index
    %c0_19 = arith.constant 0 : index
    %25 = vector.load %arg3[%c0_18, %c0_19] : memref<2x16xf32, #tpu.memory_space<vmem>>, vector<2x16xf32>
    %26 = arith.mulf %24, %25 : vector<2x16xf32>
    %27 = arith.addf %20, %26 : vector<2x16xf32>
    %c0_20 = arith.constant 0 : index
    %c0_21 = arith.constant 0 : index
    %28 = vector.load %arg1[%c0_20, %c0_21] : memref<4x64xf32, #tpu.memory_space<vmem>>, vector<4x64xf32>
    %c0_22 = arith.constant 0 : index
    %c0_23 = arith.constant 0 : index
    %29 = vector.load %arg14[%c0_22, %c0_23] : memref<64x32xf32, #tpu.memory_space<vmem>>, vector<64x32xf32>
    %cst_24 = arith.constant dense<0.000000e+00> : vector<4x32xf32>
    %30 = tpu.matmul %28, %29, %cst_24 {dimension_numbers = #tpu.dot_dimension_numbers<[1], [0], [0], [1], [0, 0, 1, 1], [], []>} : vector<4x64xf32>, vector<64x32xf32>, vector<4x32xf32> -> vector<4x32xf32>
    %c0_25 = arith.constant 0 : index
    %c0_26 = arith.constant 0 : index
    %31 = vector.load %arg15[%c0_25, %c0_26] : memref<1x32xf32, #tpu.memory_space<vmem>>, vector<1x32xf32>
    %32 = vector.broadcast %31 : vector<1x32xf32> to vector<4x32xf32>
    %33 = arith.addf %30, %32 : vector<4x32xf32>
    %cst_27 = arith.constant 0.000000e+00 : f32
    %34 = vector.broadcast %cst_27 : f32 to vector<4x32xf32>
    %35 = arith.maximumf %33, %34 : vector<4x32xf32>
    %c0_28 = arith.constant 0 : index
    %c0_29 = arith.constant 0 : index
    %36 = vector.load %arg16[%c0_28, %c0_29] : memref<32x32xf32, #tpu.memory_space<vmem>>, vector<32x32xf32>
    %cst_30 = arith.constant dense<0.000000e+00> : vector<4x32xf32>
    %37 = tpu.matmul %35, %36, %cst_30 {dimension_numbers = #tpu.dot_dimension_numbers<[1], [0], [0], [1], [0, 0, 1, 1], [], []>} : vector<4x32xf32>, vector<32x32xf32>, vector<4x32xf32> -> vector<4x32xf32>
    %c0_31 = arith.constant 0 : index
    %c0_32 = arith.constant 0 : index
    %38 = vector.load %arg17[%c0_31, %c0_32] : memref<1x32xf32, #tpu.memory_space<vmem>>, vector<1x32xf32>
    %39 = vector.broadcast %38 : vector<1x32xf32> to vector<4x32xf32>
    %40 = arith.addf %37, %39 : vector<4x32xf32>
    %cst_33 = arith.constant 0.000000e+00 : f32
    %41 = vector.broadcast %cst_33 : f32 to vector<4x32xf32>
    %42 = arith.maximumf %40, %41 : vector<4x32xf32>
    %c0_34 = arith.constant 0 : index
    %c0_35 = arith.constant 0 : index
    %43 = vector.load %arg18[%c0_34, %c0_35] : memref<32x32xf32, #tpu.memory_space<vmem>>, vector<32x32xf32>
    %cst_36 = arith.constant dense<0.000000e+00> : vector<4x32xf32>
    %44 = tpu.matmul %42, %43, %cst_36 {dimension_numbers = #tpu.dot_dimension_numbers<[1], [0], [0], [1], [0, 0, 1, 1], [], []>} : vector<4x32xf32>, vector<32x32xf32>, vector<4x32xf32> -> vector<4x32xf32>
    %c0_37 = arith.constant 0 : index
    %c0_38 = arith.constant 0 : index
    %45 = vector.load %arg19[%c0_37, %c0_38] : memref<1x32xf32, #tpu.memory_space<vmem>>, vector<1x32xf32>
    %46 = vector.broadcast %45 : vector<1x32xf32> to vector<4x32xf32>
    %47 = arith.addf %44, %46 : vector<4x32xf32>
    %48 = vector.extract_strided_slice %47 {offsets = [0, 0], sizes = [4, 16], strides = [1, 1]} : vector<4x32xf32> to vector<4x16xf32>
    %49 = vector.extract_strided_slice %47 {offsets = [0, 16], sizes = [4, 16], strides = [1, 1]} : vector<4x32xf32> to vector<4x16xf32>
    %cst_39 = arith.constant 5.000000e-01 : f32
    %50 = vector.broadcast %cst_39 : f32 to vector<4x16xf32>
    %51 = arith.mulf %50, %49 : vector<4x16xf32>
    %52 = math.exp %51 : vector<4x16xf32>
    %c0_40 = arith.constant 0 : index
    %c0_41 = arith.constant 0 : index
    %53 = vector.load %arg4[%c0_40, %c0_41] : memref<4x16xf32, #tpu.memory_space<vmem>>, vector<4x16xf32>
    %54 = arith.mulf %52, %53 : vector<4x16xf32>
    %55 = arith.addf %48, %54 : vector<4x16xf32>
    %c0_42 = arith.constant 0 : index
    %c0_43 = arith.constant 0 : index
    %56 = vector.load %arg2[%c0_42, %c0_43] : memref<4x264xf32, #tpu.memory_space<vmem>>, vector<4x264xf32>
    %c0_44 = arith.constant 0 : index
    %c0_45 = arith.constant 0 : index
    %57 = vector.load %arg20[%c0_44, %c0_45] : memref<264x32xf32, #tpu.memory_space<vmem>>, vector<264x32xf32>
    %cst_46 = arith.constant dense<0.000000e+00> : vector<4x32xf32>
    %58 = tpu.matmul %56, %57, %cst_46 {dimension_numbers = #tpu.dot_dimension_numbers<[1], [0], [0], [1], [0, 0, 1, 1], [], []>} : vector<4x264xf32>, vector<264x32xf32>, vector<4x32xf32> -> vector<4x32xf32>
    %c0_47 = arith.constant 0 : index
    %c0_48 = arith.constant 0 : index
    %59 = vector.load %arg21[%c0_47, %c0_48] : memref<1x32xf32, #tpu.memory_space<vmem>>, vector<1x32xf32>
    %60 = vector.broadcast %59 : vector<1x32xf32> to vector<4x32xf32>
    %61 = arith.addf %58, %60 : vector<4x32xf32>
    %cst_49 = arith.constant 0.000000e+00 : f32
    %62 = vector.broadcast %cst_49 : f32 to vector<4x32xf32>
    %63 = arith.maximumf %61, %62 : vector<4x32xf32>
    %c0_50 = arith.constant 0 : index
    %c0_51 = arith.constant 0 : index
    %64 = vector.load %arg22[%c0_50, %c0_51] : memref<32x32xf32, #tpu.memory_space<vmem>>, vector<32x32xf32>
    %cst_52 = arith.constant dense<0.000000e+00> : vector<4x32xf32>
    %65 = tpu.matmul %63, %64, %cst_52 {dimension_numbers = #tpu.dot_dimension_numbers<[1], [0], [0], [1], [0, 0, 1, 1], [], []>} : vector<4x32xf32>, vector<32x32xf32>, vector<4x32xf32> -> vector<4x32xf32>
    %c0_53 = arith.constant 0 : index
    %c0_54 = arith.constant 0 : index
    %66 = vector.load %arg23[%c0_53, %c0_54] : memref<1x32xf32, #tpu.memory_space<vmem>>, vector<1x32xf32>
    %67 = vector.broadcast %66 : vector<1x32xf32> to vector<4x32xf32>
    %68 = arith.addf %65, %67 : vector<4x32xf32>
    %cst_55 = arith.constant 0.000000e+00 : f32
    %69 = vector.broadcast %cst_55 : f32 to vector<4x32xf32>
    %70 = arith.maximumf %68, %69 : vector<4x32xf32>
    %c0_56 = arith.constant 0 : index
    %c0_57 = arith.constant 0 : index
    %71 = vector.load %arg24[%c0_56, %c0_57] : memref<32x32xf32, #tpu.memory_space<vmem>>, vector<32x32xf32>
    %cst_58 = arith.constant dense<0.000000e+00> : vector<4x32xf32>
    %72 = tpu.matmul %70, %71, %cst_58 {dimension_numbers = #tpu.dot_dimension_numbers<[1], [0], [0], [1], [0, 0, 1, 1], [], []>} : vector<4x32xf32>, vector<32x32xf32>, vector<4x32xf32> -> vector<4x32xf32>
    %c0_59 = arith.constant 0 : index
    %c0_60 = arith.constant 0 : index
    %73 = vector.load %arg25[%c0_59, %c0_60] : memref<1x32xf32, #tpu.memory_space<vmem>>, vector<1x32xf32>
    %74 = vector.broadcast %73 : vector<1x32xf32> to vector<4x32xf32>
    %75 = arith.addf %72, %74 : vector<4x32xf32>
    %76 = vector.extract_strided_slice %75 {offsets = [0, 0], sizes = [4, 16], strides = [1, 1]} : vector<4x32xf32> to vector<4x16xf32>
    %77 = vector.extract_strided_slice %75 {offsets = [0, 16], sizes = [4, 16], strides = [1, 1]} : vector<4x32xf32> to vector<4x16xf32>
    %cst_61 = arith.constant 5.000000e-01 : f32
    %78 = vector.broadcast %cst_61 : f32 to vector<4x16xf32>
    %79 = arith.mulf %78, %77 : vector<4x16xf32>
    %80 = math.exp %79 : vector<4x16xf32>
    %c0_62 = arith.constant 0 : index
    %c0_63 = arith.constant 0 : index
    %81 = vector.load %arg5[%c0_62, %c0_63] : memref<4x16xf32, #tpu.memory_space<vmem>>, vector<4x16xf32>
    %82 = arith.mulf %80, %81 : vector<4x16xf32>
    %83 = arith.addf %76, %82 : vector<4x16xf32>
    %c0_64 = arith.constant 0 : index
    %c0_65 = arith.constant 0 : index
    %84 = vector.load %arg6[%c0_64, %c0_65] : memref<2x4xf32, #tpu.memory_space<vmem>>, vector<2x4xf32>
    %c0_66 = arith.constant 0 : index
    %c0_67 = arith.constant 0 : index
    %85 = vector.load %arg7[%c0_66, %c0_67] : memref<2x4xf32, #tpu.memory_space<vmem>>, vector<2x4xf32>
    %cst_68 = arith.constant dense<0.000000e+00> : vector<2x16xf32>
    %86 = tpu.matmul %84, %55, %cst_68 {dimension_numbers = #tpu.dot_dimension_numbers<[1], [0], [0], [1], [0, 0, 1, 1], [], []>} : vector<2x4xf32>, vector<4x16xf32>, vector<2x16xf32> -> vector<2x16xf32>
    %cst_69 = arith.constant dense<0.000000e+00> : vector<2x16xf32>
    %87 = tpu.matmul %84, %48, %cst_69 {dimension_numbers = #tpu.dot_dimension_numbers<[1], [0], [0], [1], [0, 0, 1, 1], [], []>} : vector<2x4xf32>, vector<4x16xf32>, vector<2x16xf32> -> vector<2x16xf32>
    %cst_70 = arith.constant dense<0.000000e+00> : vector<2x16xf32>
    %88 = tpu.matmul %84, %49, %cst_70 {dimension_numbers = #tpu.dot_dimension_numbers<[1], [0], [0], [1], [0, 0, 1, 1], [], []>} : vector<2x4xf32>, vector<4x16xf32>, vector<2x16xf32> -> vector<2x16xf32>
    %cst_71 = arith.constant dense<0.000000e+00> : vector<2x16xf32>
    %89 = tpu.matmul %85, %83, %cst_71 {dimension_numbers = #tpu.dot_dimension_numbers<[1], [0], [0], [1], [0, 0, 1, 1], [], []>} : vector<2x4xf32>, vector<4x16xf32>, vector<2x16xf32> -> vector<2x16xf32>
    %cst_72 = arith.constant dense<0.000000e+00> : vector<2x16xf32>
    %90 = tpu.matmul %85, %76, %cst_72 {dimension_numbers = #tpu.dot_dimension_numbers<[1], [0], [0], [1], [0, 0, 1, 1], [], []>} : vector<2x4xf32>, vector<4x16xf32>, vector<2x16xf32> -> vector<2x16xf32>
    %cst_73 = arith.constant dense<0.000000e+00> : vector<2x16xf32>
    %91 = tpu.matmul %85, %77, %cst_73 {dimension_numbers = #tpu.dot_dimension_numbers<[1], [0], [0], [1], [0, 0, 1, 1], [], []>} : vector<2x4xf32>, vector<4x16xf32>, vector<2x16xf32> -> vector<2x16xf32>
    %cst_74 = arith.constant 1.000000e+00 : f32
    %92 = vector.broadcast %cst_74 : f32 to vector<2x16xf32>
    %93 = arith.addf %92, %21 : vector<2x16xf32>
    %94 = arith.mulf %20, %20 : vector<2x16xf32>
    %95 = arith.subf %93, %94 : vector<2x16xf32>
    %96 = math.exp %21 : vector<2x16xf32>
    %97 = arith.subf %95, %96 : vector<2x16xf32>
    %cst_75 = arith.constant dense<0.000000e+00> : vector<16xf32>
    %98 = vector.multi_reduction <add>, %97, %cst_75 [0] : vector<2x16xf32> to vector<16xf32>
    %99 = vector.shape_cast %98 : vector<16xf32> to vector<1x16xf32>
    %cst_76 = arith.constant dense<0.000000e+00> : vector<1xf32>
    %100 = vector.multi_reduction <add>, %99, %cst_76 [1] : vector<1x16xf32> to vector<1xf32>
    %101 = vector.shape_cast %100 : vector<1xf32> to vector<1x1xf32>
    %cst_77 = arith.constant 1.000000e+00 : f32
    %102 = vector.broadcast %cst_77 : f32 to vector<2x16xf32>
    %103 = arith.addf %102, %88 : vector<2x16xf32>
    %104 = arith.mulf %87, %87 : vector<2x16xf32>
    %105 = arith.subf %103, %104 : vector<2x16xf32>
    %106 = math.exp %88 : vector<2x16xf32>
    %107 = arith.subf %105, %106 : vector<2x16xf32>
    %cst_78 = arith.constant dense<0.000000e+00> : vector<16xf32>
    %108 = vector.multi_reduction <add>, %107, %cst_78 [0] : vector<2x16xf32> to vector<16xf32>
    %109 = vector.shape_cast %108 : vector<16xf32> to vector<1x16xf32>
    %cst_79 = arith.constant dense<0.000000e+00> : vector<1xf32>
    %110 = vector.multi_reduction <add>, %109, %cst_79 [1] : vector<1x16xf32> to vector<1xf32>
    %111 = vector.shape_cast %110 : vector<1xf32> to vector<1x1xf32>
    %112 = arith.addf %101, %111 : vector<1x1xf32>
    %cst_80 = arith.constant 1.000000e+00 : f32
    %113 = vector.broadcast %cst_80 : f32 to vector<2x16xf32>
    %114 = arith.addf %113, %91 : vector<2x16xf32>
    %115 = arith.mulf %90, %90 : vector<2x16xf32>
    %116 = arith.subf %114, %115 : vector<2x16xf32>
    %117 = math.exp %91 : vector<2x16xf32>
    %118 = arith.subf %116, %117 : vector<2x16xf32>
    %cst_81 = arith.constant dense<0.000000e+00> : vector<16xf32>
    %119 = vector.multi_reduction <add>, %118, %cst_81 [0] : vector<2x16xf32> to vector<16xf32>
    %120 = vector.shape_cast %119 : vector<16xf32> to vector<1x16xf32>
    %cst_82 = arith.constant dense<0.000000e+00> : vector<1xf32>
    %121 = vector.multi_reduction <add>, %120, %cst_82 [1] : vector<1x16xf32> to vector<1xf32>
    %122 = vector.shape_cast %121 : vector<1xf32> to vector<1x1xf32>
    %123 = arith.addf %112, %122 : vector<1x1xf32>
    %cst_83 = arith.constant -0.010416667 : f32
    %124 = vector.broadcast %cst_83 : f32 to vector<1x1xf32>
    %125 = arith.mulf %124, %123 : vector<1x1xf32>
    %c0_84 = arith.constant 0 : index
    %c0_85 = arith.constant 0 : index
    %126 = vector.load %arg53[%c0_84, %c0_85] : memref<1x1xf32, #tpu.memory_space<vmem>>, vector<1x1xf32>
    tpu.vector_store %arg53[%c0_84, %c0_85], %125 {strides = array<i32>} : memref<1x1xf32, #tpu.memory_space<vmem>>, vector<1x1xf32>,
    %c0_86 = arith.constant 0 : index
    %c0_87 = arith.constant 0 : index
    %127 = vector.load %arg26[%c0_86, %c0_87] : memref<48x16xf32, #tpu.memory_space<vmem>>, vector<48x16xf32>
    %128 = vector.extract_strided_slice %127 {offsets = [0, 0], sizes = [16, 16], strides = [1, 1]} : vector<48x16xf32> to vector<16x16xf32>
    %129 = vector.extract_strided_slice %127 {offsets = [16, 0], sizes = [16, 16], strides = [1, 1]} : vector<48x16xf32> to vector<16x16xf32>
    %130 = vector.extract_strided_slice %127 {offsets = [32, 0], sizes = [16, 16], strides = [1, 1]} : vector<48x16xf32> to vector<16x16xf32>
    %c0_88 = arith.constant 0 : index
    %c0_89 = arith.constant 0 : index
    %131 = vector.load %arg27[%c0_88, %c0_89] : memref<1x16xf32, #tpu.memory_space<vmem>>, vector<1x16xf32>
    %c0_90 = arith.constant 0 : index
    %c0_91 = arith.constant 0 : index
    %132 = vector.load %arg28[%c0_90, %c0_91] : memref<16x16xf32, #tpu.memory_space<vmem>>, vector<16x16xf32>
    %c0_92 = arith.constant 0 : index
    %c0_93 = arith.constant 0 : index
    %133 = vector.load %arg29[%c0_92, %c0_93] : memref<1x16xf32, #tpu.memory_space<vmem>>, vector<1x16xf32>
    %c0_94 = arith.constant 0 : index
    %c0_95 = arith.constant 0 : index
    %134 = vector.load %arg30[%c0_94, %c0_95] : memref<16x3xf32, #tpu.memory_space<vmem>>, vector<16x3xf32>
    %c0_96 = arith.constant 0 : index
    %c0_97 = arith.constant 0 : index
    %135 = vector.load %arg31[%c0_96, %c0_97] : memref<1x3xf32, #tpu.memory_space<vmem>>, vector<1x3xf32>
    %cst_98 = arith.constant dense<0.000000e+00> : vector<2x16xf32>
    %136 = tpu.matmul %27, %128, %cst_98 {dimension_numbers = #tpu.dot_dimension_numbers<[1], [0], [0], [1], [0, 0, 1, 1], [], []>} : vector<2x16xf32>, vector<16x16xf32>, vector<2x16xf32> -> vector<2x16xf32>
    %cst_99 = arith.constant dense<0.000000e+00> : vector<2x16xf32>
    %137 = tpu.matmul %86, %129, %cst_99 {dimension_numbers = #tpu.dot_dimension_numbers<[1], [0], [0], [1], [0, 0, 1, 1], [], []>} : vector<2x16xf32>, vector<16x16xf32>, vector<2x16xf32> -> vector<2x16xf32>
    %138 = arith.addf %136, %137 : vector<2x16xf32>
    %cst_100 = arith.constant dense<0.000000e+00> : vector<2x16xf32>
    %139 = tpu.matmul %89, %130, %cst_100 {dimension_numbers = #tpu.dot_dimension_numbers<[1], [0], [0], [1], [0, 0, 1, 1], [], []>} : vector<2x16xf32>, vector<16x16xf32>, vector<2x16xf32> -> vector<2x16xf32>
    %140 = arith.addf %138, %139 : vector<2x16xf32>
    %141 = vector.broadcast %131 : vector<1x16xf32> to vector<2x16xf32>
    %142 = arith.addf %140, %141 : vector<2x16xf32>
    %cst_101 = arith.constant 0.000000e+00 : f32
    %143 = vector.broadcast %cst_101 : f32 to vector<2x16xf32>
    %144 = arith.maximumf %142, %143 : vector<2x16xf32>
    %cst_102 = arith.constant dense<0.000000e+00> : vector<2x16xf32>
    %145 = tpu.matmul %144, %132, %cst_102 {dimension_numbers = #tpu.dot_dimension_numbers<[1], [0], [0], [1], [0, 0, 1, 1], [], []>} : vector<2x16xf32>, vector<16x16xf32>, vector<2x16xf32> -> vector<2x16xf32>
    %146 = vector.broadcast %133 : vector<1x16xf32> to vector<2x16xf32>
    %147 = arith.addf %145, %146 : vector<2x16xf32>
    %cst_103 = arith.constant 0.000000e+00 : f32
    %148 = vector.broadcast %cst_103 : f32 to vector<2x16xf32>
    %149 = arith.maximumf %147, %148 : vector<2x16xf32>
    %cst_104 = arith.constant dense<0.000000e+00> : vector<2x3xf32>
    %150 = tpu.matmul %149, %134, %cst_104 {dimension_numbers = #tpu.dot_dimension_numbers<[1], [0], [0], [1], [0, 0, 1, 1], [], []>} : vector<2x16xf32>, vector<16x3xf32>, vector<2x3xf32> -> vector<2x3xf32>
    %151 = vector.broadcast %135 : vector<1x3xf32> to vector<2x3xf32>
    %152 = arith.addf %150, %151 : vector<2x3xf32>
    %cst_105 = arith.constant dense<0xFF800000> : vector<2xf32>
    %153 = vector.multi_reduction <maximumf>, %152, %cst_105 [1] : vector<2x3xf32> to vector<2xf32>
    %154 = vector.shape_cast %153 : vector<2xf32> to vector<2x1xf32>
    %155 = vector.broadcast %154 : vector<2x1xf32> to vector<2x3xf32>
    %156 = arith.subf %152, %155 : vector<2x3xf32>
    %157 = math.exp %156 : vector<2x3xf32>
    %cst_106 = arith.constant dense<0.000000e+00> : vector<2xf32>
    %158 = vector.multi_reduction <add>, %157, %cst_106 [1] : vector<2x3xf32> to vector<2xf32>
    %159 = vector.shape_cast %158 : vector<2xf32> to vector<2x1xf32>
    %160 = tpu.reciprocal %159 {approx = true} : vector<2x1xf32> -> vector<2x1xf32>
    %161 = vector.broadcast %160 : vector<2x1xf32> to vector<2x3xf32>
    %162 = arith.mulf %157, %161 : vector<2x3xf32>
    %163 = vector.extract_strided_slice %162 {offsets = [0, 0], sizes = [2, 1], strides = [1, 1]} : vector<2x3xf32> to vector<2x1xf32>
    %164 = vector.broadcast %163 : vector<2x1xf32> to vector<2x16xf32>
    %165 = arith.mulf %164, %27 : vector<2x16xf32>
    %166 = vector.extract_strided_slice %162 {offsets = [0, 1], sizes = [2, 1], strides = [1, 1]} : vector<2x3xf32> to vector<2x1xf32>
    %167 = vector.broadcast %166 : vector<2x1xf32> to vector<2x16xf32>
    %168 = arith.mulf %167, %86 : vector<2x16xf32>
    %169 = arith.addf %165, %168 : vector<2x16xf32>
    %170 = vector.extract_strided_slice %162 {offsets = [0, 2], sizes = [2, 1], strides = [1, 1]} : vector<2x3xf32> to vector<2x1xf32>
    %171 = vector.broadcast %170 : vector<2x1xf32> to vector<2x16xf32>
    %172 = arith.mulf %171, %89 : vector<2x16xf32>
    %173 = arith.addf %169, %172 : vector<2x16xf32>
    %cst_107 = arith.constant dense<0.000000e+00> : vector<2x16xf32>
    %174 = tpu.matmul %20, %128, %cst_107 {dimension_numbers = #tpu.dot_dimension_numbers<[1], [0], [0], [1], [0, 0, 1, 1], [], []>} : vector<2x16xf32>, vector<16x16xf32>, vector<2x16xf32> -> vector<2x16xf32>
    %cst_108 = arith.constant dense<0.000000e+00> : vector<2x16xf32>
    %175 = tpu.matmul %87, %129, %cst_108 {dimension_numbers = #tpu.dot_dimension_numbers<[1], [0], [0], [1], [0, 0, 1, 1], [], []>} : vector<2x16xf32>, vector<16x16xf32>, vector<2x16xf32> -> vector<2x16xf32>
    %176 = arith.addf %174, %175 : vector<2x16xf32>
    %cst_109 = arith.constant dense<0.000000e+00> : vector<2x16xf32>
    %177 = tpu.matmul %90, %130, %cst_109 {dimension_numbers = #tpu.dot_dimension_numbers<[1], [0], [0], [1], [0, 0, 1, 1], [], []>} : vector<2x16xf32>, vector<16x16xf32>, vector<2x16xf32> -> vector<2x16xf32>
    %178 = arith.addf %176, %177 : vector<2x16xf32>
    %179 = vector.broadcast %131 : vector<1x16xf32> to vector<2x16xf32>
    %180 = arith.addf %178, %179 : vector<2x16xf32>
    %cst_110 = arith.constant 0.000000e+00 : f32
    %181 = vector.broadcast %cst_110 : f32 to vector<2x16xf32>
    %182 = arith.maximumf %180, %181 : vector<2x16xf32>
    %cst_111 = arith.constant dense<0.000000e+00> : vector<2x16xf32>
    %183 = tpu.matmul %182, %132, %cst_111 {dimension_numbers = #tpu.dot_dimension_numbers<[1], [0], [0], [1], [0, 0, 1, 1], [], []>} : vector<2x16xf32>, vector<16x16xf32>, vector<2x16xf32> -> vector<2x16xf32>
    %184 = vector.broadcast %133 : vector<1x16xf32> to vector<2x16xf32>
    %185 = arith.addf %183, %184 : vector<2x16xf32>
    %cst_112 = arith.constant 0.000000e+00 : f32
    %186 = vector.broadcast %cst_112 : f32 to vector<2x16xf32>
    %187 = arith.maximumf %185, %186 : vector<2x16xf32>
    %cst_113 = arith.constant dense<0.000000e+00> : vector<2x3xf32>
    %188 = tpu.matmul %187, %134, %cst_113 {dimension_numbers = #tpu.dot_dimension_numbers<[1], [0], [0], [1], [0, 0, 1, 1], [], []>} : vector<2x16xf32>, vector<16x3xf32>, vector<2x3xf32> -> vector<2x3xf32>
    %189 = vector.broadcast %135 : vector<1x3xf32> to vector<2x3xf32>
    %190 = arith.addf %188, %189 : vector<2x3xf32>
    %cst_114 = arith.constant dense<0xFF800000> : vector<2xf32>
    %191 = vector.multi_reduction <maximumf>, %190, %cst_114 [1] : vector<2x3xf32> to vector<2xf32>
    %192 = vector.shape_cast %191 : vector<2xf32> to vector<2x1xf32>
    %193 = vector.broadcast %192 : vector<2x1xf32> to vector<2x3xf32>
    %194 = arith.subf %190, %193 : vector<2x3xf32>
    %195 = math.exp %194 : vector<2x3xf32>
    %cst_115 = arith.constant dense<0.000000e+00> : vector<2xf32>
    %196 = vector.multi_reduction <add>, %195, %cst_115 [1] : vector<2x3xf32> to vector<2xf32>
    %197 = vector.shape_cast %196 : vector<2xf32> to vector<2x1xf32>
    %198 = tpu.reciprocal %197 {approx = true} : vector<2x1xf32> -> vector<2x1xf32>
    %199 = vector.broadcast %198 : vector<2x1xf32> to vector<2x3xf32>
    %200 = arith.mulf %195, %199 : vector<2x3xf32>
    %201 = vector.extract_strided_slice %200 {offsets = [0, 0], sizes = [2, 1], strides = [1, 1]} : vector<2x3xf32> to vector<2x1xf32>
    %202 = vector.broadcast %201 : vector<2x1xf32> to vector<2x16xf32>
    %203 = arith.mulf %202, %20 : vector<2x16xf32>
    %204 = vector.extract_strided_slice %200 {offsets = [0, 1], sizes = [2, 1], strides = [1, 1]} : vector<2x3xf32> to vector<2x1xf32>
    %205 = vector.broadcast %204 : vector<2x1xf32> to vector<2x16xf32>
    %206 = arith.mulf %205, %87 : vector<2x16xf32>
    %207 = arith.addf %203, %206 : vector<2x16xf32>
    %208 = vector.extract_strided_slice %200 {offsets = [0, 2], sizes = [2, 1], strides = [1, 1]} : vector<2x3xf32> to vector<2x1xf32>
    %209 = vector.broadcast %208 : vector<2x1xf32> to vector<2x16xf32>
    %210 = arith.mulf %209, %90 : vector<2x16xf32>
    %211 = arith.addf %207, %210 : vector<2x16xf32>
    %c0_116 = arith.constant 0 : index
    %c0_117 = arith.constant 0 : index
    %212 = vector.load %arg54[%c0_116, %c0_117] : memref<2x16xf32, #tpu.memory_space<vmem>>, vector<2x16xf32>
    tpu.vector_store %arg54[%c0_116, %c0_117], %173 {strides = array<i32>} : memref<2x16xf32, #tpu.memory_space<vmem>>, vector<2x16xf32>,
    %c0_118 = arith.constant 0 : index
    %c0_119 = arith.constant 0 : index
    %213 = vector.load %arg55[%c0_118, %c0_119] : memref<2x16xf32, #tpu.memory_space<vmem>>, vector<2x16xf32>
    tpu.vector_store %arg55[%c0_118, %c0_119], %211 {strides = array<i32>} : memref<2x16xf32, #tpu.memory_space<vmem>>, vector<2x16xf32>,
    %c0_120 = arith.constant 0 : index
    %c0_121 = arith.constant 0 : index
    %214 = vector.load %arg32[%c0_120, %c0_121] : memref<16x32xf32, #tpu.memory_space<vmem>>, vector<16x32xf32>
    %cst_122 = arith.constant dense<0.000000e+00> : vector<2x32xf32>
    %215 = tpu.matmul %173, %214, %cst_122 {dimension_numbers = #tpu.dot_dimension_numbers<[1], [0], [0], [1], [0, 0, 1, 1], [], []>} : vector<2x16xf32>, vector<16x32xf32>, vector<2x32xf32> -> vector<2x32xf32>
    %c0_123 = arith.constant 0 : index
    %c0_124 = arith.constant 0 : index
    %216 = vector.load %arg33[%c0_123, %c0_124] : memref<1x32xf32, #tpu.memory_space<vmem>>, vector<1x32xf32>
    %217 = vector.broadcast %216 : vector<1x32xf32> to vector<2x32xf32>
    %218 = arith.addf %215, %217 : vector<2x32xf32>
    %cst_125 = arith.constant 0.000000e+00 : f32
    %219 = vector.broadcast %cst_125 : f32 to vector<2x32xf32>
    %220 = arith.maximumf %218, %219 : vector<2x32xf32>
    %c0_126 = arith.constant 0 : index
    %c0_127 = arith.constant 0 : index
    %221 = vector.load %arg34[%c0_126, %c0_127] : memref<32x32xf32, #tpu.memory_space<vmem>>, vector<32x32xf32>
    %cst_128 = arith.constant dense<0.000000e+00> : vector<2x32xf32>
    %222 = tpu.matmul %220, %221, %cst_128 {dimension_numbers = #tpu.dot_dimension_numbers<[1], [0], [0], [1], [0, 0, 1, 1], [], []>} : vector<2x32xf32>, vector<32x32xf32>, vector<2x32xf32> -> vector<2x32xf32>
    %c0_129 = arith.constant 0 : index
    %c0_130 = arith.constant 0 : index
    %223 = vector.load %arg35[%c0_129, %c0_130] : memref<1x32xf32, #tpu.memory_space<vmem>>, vector<1x32xf32>
    %224 = vector.broadcast %223 : vector<1x32xf32> to vector<2x32xf32>
    %225 = arith.addf %222, %224 : vector<2x32xf32>
    %cst_131 = arith.constant 0.000000e+00 : f32
    %226 = vector.broadcast %cst_131 : f32 to vector<2x32xf32>
    %227 = arith.maximumf %225, %226 : vector<2x32xf32>
    %c0_132 = arith.constant 0 : index
    %c0_133 = arith.constant 0 : index
    %228 = vector.load %arg36[%c0_132, %c0_133] : memref<32x376xf32, #tpu.memory_space<vmem>>, vector<32x376xf32>
    %cst_134 = arith.constant dense<0.000000e+00> : vector<2x376xf32>
    %229 = tpu.matmul %227, %228, %cst_134 {dimension_numbers = #tpu.dot_dimension_numbers<[1], [0], [0], [1], [0, 0, 1, 1], [], []>} : vector<2x32xf32>, vector<32x376xf32>, vector<2x376xf32> -> vector<2x376xf32>
    %c0_135 = arith.constant 0 : index
    %c0_136 = arith.constant 0 : index
    %230 = vector.load %arg37[%c0_135, %c0_136] : memref<1x376xf32, #tpu.memory_space<vmem>>, vector<1x376xf32>
    %231 = vector.broadcast %230 : vector<1x376xf32> to vector<2x376xf32>
    %232 = arith.addf %229, %231 : vector<2x376xf32>
    %c0_137 = arith.constant 0 : index
    %c0_138 = arith.constant 0 : index
    %233 = vector.load %arg50[%c0_137, %c0_138] : memref<2x376xf32, #tpu.memory_space<vmem>>, vector<2x376xf32>
    tpu.vector_store %arg50[%c0_137, %c0_138], %232 {strides = array<i32>} : memref<2x376xf32, #tpu.memory_space<vmem>>, vector<2x376xf32>,
    %c0_139 = arith.constant 0 : index
    %c0_140 = arith.constant 0 : index
    %234 = vector.load %arg38[%c0_139, %c0_140] : memref<16x32xf32, #tpu.memory_space<vmem>>, vector<16x32xf32>
    %cst_141 = arith.constant dense<0.000000e+00> : vector<2x32xf32>
    %235 = tpu.matmul %173, %234, %cst_141 {dimension_numbers = #tpu.dot_dimension_numbers<[1], [0], [0], [1], [0, 0, 1, 1], [], []>} : vector<2x16xf32>, vector<16x32xf32>, vector<2x32xf32> -> vector<2x32xf32>
    %c0_142 = arith.constant 0 : index
    %c0_143 = arith.constant 0 : index
    %236 = vector.load %arg39[%c0_142, %c0_143] : memref<1x32xf32, #tpu.memory_space<vmem>>, vector<1x32xf32>
    %237 = vector.broadcast %236 : vector<1x32xf32> to vector<2x32xf32>
    %238 = arith.addf %235, %237 : vector<2x32xf32>
    %cst_144 = arith.constant 0.000000e+00 : f32
    %239 = vector.broadcast %cst_144 : f32 to vector<2x32xf32>
    %240 = arith.maximumf %238, %239 : vector<2x32xf32>
    %c0_145 = arith.constant 0 : index
    %c0_146 = arith.constant 0 : index
    %241 = vector.load %arg40[%c0_145, %c0_146] : memref<32x32xf32, #tpu.memory_space<vmem>>, vector<32x32xf32>
    %cst_147 = arith.constant dense<0.000000e+00> : vector<2x32xf32>
    %242 = tpu.matmul %240, %241, %cst_147 {dimension_numbers = #tpu.dot_dimension_numbers<[1], [0], [0], [1], [0, 0, 1, 1], [], []>} : vector<2x32xf32>, vector<32x32xf32>, vector<2x32xf32> -> vector<2x32xf32>
    %c0_148 = arith.constant 0 : index
    %c0_149 = arith.constant 0 : index
    %243 = vector.load %arg41[%c0_148, %c0_149] : memref<1x32xf32, #tpu.memory_space<vmem>>, vector<1x32xf32>
    %244 = vector.broadcast %243 : vector<1x32xf32> to vector<2x32xf32>
    %245 = arith.addf %242, %244 : vector<2x32xf32>
    %cst_150 = arith.constant 0.000000e+00 : f32
    %246 = vector.broadcast %cst_150 : f32 to vector<2x32xf32>
    %247 = arith.maximumf %245, %246 : vector<2x32xf32>
    %c0_151 = arith.constant 0 : index
    %c0_152 = arith.constant 0 : index
    %248 = vector.load %arg42[%c0_151, %c0_152] : memref<32x40xf32, #tpu.memory_space<vmem>>, vector<32x40xf32>
    %cst_153 = arith.constant dense<0.000000e+00> : vector<2x40xf32>
    %249 = tpu.matmul %247, %248, %cst_153 {dimension_numbers = #tpu.dot_dimension_numbers<[1], [0], [0], [1], [0, 0, 1, 1], [], []>} : vector<2x32xf32>, vector<32x40xf32>, vector<2x40xf32> -> vector<2x40xf32>
    %c0_154 = arith.constant 0 : index
    %c0_155 = arith.constant 0 : index
    %250 = vector.load %arg43[%c0_154, %c0_155] : memref<1x40xf32, #tpu.memory_space<vmem>>, vector<1x40xf32>
    %251 = vector.broadcast %250 : vector<1x40xf32> to vector<2x40xf32>
    %252 = arith.addf %249, %251 : vector<2x40xf32>
    %c0_156 = arith.constant 0 : index
    %c0_157 = arith.constant 0 : index
    %253 = vector.load %arg51[%c0_156, %c0_157] : memref<2x40xf32, #tpu.memory_space<vmem>>, vector<2x40xf32>
    tpu.vector_store %arg51[%c0_156, %c0_157], %252 {strides = array<i32>} : memref<2x40xf32, #tpu.memory_space<vmem>>, vector<2x40xf32>,
    %c0_158 = arith.constant 0 : index
    %c0_159 = arith.constant 0 : index
    %254 = vector.load %arg44[%c0_158, %c0_159] : memref<16x32xf32, #tpu.memory_space<vmem>>, vector<16x32xf32>
    %cst_160 = arith.constant dense<0.000000e+00> : vector<2x32xf32>
    %255 = tpu.matmul %173, %254, %cst_160 {dimension_numbers = #tpu.dot_dimension_numbers<[1], [0], [0], [1], [0, 0, 1, 1], [], []>} : vector<2x16xf32>, vector<16x32xf32>, vector<2x32xf32> -> vector<2x32xf32>
    %c0_161 = arith.constant 0 : index
    %c0_162 = arith.constant 0 : index
    %256 = vector.load %arg45[%c0_161, %c0_162] : memref<1x32xf32, #tpu.memory_space<vmem>>, vector<1x32xf32>
    %257 = vector.broadcast %256 : vector<1x32xf32> to vector<2x32xf32>
    %258 = arith.addf %255, %257 : vector<2x32xf32>
    %cst_163 = arith.constant 0.000000e+00 : f32
    %259 = vector.broadcast %cst_163 : f32 to vector<2x32xf32>
    %260 = arith.maximumf %258, %259 : vector<2x32xf32>
    %c0_164 = arith.constant 0 : index
    %c0_165 = arith.constant 0 : index
    %261 = vector.load %arg46[%c0_164, %c0_165] : memref<32x32xf32, #tpu.memory_space<vmem>>, vector<32x32xf32>
    %cst_166 = arith.constant dense<0.000000e+00> : vector<2x32xf32>
    %262 = tpu.matmul %260, %261, %cst_166 {dimension_numbers = #tpu.dot_dimension_numbers<[1], [0], [0], [1], [0, 0, 1, 1], [], []>} : vector<2x32xf32>, vector<32x32xf32>, vector<2x32xf32> -> vector<2x32xf32>
    %c0_167 = arith.constant 0 : index
    %c0_168 = arith.constant 0 : index
    %263 = vector.load %arg47[%c0_167, %c0_168] : memref<1x32xf32, #tpu.memory_space<vmem>>, vector<1x32xf32>
    %264 = vector.broadcast %263 : vector<1x32xf32> to vector<2x32xf32>
    %265 = arith.addf %262, %264 : vector<2x32xf32>
    %cst_169 = arith.constant 0.000000e+00 : f32
    %266 = vector.broadcast %cst_169 : f32 to vector<2x32xf32>
    %267 = arith.maximumf %265, %266 : vector<2x32xf32>
    %c0_170 = arith.constant 0 : index
    %c0_171 = arith.constant 0 : index
    %268 = vector.load %arg48[%c0_170, %c0_171] : memref<32x120xf32, #tpu.memory_space<vmem>>, vector<32x120xf32>
    %cst_172 = arith.constant dense<0.000000e+00> : vector<2x120xf32>
    %269 = tpu.matmul %267, %268, %cst_172 {dimension_numbers = #tpu.dot_dimension_numbers<[1], [0], [0], [1], [0, 0, 1, 1], [], []>} : vector<2x32xf32>, vector<32x120xf32>, vector<2x120xf32> -> vector<2x120xf32>
    %c0_173 = arith.constant 0 : index
    %c0_174 = arith.constant 0 : index
    %270 = vector.load %arg49[%c0_173, %c0_174] : memref<1x120xf32, #tpu.memory_space<vmem>>, vector<1x120xf32>
    %271 = vector.broadcast %270 : vector<1x120xf32> to vector<2x120xf32>
    %272 = arith.addf %269, %271 : vector<2x120xf32>
    %c0_175 = arith.constant 0 : index
    %c0_176 = arith.constant 0 : index
    %273 = vector.load %arg52[%c0_175, %c0_176] : memref<2x120xf32, #tpu.memory_space<vmem>>, vector<2x120xf32>
    tpu.vector_store %arg52[%c0_175, %c0_176], %272 {strides = array<i32>} : memref<2x120xf32, #tpu.memory_space<vmem>>, vector<2x120xf32>,
    return
  }
}

</mosaic_0001>

<llo_original>
// kernel: tile.14
$region0: #{tile.14}
  %s0 = inlined_call_operand.vmem [shape: f32[2,2,2], index: 0, kind: input, shape index: {}]
  %s1 = inlined_call_operand.vmem [shape: f32[2,4], index: 1, kind: output, shape index: {}]
  $region1: #{tile.14} parent=0
    #allocation0 [shape = 'u8[4096]{0}', space=vmem, size = 0x1000, scoped, tag = 'scoped mem for output reshape']
    #allocation1 [shape = 'u8[8192]{0}', space=vmem, size = 0x2000, scoped, tag = 'scoped mem for input reshape']
    %s3 = sshll.u32 1, 2
    %s4 = ssub.s32 %s3, 1
    %s5 = scalar_lea.vmem %s0, 2
    %v6 = vld [vmem:[%s5] sm:%s4]
    %s7 = scalar_lea.vmem [#allocation1], 8
    %8 = vst [vmem:[%s7] sm:%s4] %v6
    %v9 = vld [vmem:[%s0] sm:%s4]
    %10 = vst [vmem:[#allocation1] sm:%s4] %v9
    %s11 = smov 3
    %v12 = vld [vmem:[#allocation1] ss:$8 sm:%s11]
    %vm13 = vcmask 15360
    %14 = vst.msk [vmem:[#allocation0] sm:$0x3] %vm13, %v12
    %s15 = scalar_lea.vmem [#allocation1], 1
    %s16 = smov 3
    %v17 = vld [vmem:[%s15] ss:$8 sm:%s16]
    %18 = vrot.lane.b32.xlu0 %v17, 2
    %v19 = vpop.permute.xlu0 %18
    %vm20 = vcmask 31760
    %21 = vst.msk [vmem:[#allocation0] sm:$0x3] %vm20, %v19
    %s23 = sshll.u32 1, 2
    %s24 = ssub.s32 %s23, 1
    %v26 = vld [vmem:[#allocation0] sm:%s24]
    %s27 = sshll.u32 1, 2
    %s28 = ssub.s32 %s27, 1
    %29 = vst [vmem:[%s1] sm:%s28] %v26

// kernel: timeseries_vae_forward.3
$region0: #{timeseries_vae_forward.3}
  #allocation0 [shape = 'u32[]', space=smem, size = 0x4, offset = 0x4, fixed_abs, tag = 'smem constant byte address 0x4 - core index']
  #allocation1 [shape = 'u32[144,128]{1,0:T(1,128)}', space=vmem, size = 0x12000, scoped, tag = 'internal scratch']
  %s0 = inlined_call_operand.smem [shape: u32[56], index: -1, kind: input, shape index: {}]
  %s1 = sld [smem:[%s0]]
  %s2 = scalar_lea.smem %s0, 1
  %s3 = sld [smem:[%s2]]
  %s4 = scalar_lea.smem %s0, 2
  %s5 = sld [smem:[%s4]]
  %s6 = scalar_lea.smem %s0, 3
  %s7 = sld [smem:[%s6]]
  %s8 = scalar_lea.smem %s0, 4
  %s9 = sld [smem:[%s8]]
  %s10 = scalar_lea.smem %s0, 5
  %s11 = sld [smem:[%s10]]
  %s12 = scalar_lea.smem %s0, 6
  %s13 = sld [smem:[%s12]]
  %s14 = scalar_lea.smem %s0, 7
  %s15 = sld [smem:[%s14]]
  %s16 = scalar_lea.smem %s0, 8
  %s17 = sld [smem:[%s16]]
  %s18 = scalar_lea.smem %s0, 9
  %s19 = sld [smem:[%s18]]
  %s20 = scalar_lea.smem %s0, 10
  %s21 = sld [smem:[%s20]]
  %s22 = scalar_lea.smem %s0, 11
  %s23 = sld [smem:[%s22]]
  %s24 = scalar_lea.smem %s0, 12
  %s25 = sld [smem:[%s24]]
  %s26 = scalar_lea.smem %s0, 13
  %s27 = sld [smem:[%s26]]
  %s28 = scalar_lea.smem %s0, 14
  %s29 = sld [smem:[%s28]]
  %s30 = scalar_lea.smem %s0, 15
  %s31 = sld [smem:[%s30]]
  %s32 = scalar_lea.smem %s0, 16
  %s33 = sld [smem:[%s32]]
  %s34 = scalar_lea.smem %s0, 17
  %s35 = sld [smem:[%s34]]
  %s36 = scalar_lea.smem %s0, 18
  %s37 = sld [smem:[%s36]]
  %s38 = scalar_lea.smem %s0, 19
  %s39 = sld [smem:[%s38]]
  %s40 = scalar_lea.smem %s0, 20
  %s41 = sld [smem:[%s40]]
  %s42 = scalar_lea.smem %s0, 21
  %s43 = sld [smem:[%s42]]
  %s44 = scalar_lea.smem %s0, 22
  %s45 = sld [smem:[%s44]]
  %s46 = scalar_lea.smem %s0, 23
  %s47 = sld [smem:[%s46]]
  %s48 = scalar_lea.smem %s0, 24
  %s49 = sld [smem:[%s48]]
  %s50 = scalar_lea.smem %s0, 25
  %s51 = sld [smem:[%s50]]
  %s52 = scalar_lea.smem %s0, 26
  %s53 = sld [smem:[%s52]]
  %s54 = scalar_lea.smem %s0, 27
  %s55 = sld [smem:[%s54]]
  %s56 = scalar_lea.smem %s0, 28
  %s57 = sld [smem:[%s56]]
  %s58 = scalar_lea.smem %s0, 29
  %s59 = sld [smem:[%s58]]
  %s60 = scalar_lea.smem %s0, 30
  %s61 = sld [smem:[%s60]]
  %s62 = scalar_lea.smem %s0, 31
  %s63 = sld [smem:[%s62]]
  %s64 = scalar_lea.smem %s0, 32
  %s65 = sld [smem:[%s64]]
  %s66 = scalar_lea.smem %s0, 33
  %s67 = sld [smem:[%s66]]
  %s68 = scalar_lea.smem %s0, 34
  %s69 = sld [smem:[%s68]]
  %s70 = scalar_lea.smem %s0, 35
  %s71 = sld [smem:[%s70]]
  %s72 = scalar_lea.smem %s0, 36
  %s73 = sld [smem:[%s72]]
  %s74 = scalar_lea.smem %s0, 37
  %s75 = sld [smem:[%s74]]
  %s76 = scalar_lea.smem %s0, 38
  %s77 = sld [smem:[%s76]]
  %s78 = scalar_lea.smem %s0, 39
  %s79 = sld [smem:[%s78]]
  %s80 = scalar_lea.smem %s0, 40
  %s81 = sld [smem:[%s80]]
  %s82 = scalar_lea.smem %s0, 41
  %s83 = sld [smem:[%s82]]
  %s84 = scalar_lea.smem %s0, 42
  %s85 = sld [smem:[%s84]]
  %s86 = scalar_lea.smem %s0, 43
  %s87 = sld [smem:[%s86]]
  %s88 = scalar_lea.smem %s0, 44
  %s89 = sld [smem:[%s88]]
  %s90 = scalar_lea.smem %s0, 45
  %s91 = sld [smem:[%s90]]
  %s92 = scalar_lea.smem %s0, 46
  %s93 = sld [smem:[%s92]]
  %s94 = scalar_lea.smem %s0, 47
  %s95 = sld [smem:[%s94]]
  %s96 = scalar_lea.smem %s0, 48
  %s97 = sld [smem:[%s96]]
  %s98 = scalar_lea.smem %s0, 49
  %s99 = sld [smem:[%s98]]
  %s100 = scalar_lea.smem %s0, 50
  %s101 = sld [smem:[%s100]]
  %s102 = scalar_lea.smem %s0, 51
  %s103 = sld [smem:[%s102]]
  %s104 = scalar_lea.smem %s0, 52
  %s105 = sld [smem:[%s104]]
  %s106 = scalar_lea.smem %s0, 53
  %s107 = sld [smem:[%s106]]
  %s108 = scalar_lea.smem %s0, 54
  %s109 = sld [smem:[%s108]]
  %s110 = scalar_lea.smem %s0, 55
  %s111 = sld [smem:[%s110]]
  %112 = xla_tuple %s101, %s103, %s105, %s107, %s109, %s111
  %s113 = sld [smem:[#allocation0]]
  $region250: #{timeseries_vae_forward.3} parent=0
    _
  %s115 = ssub.s32 1, %s113
  %s116 = scalar_select 0, %s115, %s113
  $region1: #{timeseries_vae_forward.3} parent=0
    #allocation2 [shape = 'u8[512]{0}', space=vmem, size = 0x400, scoped, tag = 'output window, operand 3, single buffered']
    #allocation3 [shape = 's32[1]{0}', space=sflag, size = 0x4, scoped, tag = 'scoped memory for timeseries_vae_forward.3']
    #allocation4 [shape = 'u8[1024]{0}', space=vmem, size = 0x400, scoped, tag = 'output window, operand 4, single buffered']
    #allocation5 [shape = 's32[1]{0}', space=sflag, size = 0x4, scoped, tag = 'scoped memory for timeseries_vae_forward.3']
    #allocation6 [shape = 'u8[1024]{0}', space=vmem, size = 0x400, scoped, tag = 'output window, operand 5, single buffered']
    %117 = vsyncpa [#allocation3], 0
    %118 = vsyncpa [#allocation5], 0
    // Predicated region
    $region2: #{timeseries_vae_forward.3} parent=1 // pred_check
      _
    $region3: #{timeseries_vae_forward.3} parent=1 // pred_check_branch
      %120 = sbr.rel (0) target = $region5
    $region4: #{timeseries_vae_forward.3} parent=1 // pred_region
      _
    $region5: #{timeseries_vae_forward.3} parent=1 // pred_fallthru
      _
    // Predicated region
    $region6: #{timeseries_vae_forward.3} parent=1 // pred_check
      _
    $region7: #{timeseries_vae_forward.3} parent=1 // pred_check_branch
      %122 = sbr.rel (0) target = $region9
    $region8: #{timeseries_vae_forward.3} parent=1 // pred_region
      _
    $region9: #{timeseries_vae_forward.3} parent=1 // pred_fallthru
      _
    // Predicated region
    $region10: #{timeseries_vae_forward.3} parent=1 // pred_check
      _
    $region11: #{timeseries_vae_forward.3} parent=1 // pred_check_branch
      %124 = sbr.rel (0) target = $region13
    $region12: #{timeseries_vae_forward.3} parent=1 // pred_region
      _
    $region13: #{timeseries_vae_forward.3} parent=1 // pred_fallthru
      _
    // Predicated region
    $region14: #{timeseries_vae_forward.3} parent=1 // pred_check
      _
    $region15: #{timeseries_vae_forward.3} parent=1 // pred_check_branch
      %126 = sbr.rel (0) target = $region17
    $region16: #{timeseries_vae_forward.3} parent=1 // pred_region
      _
    $region17: #{timeseries_vae_forward.3} parent=1 // pred_fallthru
      _
    // Predicated region
    $region18: #{timeseries_vae_forward.3} parent=1 // pred_check
      _
    $region19: #{timeseries_vae_forward.3} parent=1 // pred_check_branch
      %128 = sbr.rel (0) target = $region21
    $region20: #{timeseries_vae_forward.3} parent=1 // pred_region
      _
    $region21: #{timeseries_vae_forward.3} parent=1 // pred_fallthru
      _
    // Predicated region
    $region22: #{timeseries_vae_forward.3} parent=1 // pred_check
      _
    $region23: #{timeseries_vae_forward.3} parent=1 // pred_check_branch
      %130 = sbr.rel (0) target = $region25
    $region24: #{timeseries_vae_forward.3} parent=1 // pred_region
      _
    $region25: #{timeseries_vae_forward.3} parent=1 // pred_fallthru
      _
    // Predicated region
    $region26: #{timeseries_vae_forward.3} parent=1 // pred_check
      _
    $region27: #{timeseries_vae_forward.3} parent=1 // pred_check_branch
      %132 = sbr.rel (0) target = $region29
    $region28: #{timeseries_vae_forward.3} parent=1 // pred_region
      _
    $region29: #{timeseries_vae_forward.3} parent=1 // pred_fallthru
      _
    // Predicated region
    $region30: #{timeseries_vae_forward.3} parent=1 // pred_check
      _
    $region31: #{timeseries_vae_forward.3} parent=1 // pred_check_branch
      %134 = sbr.rel (0) target = $region33
    $region32: #{timeseries_vae_forward.3} parent=1 // pred_region
      _
    $region33: #{timeseries_vae_forward.3} parent=1 // pred_fallthru
      _
    // Predicated region
    $region34: #{timeseries_vae_forward.3} parent=1 // pred_check
      _
    $region35: #{timeseries_vae_forward.3} parent=1 // pred_check_branch
      %136 = sbr.rel (0) target = $region37
    $region36: #{timeseries_vae_forward.3} parent=1 // pred_region
      _
    $region37: #{timeseries_vae_forward.3} parent=1 // pred_fallthru
      _
    // Predicated region
    $region38: #{timeseries_vae_forward.3} parent=1 // pred_check
      _
    $region39: #{timeseries_vae_forward.3} parent=1 // pred_check_branch
      %138 = sbr.rel (0) target = $region41
    $region40: #{timeseries_vae_forward.3} parent=1 // pred_region
      _
    $region41: #{timeseries_vae_forward.3} parent=1 // pred_fallthru
      _
    // Predicated region
    $region42: #{timeseries_vae_forward.3} parent=1 // pred_check
      _
    $region43: #{timeseries_vae_forward.3} parent=1 // pred_check_branch
      %140 = sbr.rel (0) target = $region45
    $region44: #{timeseries_vae_forward.3} parent=1 // pred_region
      _
    $region45: #{timeseries_vae_forward.3} parent=1 // pred_fallthru
      _
    // Predicated region
    $region46: #{timeseries_vae_forward.3} parent=1 // pred_check
      _
    $region47: #{timeseries_vae_forward.3} parent=1 // pred_check_branch
      %142 = sbr.rel (0) target = $region49
    $region48: #{timeseries_vae_forward.3} parent=1 // pred_region
      _
    $region49: #{timeseries_vae_forward.3} parent=1 // pred_fallthru
      _
    // Predicated region
    $region50: #{timeseries_vae_forward.3} parent=1 // pred_check
      _
    $region51: #{timeseries_vae_forward.3} parent=1 // pred_check_branch
      %144 = sbr.rel (0) target = $region53
    $region52: #{timeseries_vae_forward.3} parent=1 // pred_region
      _
    $region53: #{timeseries_vae_forward.3} parent=1 // pred_fallthru
      _
    // Predicated region
    $region54: #{timeseries_vae_forward.3} parent=1 // pred_check
      _
    $region55: #{timeseries_vae_forward.3} parent=1 // pred_check_branch
      %146 = sbr.rel (0) target = $region57
    $region56: #{timeseries_vae_forward.3} parent=1 // pred_region
      _
    $region57: #{timeseries_vae_forward.3} parent=1 // pred_fallthru
      _
    // Predicated region
    $region58: #{timeseries_vae_forward.3} parent=1 // pred_check
      _
    $region59: #{timeseries_vae_forward.3} parent=1 // pred_check_branch
      %148 = sbr.rel (0) target = $region61
    $region60: #{timeseries_vae_forward.3} parent=1 // pred_region
      _
    $region61: #{timeseries_vae_forward.3} parent=1 // pred_fallthru
      _
    // Predicated region
    $region62: #{timeseries_vae_forward.3} parent=1 // pred_check
      _
    $region63: #{timeseries_vae_forward.3} parent=1 // pred_check_branch
      %150 = sbr.rel (0) target = $region65
    $region64: #{timeseries_vae_forward.3} parent=1 // pred_region
      _
    $region65: #{timeseries_vae_forward.3} parent=1 // pred_fallthru
      _
    // Predicated region
    $region66: #{timeseries_vae_forward.3} parent=1 // pred_check
      _
    $region67: #{timeseries_vae_forward.3} parent=1 // pred_check_branch
      %152 = sbr.rel (0) target = $region69
    $region68: #{timeseries_vae_forward.3} parent=1 // pred_region
      _
    $region69: #{timeseries_vae_forward.3} parent=1 // pred_fallthru
      _
    // Predicated region
    $region70: #{timeseries_vae_forward.3} parent=1 // pred_check
      _
    $region71: #{timeseries_vae_forward.3} parent=1 // pred_check_branch
      %154 = sbr.rel (0) target = $region73
    $region72: #{timeseries_vae_forward.3} parent=1 // pred_region
      _
    $region73: #{timeseries_vae_forward.3} parent=1 // pred_fallthru
      _
    // Predicated region
    $region74: #{timeseries_vae_forward.3} parent=1 // pred_check
      _
    $region75: #{timeseries_vae_forward.3} parent=1 // pred_check_branch
      %156 = sbr.rel (0) target = $region77
    $region76: #{timeseries_vae_forward.3} parent=1 // pred_region
      _
    $region77: #{timeseries_vae_forward.3} parent=1 // pred_fallthru
      _
    // Predicated region
    $region78: #{timeseries_vae_forward.3} parent=1 // pred_check
      _
    $region79: #{timeseries_vae_forward.3} parent=1 // pred_check_branch
      %158 = sbr.rel (0) target = $region81
    $region80: #{timeseries_vae_forward.3} parent=1 // pred_region
      _
    $region81: #{timeseries_vae_forward.3} parent=1 // pred_fallthru
      _
    // Predicated region
    $region82: #{timeseries_vae_forward.3} parent=1 // pred_check
      _
    $region83: #{timeseries_vae_forward.3} parent=1 // pred_check_branch
      %160 = sbr.rel (0) target = $region85
    $region84: #{timeseries_vae_forward.3} parent=1 // pred_region
      _
    $region85: #{timeseries_vae_forward.3} parent=1 // pred_fallthru
      _
    // Predicated region
    $region86: #{timeseries_vae_forward.3} parent=1 // pred_check
      _
    $region87: #{timeseries_vae_forward.3} parent=1 // pred_check_branch
      %162 = sbr.rel (0) target = $region89
    $region88: #{timeseries_vae_forward.3} parent=1 // pred_region
      _
    $region89: #{timeseries_vae_forward.3} parent=1 // pred_fallthru
      _
    // Predicated region
    $region90: #{timeseries_vae_forward.3} parent=1 // pred_check
      _
    $region91: #{timeseries_vae_forward.3} parent=1 // pred_check_branch
      %164 = sbr.rel (0) target = $region93
    $region92: #{timeseries_vae_forward.3} parent=1 // pred_region
      _
    $region93: #{timeseries_vae_forward.3} parent=1 // pred_fallthru
      _
    // Predicated region
    $region94: #{timeseries_vae_forward.3} parent=1 // pred_check
      _
    $region95: #{timeseries_vae_forward.3} parent=1 // pred_check_branch
      %166 = sbr.rel (0) target = $region97
    $region96: #{timeseries_vae_forward.3} parent=1 // pred_region
      _
    $region97: #{timeseries_vae_forward.3} parent=1 // pred_fallthru
      _
    // Predicated region
    $region98: #{timeseries_vae_forward.3} parent=1 // pred_check
      _
    $region99: #{timeseries_vae_forward.3} parent=1 // pred_check_branch
      %168 = sbr.rel (0) target = $region101
    $region100: #{timeseries_vae_forward.3} parent=1 // pred_region
      _
    $region101: #{timeseries_vae_forward.3} parent=1 // pred_fallthru
      _
    // Predicated region
    $region102: #{timeseries_vae_forward.3} parent=1 // pred_check
      _
    $region103: #{timeseries_vae_forward.3} parent=1 // pred_check_branch
      %170 = sbr.rel (0) target = $region105
    $region104: #{timeseries_vae_forward.3} parent=1 // pred_region
      _
    $region105: #{timeseries_vae_forward.3} parent=1 // pred_fallthru
      _
    // Predicated region
    $region106: #{timeseries_vae_forward.3} parent=1 // pred_check
      _
    $region107: #{timeseries_vae_forward.3} parent=1 // pred_check_branch
      %172 = sbr.rel (0) target = $region109
    $region108: #{timeseries_vae_forward.3} parent=1 // pred_region
      _
    $region109: #{timeseries_vae_forward.3} parent=1 // pred_fallthru
      _
    // Predicated region
    $region110: #{timeseries_vae_forward.3} parent=1 // pred_check
      _
    $region111: #{timeseries_vae_forward.3} parent=1 // pred_check_branch
      %174 = sbr.rel (0) target = $region113
    $region112: #{timeseries_vae_forward.3} parent=1 // pred_region
      _
    $region113: #{timeseries_vae_forward.3} parent=1 // pred_fallthru
      _
    // Predicated region
    $region114: #{timeseries_vae_forward.3} parent=1 // pred_check
      _
    $region115: #{timeseries_vae_forward.3} parent=1 // pred_check_branch
      %176 = sbr.rel (0) target = $region117
    $region116: #{timeseries_vae_forward.3} parent=1 // pred_region
      _
    $region117: #{timeseries_vae_forward.3} parent=1 // pred_fallthru
      _
    // Predicated region
    $region118: #{timeseries_vae_forward.3} parent=1 // pred_check
      _
    $region119: #{timeseries_vae_forward.3} parent=1 // pred_check_branch
      %178 = sbr.rel (0) target = $region121
    $region120: #{timeseries_vae_forward.3} parent=1 // pred_region
      _
    $region121: #{timeseries_vae_forward.3} parent=1 // pred_fallthru
      _
    // Predicated region
    $region122: #{timeseries_vae_forward.3} parent=1 // pred_check
      _
    $region123: #{timeseries_vae_forward.3} parent=1 // pred_check_branch
      %180 = sbr.rel (0) target = $region125
    $region124: #{timeseries_vae_forward.3} parent=1 // pred_region
      _
    $region125: #{timeseries_vae_forward.3} parent=1 // pred_fallthru
      _
    // Predicated region
    $region126: #{timeseries_vae_forward.3} parent=1 // pred_check
      _
    $region127: #{timeseries_vae_forward.3} parent=1 // pred_check_branch
      %182 = sbr.rel (0) target = $region129
    $region128: #{timeseries_vae_forward.3} parent=1 // pred_region
      _
    $region129: #{timeseries_vae_forward.3} parent=1 // pred_fallthru
      _
    // Predicated region
    $region130: #{timeseries_vae_forward.3} parent=1 // pred_check
      _
    $region131: #{timeseries_vae_forward.3} parent=1 // pred_check_branch
      %184 = sbr.rel (0) target = $region133
    $region132: #{timeseries_vae_forward.3} parent=1 // pred_region
      _
    $region133: #{timeseries_vae_forward.3} parent=1 // pred_fallthru
      _
    // Predicated region
    $region134: #{timeseries_vae_forward.3} parent=1 // pred_check
      _
    $region135: #{timeseries_vae_forward.3} parent=1 // pred_check_branch
      %186 = sbr.rel (0) target = $region137
    $region136: #{timeseries_vae_forward.3} parent=1 // pred_region
      _
    $region137: #{timeseries_vae_forward.3} parent=1 // pred_fallthru
      _
    // Predicated region
    $region138: #{timeseries_vae_forward.3} parent=1 // pred_check
      _
    $region139: #{timeseries_vae_forward.3} parent=1 // pred_check_branch
      %188 = sbr.rel (0) target = $region141
    $region140: #{timeseries_vae_forward.3} parent=1 // pred_region
      _
    $region141: #{timeseries_vae_forward.3} parent=1 // pred_fallthru
      _
    // Predicated region
    $region142: #{timeseries_vae_forward.3} parent=1 // pred_check
      _
    $region143: #{timeseries_vae_forward.3} parent=1 // pred_check_branch
      %190 = sbr.rel (0) target = $region145
    $region144: #{timeseries_vae_forward.3} parent=1 // pred_region
      _
    $region145: #{timeseries_vae_forward.3} parent=1 // pred_fallthru
      _
    // Predicated region
    $region146: #{timeseries_vae_forward.3} parent=1 // pred_check
      _
    $region147: #{timeseries_vae_forward.3} parent=1 // pred_check_branch
      %192 = sbr.rel (0) target = $region149
    $region148: #{timeseries_vae_forward.3} parent=1 // pred_region
      _
    $region149: #{timeseries_vae_forward.3} parent=1 // pred_fallthru
      _
    // Predicated region
    $region150: #{timeseries_vae_forward.3} parent=1 // pred_check
      _
    $region151: #{timeseries_vae_forward.3} parent=1 // pred_check_branch
      %194 = sbr.rel (0) target = $region153
    $region152: #{timeseries_vae_forward.3} parent=1 // pred_region
      _
    $region153: #{timeseries_vae_forward.3} parent=1 // pred_fallthru
      _
    // Predicated region
    $region154: #{timeseries_vae_forward.3} parent=1 // pred_check
      _
    $region155: #{timeseries_vae_forward.3} parent=1 // pred_check_branch
      %196 = sbr.rel (0) target = $region157
    $region156: #{timeseries_vae_forward.3} parent=1 // pred_region
      _
    $region157: #{timeseries_vae_forward.3} parent=1 // pred_fallthru
      _
    // Predicated region
    $region158: #{timeseries_vae_forward.3} parent=1 // pred_check
      _
    $region159: #{timeseries_vae_forward.3} parent=1 // pred_check_branch
      %198 = sbr.rel (0) target = $region161
    $region160: #{timeseries_vae_forward.3} parent=1 // pred_region
      _
    $region161: #{timeseries_vae_forward.3} parent=1 // pred_fallthru
      _
    // Predicated region
    $region162: #{timeseries_vae_forward.3} parent=1 // pred_check
      _
    $region163: #{timeseries_vae_forward.3} parent=1 // pred_check_branch
      %200 = sbr.rel (0) target = $region165
    $region164: #{timeseries_vae_forward.3} parent=1 // pred_region
      _
    $region165: #{timeseries_vae_forward.3} parent=1 // pred_fallthru
      _
    // Predicated region
    $region166: #{timeseries_vae_forward.3} parent=1 // pred_check
      _
    $region167: #{timeseries_vae_forward.3} parent=1 // pred_check_branch
      %202 = sbr.rel (0) target = $region169
    $region168: #{timeseries_vae_forward.3} parent=1 // pred_region
      _
    $region169: #{timeseries_vae_forward.3} parent=1 // pred_fallthru
      _
    // Predicated region
    $region170: #{timeseries_vae_forward.3} parent=1 // pred_check
      _
    $region171: #{timeseries_vae_forward.3} parent=1 // pred_check_branch
      %204 = sbr.rel (0) target = $region173
    $region172: #{timeseries_vae_forward.3} parent=1 // pred_region
      _
    $region173: #{timeseries_vae_forward.3} parent=1 // pred_fallthru
      _
    // Predicated region
    $region174: #{timeseries_vae_forward.3} parent=1 // pred_check
      _
    $region175: #{timeseries_vae_forward.3} parent=1 // pred_check_branch
      %206 = sbr.rel (0) target = $region177
    $region176: #{timeseries_vae_forward.3} parent=1 // pred_region
      _
    $region177: #{timeseries_vae_forward.3} parent=1 // pred_fallthru
      _
    // Predicated region
    $region178: #{timeseries_vae_forward.3} parent=1 // pred_check
      _
    $region179: #{timeseries_vae_forward.3} parent=1 // pred_check_branch
      %208 = sbr.rel (0) target = $region181
    $region180: #{timeseries_vae_forward.3} parent=1 // pred_region
      _
    $region181: #{timeseries_vae_forward.3} parent=1 // pred_fallthru
      _
    // Predicated region
    $region182: #{timeseries_vae_forward.3} parent=1 // pred_check
      _
    $region183: #{timeseries_vae_forward.3} parent=1 // pred_check_branch
      %210 = sbr.rel (0) target = $region185
    $region184: #{timeseries_vae_forward.3} parent=1 // pred_region
      _
    $region185: #{timeseries_vae_forward.3} parent=1 // pred_fallthru
      _
    // Predicated region
    $region186: #{timeseries_vae_forward.3} parent=1 // pred_check
      _
    $region187: #{timeseries_vae_forward.3} parent=1 // pred_check_branch
      %212 = sbr.rel (0) target = $region189
    $region188: #{timeseries_vae_forward.3} parent=1 // pred_region
      _
    $region189: #{timeseries_vae_forward.3} parent=1 // pred_fallthru
      _
    // Predicated region
    $region190: #{timeseries_vae_forward.3} parent=1 // pred_check
      _
    $region191: #{timeseries_vae_forward.3} parent=1 // pred_check_branch
      %214 = sbr.rel (0) target = $region193
    $region192: #{timeseries_vae_forward.3} parent=1 // pred_region
      _
    $region193: #{timeseries_vae_forward.3} parent=1 // pred_fallthru
      _
    // Predicated region
    $region194: #{timeseries_vae_forward.3} parent=1 // pred_check
      _
    $region195: #{timeseries_vae_forward.3} parent=1 // pred_check_branch
      %216 = sbr.rel (0) target = $region197
    $region196: #{timeseries_vae_forward.3} parent=1 // pred_region
      _
    $region197: #{timeseries_vae_forward.3} parent=1 // pred_fallthru
      _
    // Predicated region
    $region198: #{timeseries_vae_forward.3} parent=1 // pred_check
      _
    $region199: #{timeseries_vae_forward.3} parent=1 // pred_check_branch
      %218 = sbr.rel (0) target = $region201
    $region200: #{timeseries_vae_forward.3} parent=1 // pred_region
      _
    $region201: #{timeseries_vae_forward.3} parent=1 // pred_fallthru
      _
    %v219 = vld [vmem:[%s1] sm:$0xff]
    %v220 = vld [vmem:[%s1 + $0x8] sm:$0xf]
    %v221 = vld [vmem:[%s17] sm:$0xff]
    %v222 = vld [vmem:[%s17 + $0x8] sm:$0xff]
    %v223 = vld [vmem:[%s17 + $0x10] sm:$0xff]
    %v224 = vld [vmem:[%s17 + $0x18] sm:$0xff]
    %v225 = vld [vmem:[%s17 + $0x20] sm:$0xff]
    %v226 = vld [vmem:[%s17 + $0x28] sm:$0xff]
    %v227 = vld [vmem:[%s17 + $0x30] sm:$0xff]
    %v228 = vld [vmem:[%s17 + $0x38] sm:$0xff]
    %v229 = vld [vmem:[%s17 + $0x40] sm:$0xff]
    %v230 = vld [vmem:[%s17 + $0x48] sm:$0xff]
    %v231 = vld [vmem:[%s17 + $0x50] sm:$0xff]
    %v232 = vld [vmem:[%s17 + $0x58] sm:$0xff]
    %v233 = vld [vmem:[%s17 + $0x60] sm:$0xff]
    %v234 = vld [vmem:[%s17 + $0x68] sm:$0xff]
    %v235 = vld [vmem:[%s17 + $0x70] sm:$0xff]
    %v236 = vld [vmem:[%s17 + $0x78] sm:$0xff]
    %v237 = vld [vmem:[%s17 + $0x80] sm:$0xff]
    %v238 = vld [vmem:[%s17 + $0x88] sm:$0xff]
    %v239 = vld [vmem:[%s17 + $0x90] sm:$0xff]
    %v240 = vld [vmem:[%s17 + $0x98] sm:$0xff]
    %v241 = vld [vmem:[%s17 + $0xa0] sm:$0xff]
    %v242 = vld [vmem:[%s17 + $0xa8] sm:$0xff]
    %v243 = vld [vmem:[%s17 + $0xb0] sm:$0xff]
    %v244 = vld [vmem:[%s17 + $0xb8] sm:$0xff]
    %v245 = vld [vmem:[%s17 + $0xc0] sm:$0xff]
    %v246 = vld [vmem:[%s17 + $0xc8] sm:$0xff]
    %v247 = vld [vmem:[%s17 + $0xd0] sm:$0xff]
    %v248 = vld [vmem:[%s17 + $0xd8] sm:$0xff]
    %v249 = vld [vmem:[%s17 + $0xe0] sm:$0xff]
    %v250 = vld [vmem:[%s17 + $0xe8] sm:$0xff]
    %v251 = vld [vmem:[%s17 + $0xf0] sm:$0xff]
    %v252 = vld [vmem:[%s17 + $0xf8] sm:$0xff]
    %v253 = vld [vmem:[%s17 + $0x100] sm:$0xff]
    %v254 = vld [vmem:[%s17 + $0x108] sm:$0xff]
    %v255 = vld [vmem:[%s17 + $0x110] sm:$0xff]
    %v256 = vld [vmem:[%s17 + $0x118] sm:$0xff]
    %v257 = vld [vmem:[%s17 + $0x120] sm:$0xff]
    %v258 = vld [vmem:[%s17 + $0x128] sm:$0xff]
    %v259 = vld [vmem:[%s17 + $0x130] sm:$0xff]
    %v260 = vld [vmem:[%s17 + $0x138] sm:$0xff]
    %v261 = vld [vmem:[%s17 + $0x140] sm:$0xff]
    %v262 = vld [vmem:[%s17 + $0x148] sm:$0xff]
    %v263 = vld [vmem:[%s17 + $0x150] sm:$0xff]
    %v264 = vld [vmem:[%s17 + $0x158] sm:$0xff]
    %v265 = vld [vmem:[%s17 + $0x160] sm:$0xff]
    %v266 = vld [vmem:[%s17 + $0x168] sm:$0xff]
    %v267 = vld [vmem:[%s17 + $0x170] sm:$0xff]
    %v268 = vld [vmem:[%s17 + $0x178] sm:$0xff]
    %v269 = vld [vmem:[%s17 + $0x180] sm:$0xff]
    %v270 = vld [vmem:[%s17 + $0x188] sm:$0xff]
    %v271 = vld [vmem:[%s17 + $0x190] sm:$0xff]
    %v272 = vld [vmem:[%s17 + $0x198] sm:$0xff]
    %v273 = vld [vmem:[%s17 + $0x1a0] sm:$0xff]
    %v274 = vld [vmem:[%s17 + $0x1a8] sm:$0xff]
    %v275 = vld [vmem:[%s17 + $0x1b0] sm:$0xff]
    %v276 = vld [vmem:[%s17 + $0x1b8] sm:$0xff]
    %v277 = vld [vmem:[%s17 + $0x1c0] sm:$0xff]
    %v278 = vld [vmem:[%s17 + $0x1c8] sm:$0xff]
    %v279 = vld [vmem:[%s17 + $0x1d0] sm:$0xff]
    %v280 = vld [vmem:[%s17 + $0x1d8] sm:$0xff]
    %v281 = vld [vmem:[%s17 + $0x1e0] sm:$0xff]
    %v282 = vld [vmem:[%s17 + $0x1e8] sm:$0xff]
    %v283 = vld [vmem:[%s17 + $0x1f0] sm:$0xff]
    %v284 = vld [vmem:[%s17 + $0x1f8] sm:$0xff]
    %v285 = vld [vmem:[%s17 + $0x200] sm:$0xff]
    %v286 = vld [vmem:[%s17 + $0x208] sm:$0xff]
    %v287 = vld [vmem:[%s17 + $0x210] sm:$0xff]
    %v288 = vld [vmem:[%s17 + $0x218] sm:$0xff]
    %v289 = vld [vmem:[%s17 + $0x220] sm:$0xff]
    %v290 = vld [vmem:[%s17 + $0x228] sm:$0xff]
    %v291 = vld [vmem:[%s17 + $0x230] sm:$0xff]
    %v292 = vld [vmem:[%s17 + $0x238] sm:$0xff]
    %v293 = vld [vmem:[%s17 + $0x240] sm:$0xff]
    %v294 = vld [vmem:[%s17 + $0x248] sm:$0xff]
    %v295 = vld [vmem:[%s17 + $0x250] sm:$0xff]
    %v296 = vld [vmem:[%s17 + $0x258] sm:$0xff]
    %v297 = vld [vmem:[%s17 + $0x260] sm:$0xff]
    %v298 = vld [vmem:[%s17 + $0x268] sm:$0xff]
    %v299 = vld [vmem:[%s17 + $0x270] sm:$0xff]
    %v300 = vld [vmem:[%s17 + $0x278] sm:$0xff]
    %v301 = vld [vmem:[%s17 + $0x280] sm:$0xff]
    %v302 = vld [vmem:[%s17 + $0x288] sm:$0xff]
    %v303 = vld [vmem:[%s17 + $0x290] sm:$0xff]
    %v304 = vld [vmem:[%s17 + $0x298] sm:$0xff]
    %v305 = vld [vmem:[%s17 + $0x2a0] sm:$0xff]
    %v306 = vld [vmem:[%s17 + $0x2a8] sm:$0xff]
    %v307 = vld [vmem:[%s17 + $0x2b0] sm:$0xff]
    %v308 = vld [vmem:[%s19] sm:$0x1]
    %v310 = vlaneseq
    %v311 = vshrl.u32 %v310, 7
    %v312 = vsub.s32 0, %v311
    %v313 = vrot.slane %v308, %v312
    %v317 = vcombine.high %v219, %v219
    %v319 = vunpack.c.l.s4 1983009808
    %v320 = vunpack.c.0.s8 %v319
    %v321 = vlaneseq
    %v322 = vshrl.u32 %v321, 7
    %v323 = vsub.s32 %v320, %v322
    %v324 = vrot.slane %v219, %v323
    %v326 = vunpack.c.l.s4 1983009808
    %v327 = vunpack.c.0.s8 %v326
    %v328 = vlaneseq
    %v329 = vshrl.u32 %v328, 7
    %v330 = vsub.s32 %v327, %v329
    %v331 = vrot.slane %v317, %v330
    %v332 = vcombine.high %v324, %v324
    %v333 = vcombine.high %v331, %v331
    %v335 = vunpack.c.l.s4 1983009808
    %v336 = vunpack.c.0.s8 %v335
    %v337 = vlaneseq
    %v338 = vshrl.u32 %v337, 7
    %v339 = vsub.s32 %v336, %v338
    %v340 = vrot.slane %v220, %v339
    %v341 = vcombine.high %v340, %v340
    %vm347 = vcmask 457728
    %v348 = vsel %vm347, %v341, 0
    %350 = vmatprep.subr.mxu0 0.0
    %351 = vmatpush1.msra.mxu0 %v236
    %352 = vmatprep.subr.mxu0 0.0
    %353 = vmatpush1.msra.mxu0 %v235
    %354 = vmatprep.subr.mxu0 0.0
    %355 = vmatpush1.msra.mxu0 %v234
    %356 = vmatprep.subr.mxu0 0.0
    %357 = vmatpush1.msra.mxu0 %v233
    %358 = vmatprep.subr.mxu0 0.0
    %359 = vmatpush1.msra.mxu0 %v232
    %360 = vmatprep.subr.mxu0 0.0
    %361 = vmatpush1.msra.mxu0 %v231
    %362 = vmatprep.subr.mxu0 0.0
    %363 = vmatpush1.msra.mxu0 %v230
    %364 = vmatprep.subr.mxu0 0.0
    %365 = vmatpush1.msra.mxu0 %v229
    %366 = vmatprep.subr.mxu0 0.0
    %367 = vmatpush1.msra.mxu0 %v228
    %368 = vmatprep.subr.mxu0 0.0
    %369 = vmatpush1.msra.mxu0 %v227
    %370 = vmatprep.subr.mxu0 0.0
    %371 = vmatpush1.msra.mxu0 %v226
    %372 = vmatprep.subr.mxu0 0.0
    %373 = vmatpush1.msra.mxu0 %v225
    %374 = vmatprep.subr.mxu0 0.0
    %375 = vmatpush1.msra.mxu0 %v224
    %376 = vmatprep.subr.mxu0 0.0
    %377 = vmatpush1.msra.mxu0 %v223
    %378 = vmatprep.subr.mxu0 0.0
    %379 = vmatpush1.msra.mxu0 %v222
    %380 = vmatprep.subr.mxu0 0.0
    %381 = vmatpush1.msra.mxu0 %v221
    %382 = vmatprep.subr.mxu0 0.0
    %383 = vmatpush2.msra.mxu0 %v252
    %384 = vmatprep.subr.mxu0 0.0
    %385 = vmatpush2.msra.mxu0 %v251
    %386 = vmatprep.subr.mxu0 0.0
    %387 = vmatpush2.msra.mxu0 %v250
    %388 = vmatprep.subr.mxu0 0.0
    %389 = vmatpush2.msra.mxu0 %v249
    %390 = vmatprep.subr.mxu0 0.0
    %391 = vmatpush2.msra.mxu0 %v248
    %392 = vmatprep.subr.mxu0 0.0
    %393 = vmatpush2.msra.mxu0 %v247
    %394 = vmatprep.subr.mxu0 0.0
    %395 = vmatpush2.msra.mxu0 %v246
    %396 = vmatprep.subr.mxu0 0.0
    %397 = vmatpush2.msra.mxu0 %v245
    %398 = vmatprep.subr.mxu0 0.0
    %399 = vmatpush2.msra.mxu0 %v244
    %400 = vmatprep.subr.mxu0 0.0
    %401 = vmatpush2.msra.mxu0 %v243
    %402 = vmatprep.subr.mxu0 0.0
    %403 = vmatpush2.msra.mxu0 %v242
    %404 = vmatprep.subr.mxu0 0.0
    %405 = vmatpush2.msra.mxu0 %v241
    %406 = vmatprep.subr.mxu0 0.0
    %407 = vmatpush2.msra.mxu0 %v240
    %408 = vmatprep.subr.mxu0 0.0
    %409 = vmatpush2.msra.mxu0 %v239
    %410 = vmatprep.subr.mxu0 0.0
    %411 = vmatpush2.msra.mxu0 %v238
    %412 = vmatprep.subr.mxu0 0.0
    %413 = vmatpush2.msra.mxu0 %v237
    %414 = vmatprep.mubr.f32.mxu0 %v332
    %415 = vmatmul.mubr.f32.gmra.mxu0 %v324
    %v416 = vpop.f32.mrf.mxu0
    %v417 = vadd.f32 %v313, %v416
    %v418 = vpop.f32.mrf.mxu0
    %419 = vdwg.mxu0
    %420 = vmatprep.subr.mxu0 0.0
    %421 = vmatpush1.msra.mxu0 %v268
    %422 = vmatprep.subr.mxu0 0.0
    %423 = vmatpush1.msra.mxu0 %v267
    %424 = vmatprep.subr.mxu0 0.0
    %425 = vmatpush1.msra.mxu0 %v266
    %426 = vmatprep.subr.mxu0 0.0
    %427 = vmatpush1.msra.mxu0 %v265
    %428 = vmatprep.subr.mxu0 0.0
    %429 = vmatpush1.msra.mxu0 %v264
    %430 = vmatprep.subr.mxu0 0.0
    %431 = vmatpush1.msra.mxu0 %v263
    %432 = vmatprep.subr.mxu0 0.0
    %433 = vmatpush1.msra.mxu0 %v262
    %434 = vmatprep.subr.mxu0 0.0
    %435 = vmatpush1.msra.mxu0 %v261
    %436 = vmatprep.subr.mxu0 0.0
    %437 = vmatpush1.msra.mxu0 %v260
    %438 = vmatprep.subr.mxu0 0.0
    %439 = vmatpush1.msra.mxu0 %v259
    %440 = vmatprep.subr.mxu0 0.0
    %441 = vmatpush1.msra.mxu0 %v258
    %442 = vmatprep.subr.mxu0 0.0
    %443 = vmatpush1.msra.mxu0 %v257
    %444 = vmatprep.subr.mxu0 0.0
    %445 = vmatpush1.msra.mxu0 %v256
    %446 = vmatprep.subr.mxu0 0.0
    %447 = vmatpush1.msra.mxu0 %v255
    %448 = vmatprep.subr.mxu0 0.0
    %449 = vmatpush1.msra.mxu0 %v254
    %450 = vmatprep.subr.mxu0 0.0
    %451 = vmatpush1.msra.mxu0 %v253
    %452 = vmatprep.subr.mxu0 0.0
    %453 = vmatpush2.msra.mxu0 %v284
    %454 = vmatprep.subr.mxu0 0.0
    %455 = vmatpush2.msra.mxu0 %v283
    %456 = vmatprep.subr.mxu0 0.0
    %457 = vmatpush2.msra.mxu0 %v282
    %458 = vmatprep.subr.mxu0 0.0
    %459 = vmatpush2.msra.mxu0 %v281
    %460 = vmatprep.subr.mxu0 0.0
    %461 = vmatpush2.msra.mxu0 %v280
    %462 = vmatprep.subr.mxu0 0.0
    %463 = vmatpush2.msra.mxu0 %v279
    %464 = vmatprep.subr.mxu0 0.0
    %465 = vmatpush2.msra.mxu0 %v278
    %466 = vmatprep.subr.mxu0 0.0
    %467 = vmatpush2.msra.mxu0 %v277
    %468 = vmatprep.subr.mxu0 0.0
    %469 = vmatpush2.msra.mxu0 %v276
    %470 = vmatprep.subr.mxu0 0.0
    %471 = vmatpush2.msra.mxu0 %v275
    %472 = vmatprep.subr.mxu0 0.0
    %473 = vmatpush2.msra.mxu0 %v274
    %474 = vmatprep.subr.mxu0 0.0
    %475 = vmatpush2.msra.mxu0 %v273
    %476 = vmatprep.subr.mxu0 0.0
    %477 = vmatpush2.msra.mxu0 %v272
    %478 = vmatprep.subr.mxu0 0.0
    %479 = vmatpush2.msra.mxu0 %v271
    %480 = vmatprep.subr.mxu0 0.0
    %481 = vmatpush2.msra.mxu0 %v270
    %482 = vmatprep.subr.mxu0 0.0
    %483 = vmatpush2.msra.mxu0 %v269
    %484 = vmatprep.mubr.f32.mxu0 %v333
    %485 = vmatmul.mubr.f32.gmra.mxu0 %v331
    %v486 = vpop.f32.mrf.mxu0
    %v487 = vadd.f32 %v417, %v486
    %v488 = vpop.f32.mrf.mxu0
    %489 = vdwg.mxu0
    %490 = vmatprep.subr.mxu0 0.0
    %491 = vmatpush1.msra.mxu0 %v300
    %492 = vmatprep.subr.mxu0 0.0
    %493 = vmatpush1.msra.mxu0 %v299
    %494 = vmatprep.subr.mxu0 0.0
    %495 = vmatpush1.msra.mxu0 %v298
    %496 = vmatprep.subr.mxu0 0.0
    %497 = vmatpush1.msra.mxu0 %v297
    %498 = vmatprep.subr.mxu0 0.0
    %499 = vmatpush1.msra.mxu0 %v296
    %500 = vmatprep.subr.mxu0 0.0
    %501 = vmatpush1.msra.mxu0 %v295
    %502 = vmatprep.subr.mxu0 0.0
    %503 = vmatpush1.msra.mxu0 %v294
    %504 = vmatprep.subr.mxu0 0.0
    %505 = vmatpush1.msra.mxu0 %v293
    %506 = vmatprep.subr.mxu0 0.0
    %507 = vmatpush1.msra.mxu0 %v292
    %508 = vmatprep.subr.mxu0 0.0
    %509 = vmatpush1.msra.mxu0 %v291
    %510 = vmatprep.subr.mxu0 0.0
    %511 = vmatpush1.msra.mxu0 %v290
    %512 = vmatprep.subr.mxu0 0.0
    %513 = vmatpush1.msra.mxu0 %v289
    %514 = vmatprep.subr.mxu0 0.0
    %515 = vmatpush1.msra.mxu0 %v288
    %516 = vmatprep.subr.mxu0 0.0
    %517 = vmatpush1.msra.mxu0 %v287
    %518 = vmatprep.subr.mxu0 0.0
    %519 = vmatpush1.msra.mxu0 %v286
    %520 = vmatprep.subr.mxu0 0.0
    %521 = vmatpush1.msra.mxu0 %v285
    %522 = vmatprep.subr.mxu0 0.0
    %523 = vmatpush2.msra.mxu0 0.0
    %524 = vmatprep.subr.mxu0 0.0
    %525 = vmatpush2.msra.mxu0 0.0
    %526 = vmatprep.subr.mxu0 0.0
    %527 = vmatpush2.msra.mxu0 0.0
    %528 = vmatprep.subr.mxu0 0.0
    %529 = vmatpush2.msra.mxu0 0.0
    %530 = vmatprep.subr.mxu0 0.0
    %531 = vmatpush2.msra.mxu0 0.0
    %532 = vmatprep.subr.mxu0 0.0
    %533 = vmatpush2.msra.mxu0 0.0
    %534 = vmatprep.subr.mxu0 0.0
    %535 = vmatpush2.msra.mxu0 0.0
    %536 = vmatprep.subr.mxu0 0.0
    %537 = vmatpush2.msra.mxu0 0.0
    %538 = vmatprep.subr.mxu0 0.0
    %539 = vmatpush2.msra.mxu0 0.0
    %540 = vmatprep.subr.mxu0 0.0
    %541 = vmatpush2.msra.mxu0 %v307
    %542 = vmatprep.subr.mxu0 0.0
    %543 = vmatpush2.msra.mxu0 %v306
    %544 = vmatprep.subr.mxu0 0.0
    %545 = vmatpush2.msra.mxu0 %v305
    %546 = vmatprep.subr.mxu0 0.0
    %547 = vmatpush2.msra.mxu0 %v304
    %548 = vmatprep.subr.mxu0 0.0
    %549 = vmatpush2.msra.mxu0 %v303
    %550 = vmatprep.subr.mxu0 0.0
    %551 = vmatpush2.msra.mxu0 %v302
    %552 = vmatprep.subr.mxu0 0.0
    %553 = vmatpush2.msra.mxu0 %v301
    %554 = vmatprep.mubr.f32.mxu0 %v348
    %555 = vmatmul.mubr.f32.gmra.mxu0 %v340
    %v556 = vpop.f32.mrf.mxu0
    %v557 = vadd.f32 %v487, %v556
    %v558 = vpop.f32.mrf.mxu0
    %559 = vdwg.mxu0
    %v560 = vmax.f32 %v557, 0.0
    %v561 = vld [vmem:[%s21] sm:$0xff]
    %v562 = vld [vmem:[%s21 + $0x8] sm:$0xff]
    %v563 = vld [vmem:[%s21 + $0x10] sm:$0xff]
    %v564 = vld [vmem:[%s21 + $0x18] sm:$0xff]
    %v565 = vld [vmem:[%s23] sm:$0x1]
    %v567 = vlaneseq
    %v568 = vshrl.u32 %v567, 7
    %v569 = vsub.s32 0, %v568
    %v570 = vrot.slane %v565, %v569
    %vm572 = vcmask 261120
    %v574 = vsel %vm572, %v560, 0
    %576 = vmatprep.subr.mxu0 0.0
    %577 = vmatpush1.msra.mxu0 0.0
    %578 = vmatprep.subr.mxu0 0.0
    %579 = vmatpush1.msra.mxu0 0.0
    %580 = vmatprep.subr.mxu0 0.0
    %581 = vmatpush1.msra.mxu0 0.0
    %582 = vmatprep.subr.mxu0 0.0
    %583 = vmatpush1.msra.mxu0 0.0
    %584 = vmatprep.subr.mxu0 0.0
    %585 = vmatpush1.msra.mxu0 0.0
    %586 = vmatprep.subr.mxu0 0.0
    %587 = vmatpush1.msra.mxu0 0.0
    %588 = vmatprep.subr.mxu0 0.0
    %589 = vmatpush1.msra.mxu0 0.0
    %590 = vmatprep.subr.mxu0 0.0
    %591 = vmatpush1.msra.mxu0 0.0
    %592 = vmatprep.subr.mxu0 0.0
    %593 = vmatpush1.msra.mxu0 0.0
    %594 = vmatprep.subr.mxu0 0.0
    %595 = vmatpush1.msra.mxu0 0.0
    %596 = vmatprep.subr.mxu0 0.0
    %597 = vmatpush1.msra.mxu0 0.0
    %598 = vmatprep.subr.mxu0 0.0
    %599 = vmatpush1.msra.mxu0 0.0
    %600 = vmatprep.subr.mxu0 0.0
    %601 = vmatpush1.msra.mxu0 %v564
    %602 = vmatprep.subr.mxu0 0.0
    %603 = vmatpush1.msra.mxu0 %v563
    %604 = vmatprep.subr.mxu0 0.0
    %605 = vmatpush1.msra.mxu0 %v562
    %606 = vmatprep.subr.mxu0 0.0
    %607 = vmatpush1.msra.mxu0 %v561
    %608 = vmatprep.subr.mxu0 0.0
    %609 = vmatpush2.msra.mxu0 0.0
    %610 = vmatprep.subr.mxu0 0.0
    %611 = vmatpush2.msra.mxu0 0.0
    %612 = vmatprep.subr.mxu0 0.0
    %613 = vmatpush2.msra.mxu0 0.0
    %614 = vmatprep.subr.mxu0 0.0
    %615 = vmatpush2.msra.mxu0 0.0
    %616 = vmatprep.subr.mxu0 0.0
    %617 = vmatpush2.msra.mxu0 0.0
    %618 = vmatprep.subr.mxu0 0.0
    %619 = vmatpush2.msra.mxu0 0.0
    %620 = vmatprep.subr.mxu0 0.0
    %621 = vmatpush2.msra.mxu0 0.0
    %622 = vmatprep.subr.mxu0 0.0
    %623 = vmatpush2.msra.mxu0 0.0
    %624 = vmatprep.subr.mxu0 0.0
    %625 = vmatpush2.msra.mxu0 0.0
    %626 = vmatprep.subr.mxu0 0.0
    %627 = vmatpush2.msra.mxu0 0.0
    %628 = vmatprep.subr.mxu0 0.0
    %629 = vmatpush2.msra.mxu0 0.0
    %630 = vmatprep.subr.mxu0 0.0
    %631 = vmatpush2.msra.mxu0 0.0
    %632 = vmatprep.subr.mxu0 0.0
    %633 = vmatpush2.msra.mxu0 0.0
    %634 = vmatprep.subr.mxu0 0.0
    %635 = vmatpush2.msra.mxu0 0.0
    %636 = vmatprep.subr.mxu0 0.0
    %637 = vmatpush2.msra.mxu0 0.0
    %638 = vmatprep.subr.mxu0 0.0
    %639 = vmatpush2.msra.mxu0 0.0
    %640 = vmatprep.mubr.f32.mxu0 0.0
    %641 = vmatmul.mubr.f32.gmra.mxu0 %v574
    %v642 = vpop.f32.mrf.mxu0
    %v643 = vadd.f32 %v570, %v642
    %v644 = vpop.f32.mrf.mxu0
    %645 = vdwg.mxu0
    %v646 = vmax.f32 %v643, 0.0
    %v647 = vld [vmem:[%s25] sm:$0xff]
    %v648 = vld [vmem:[%s25 + $0x8] sm:$0xff]
    %v649 = vld [vmem:[%s25 + $0x10] sm:$0xff]
    %v650 = vld [vmem:[%s25 + $0x18] sm:$0xff]
    %v651 = vld [vmem:[%s27] sm:$0x1]
    %v653 = vlaneseq
    %v654 = vshrl.u32 %v653, 7
    %v655 = vsub.s32 0, %v654
    %v656 = vrot.slane %v651, %v655
    %v659 = vsel %vm572, %v646, 0
    %661 = vmatprep.subr.mxu0 0.0
    %662 = vmatpush1.msra.mxu0 0.0
    %663 = vmatprep.subr.mxu0 0.0
    %664 = vmatpush1.msra.mxu0 0.0
    %665 = vmatprep.subr.mxu0 0.0
    %666 = vmatpush1.msra.mxu0 0.0
    %667 = vmatprep.subr.mxu0 0.0
    %668 = vmatpush1.msra.mxu0 0.0
    %669 = vmatprep.subr.mxu0 0.0
    %670 = vmatpush1.msra.mxu0 0.0
    %671 = vmatprep.subr.mxu0 0.0
    %672 = vmatpush1.msra.mxu0 0.0
    %673 = vmatprep.subr.mxu0 0.0
    %674 = vmatpush1.msra.mxu0 0.0
    %675 = vmatprep.subr.mxu0 0.0
    %676 = vmatpush1.msra.mxu0 0.0
    %677 = vmatprep.subr.mxu0 0.0
    %678 = vmatpush1.msra.mxu0 0.0
    %679 = vmatprep.subr.mxu0 0.0
    %680 = vmatpush1.msra.mxu0 0.0
    %681 = vmatprep.subr.mxu0 0.0
    %682 = vmatpush1.msra.mxu0 0.0
    %683 = vmatprep.subr.mxu0 0.0
    %684 = vmatpush1.msra.mxu0 0.0
    %685 = vmatprep.subr.mxu0 0.0
    %686 = vmatpush1.msra.mxu0 %v650
    %687 = vmatprep.subr.mxu0 0.0
    %688 = vmatpush1.msra.mxu0 %v649
    %689 = vmatprep.subr.mxu0 0.0
    %690 = vmatpush1.msra.mxu0 %v648
    %691 = vmatprep.subr.mxu0 0.0
    %692 = vmatpush1.msra.mxu0 %v647
    %693 = vmatprep.subr.mxu0 0.0
    %694 = vmatpush2.msra.mxu0 0.0
    %695 = vmatprep.subr.mxu0 0.0
    %696 = vmatpush2.msra.mxu0 0.0
    %697 = vmatprep.subr.mxu0 0.0
    %698 = vmatpush2.msra.mxu0 0.0
    %699 = vmatprep.subr.mxu0 0.0
    %700 = vmatpush2.msra.mxu0 0.0
    %701 = vmatprep.subr.mxu0 0.0
    %702 = vmatpush2.msra.mxu0 0.0
    %703 = vmatprep.subr.mxu0 0.0
    %704 = vmatpush2.msra.mxu0 0.0
    %705 = vmatprep.subr.mxu0 0.0
    %706 = vmatpush2.msra.mxu0 0.0
    %707 = vmatprep.subr.mxu0 0.0
    %708 = vmatpush2.msra.mxu0 0.0
    %709 = vmatprep.subr.mxu0 0.0
    %710 = vmatpush2.msra.mxu0 0.0
    %711 = vmatprep.subr.mxu0 0.0
    %712 = vmatpush2.msra.mxu0 0.0
    %713 = vmatprep.subr.mxu0 0.0
    %714 = vmatpush2.msra.mxu0 0.0
    %715 = vmatprep.subr.mxu0 0.0
    %716 = vmatpush2.msra.mxu0 0.0
    %717 = vmatprep.subr.mxu0 0.0
    %718 = vmatpush2.msra.mxu0 0.0
    %719 = vmatprep.subr.mxu0 0.0
    %720 = vmatpush2.msra.mxu0 0.0
    %721 = vmatprep.subr.mxu0 0.0
    %722 = vmatpush2.msra.mxu0 0.0
    %723 = vmatprep.subr.mxu0 0.0
    %724 = vmatpush2.msra.mxu0 0.0
    %725 = vmatprep.mubr.f32.mxu0 0.0
    %726 = vmatmul.mubr.f32.gmra.mxu0 %v659
    %v727 = vpop.f32.mrf.mxu0
    %v728 = vadd.f32 %v656, %v727
    %v729 = vpop.f32.mrf.mxu0
    %730 = vdwg.mxu0
    %v731 = vmul.f32 %v728, 0.5
    %v732 = vmul.f32 %v731, 1.442695
    %v733 = vpow.pop %v732
    %v734 = vld [vmem:[%s7] sm:$0x3]
    %736 = vrot.lane.b32.xlu0 %v734, 16
    %v737 = vpop.permute.xlu0 %736
    %v739 = vmul.f32 %v733, %v737
    %741 = vrot.lane.b32.xlu0 %v739, 112
    %v742 = vpop.permute.xlu0 %741
    %v744 = vadd.f32 %v728, %v742
    %v745 = vld [vmem:[%s3] sm:$0xf]
    %v746 = vld [vmem:[%s29] sm:$0xff]
    %v747 = vld [vmem:[%s29 + $0x8] sm:$0xff]
    %v748 = vld [vmem:[%s29 + $0x10] sm:$0xff]
    %v749 = vld [vmem:[%s29 + $0x18] sm:$0xff]
    %v750 = vld [vmem:[%s29 + $0x20] sm:$0xff]
    %v751 = vld [vmem:[%s29 + $0x28] sm:$0xff]
    %v752 = vld [vmem:[%s29 + $0x30] sm:$0xff]
    %v753 = vld [vmem:[%s29 + $0x38] sm:$0xff]
    %v754 = vld [vmem:[%s31] sm:$0x1]
    %v756 = vlaneseq
    %v757 = vshrl.u32 %v756, 7
    %v758 = vsub.s32 0, %v757
    %v759 = vrot.slane %v754, %v758
    %vm761 = vcmask 523264
    %v763 = vsel %vm761, %v745, 0
    %765 = vmatprep.subr.mxu0 0.0
    %766 = vmatpush1.msra.mxu0 0.0
    %767 = vmatprep.subr.mxu0 0.0
    %768 = vmatpush1.msra.mxu0 0.0
    %769 = vmatprep.subr.mxu0 0.0
    %770 = vmatpush1.msra.mxu0 0.0
    %771 = vmatprep.subr.mxu0 0.0
    %772 = vmatpush1.msra.mxu0 0.0
    %773 = vmatprep.subr.mxu0 0.0
    %774 = vmatpush1.msra.mxu0 0.0
    %775 = vmatprep.subr.mxu0 0.0
    %776 = vmatpush1.msra.mxu0 0.0
    %777 = vmatprep.subr.mxu0 0.0
    %778 = vmatpush1.msra.mxu0 0.0
    %779 = vmatprep.subr.mxu0 0.0
    %780 = vmatpush1.msra.mxu0 0.0
    %781 = vmatprep.subr.mxu0 0.0
    %782 = vmatpush1.msra.mxu0 %v753
    %783 = vmatprep.subr.mxu0 0.0
    %784 = vmatpush1.msra.mxu0 %v752
    %785 = vmatprep.subr.mxu0 0.0
    %786 = vmatpush1.msra.mxu0 %v751
    %787 = vmatprep.subr.mxu0 0.0
    %788 = vmatpush1.msra.mxu0 %v750
    %789 = vmatprep.subr.mxu0 0.0
    %790 = vmatpush1.msra.mxu0 %v749
    %791 = vmatprep.subr.mxu0 0.0
    %792 = vmatpush1.msra.mxu0 %v748
    %793 = vmatprep.subr.mxu0 0.0
    %794 = vmatpush1.msra.mxu0 %v747
    %795 = vmatprep.subr.mxu0 0.0
    %796 = vmatpush1.msra.mxu0 %v746
    %797 = vmatprep.subr.mxu0 0.0
    %798 = vmatpush2.msra.mxu0 0.0
    %799 = vmatprep.subr.mxu0 0.0
    %800 = vmatpush2.msra.mxu0 0.0
    %801 = vmatprep.subr.mxu0 0.0
    %802 = vmatpush2.msra.mxu0 0.0
    %803 = vmatprep.subr.mxu0 0.0
    %804 = vmatpush2.msra.mxu0 0.0
    %805 = vmatprep.subr.mxu0 0.0
    %806 = vmatpush2.msra.mxu0 0.0
    %807 = vmatprep.subr.mxu0 0.0
    %808 = vmatpush2.msra.mxu0 0.0
    %809 = vmatprep.subr.mxu0 0.0
    %810 = vmatpush2.msra.mxu0 0.0
    %811 = vmatprep.subr.mxu0 0.0
    %812 = vmatpush2.msra.mxu0 0.0
    %813 = vmatprep.subr.mxu0 0.0
    %814 = vmatpush2.msra.mxu0 0.0
    %815 = vmatprep.subr.mxu0 0.0
    %816 = vmatpush2.msra.mxu0 0.0
    %817 = vmatprep.subr.mxu0 0.0
    %818 = vmatpush2.msra.mxu0 0.0
    %819 = vmatprep.subr.mxu0 0.0
    %820 = vmatpush2.msra.mxu0 0.0
    %821 = vmatprep.subr.mxu0 0.0
    %822 = vmatpush2.msra.mxu0 0.0
    %823 = vmatprep.subr.mxu0 0.0
    %824 = vmatpush2.msra.mxu0 0.0
    %825 = vmatprep.subr.mxu0 0.0
    %826 = vmatpush2.msra.mxu0 0.0
    %827 = vmatprep.subr.mxu0 0.0
    %828 = vmatpush2.msra.mxu0 0.0
    %829 = vmatprep.mubr.f32.mxu0 0.0
    %830 = vmatmul.mubr.f32.gmra.mxu0 %v763
    %v831 = vpop.f32.mrf.mxu0
    %v832 = vadd.f32 %v759, %v831
    %v833 = vpop.f32.mrf.mxu0
    %834 = vdwg.mxu0
    %v835 = vmax.f32 %v832, 0.0
    %v836 = vld [vmem:[%s33] sm:$0xff]
    %v837 = vld [vmem:[%s33 + $0x8] sm:$0xff]
    %v838 = vld [vmem:[%s33 + $0x10] sm:$0xff]
    %v839 = vld [vmem:[%s33 + $0x18] sm:$0xff]
    %v840 = vld [vmem:[%s35] sm:$0x1]
    %v842 = vlaneseq
    %v843 = vshrl.u32 %v842, 7
    %v844 = vsub.s32 0, %v843
    %v845 = vrot.slane %v840, %v844
    %v848 = vsel %vm572, %v835, 0
    %850 = vmatprep.subr.mxu0 0.0
    %851 = vmatpush1.msra.mxu0 0.0
    %852 = vmatprep.subr.mxu0 0.0
    %853 = vmatpush1.msra.mxu0 0.0
    %854 = vmatprep.subr.mxu0 0.0
    %855 = vmatpush1.msra.mxu0 0.0
    %856 = vmatprep.subr.mxu0 0.0
    %857 = vmatpush1.msra.mxu0 0.0
    %858 = vmatprep.subr.mxu0 0.0
    %859 = vmatpush1.msra.mxu0 0.0
    %860 = vmatprep.subr.mxu0 0.0
    %861 = vmatpush1.msra.mxu0 0.0
    %862 = vmatprep.subr.mxu0 0.0
    %863 = vmatpush1.msra.mxu0 0.0
    %864 = vmatprep.subr.mxu0 0.0
    %865 = vmatpush1.msra.mxu0 0.0
    %866 = vmatprep.subr.mxu0 0.0
    %867 = vmatpush1.msra.mxu0 0.0
    %868 = vmatprep.subr.mxu0 0.0
    %869 = vmatpush1.msra.mxu0 0.0
    %870 = vmatprep.subr.mxu0 0.0
    %871 = vmatpush1.msra.mxu0 0.0
    %872 = vmatprep.subr.mxu0 0.0
    %873 = vmatpush1.msra.mxu0 0.0
    %874 = vmatprep.subr.mxu0 0.0
    %875 = vmatpush1.msra.mxu0 %v839
    %876 = vmatprep.subr.mxu0 0.0
    %877 = vmatpush1.msra.mxu0 %v838
    %878 = vmatprep.subr.mxu0 0.0
    %879 = vmatpush1.msra.mxu0 %v837
    %880 = vmatprep.subr.mxu0 0.0
    %881 = vmatpush1.msra.mxu0 %v836
    %882 = vmatprep.subr.mxu0 0.0
    %883 = vmatpush2.msra.mxu0 0.0
    %884 = vmatprep.subr.mxu0 0.0
    %885 = vmatpush2.msra.mxu0 0.0
    %886 = vmatprep.subr.mxu0 0.0
    %887 = vmatpush2.msra.mxu0 0.0
    %888 = vmatprep.subr.mxu0 0.0
    %889 = vmatpush2.msra.mxu0 0.0
    %890 = vmatprep.subr.mxu0 0.0
    %891 = vmatpush2.msra.mxu0 0.0
    %892 = vmatprep.subr.mxu0 0.0
    %893 = vmatpush2.msra.mxu0 0.0
    %894 = vmatprep.subr.mxu0 0.0
    %895 = vmatpush2.msra.mxu0 0.0
    %896 = vmatprep.subr.mxu0 0.0
    %897 = vmatpush2.msra.mxu0 0.0
    %898 = vmatprep.subr.mxu0 0.0
    %899 = vmatpush2.msra.mxu0 0.0
    %900 = vmatprep.subr.mxu0 0.0
    %901 = vmatpush2.msra.mxu0 0.0
    %902 = vmatprep.subr.mxu0 0.0
    %903 = vmatpush2.msra.mxu0 0.0
    %904 = vmatprep.subr.mxu0 0.0
    %905 = vmatpush2.msra.mxu0 0.0
    %906 = vmatprep.subr.mxu0 0.0
    %907 = vmatpush2.msra.mxu0 0.0
    %908 = vmatprep.subr.mxu0 0.0
    %909 = vmatpush2.msra.mxu0 0.0
    %910 = vmatprep.subr.mxu0 0.0
    %911 = vmatpush2.msra.mxu0 0.0
    %912 = vmatprep.subr.mxu0 0.0
    %913 = vmatpush2.msra.mxu0 0.0
    %914 = vmatprep.mubr.f32.mxu0 0.0
    %915 = vmatmul.mubr.f32.gmra.mxu0 %v848
    %v916 = vpop.f32.mrf.mxu0
    %v917 = vadd.f32 %v845, %v916
    %v918 = vpop.f32.mrf.mxu0
    %919 = vdwg.mxu0
    %v920 = vmax.f32 %v917, 0.0
    %v921 = vld [vmem:[%s37] sm:$0xff]
    %v922 = vld [vmem:[%s37 + $0x8] sm:$0xff]
    %v923 = vld [vmem:[%s37 + $0x10] sm:$0xff]
    %v924 = vld [vmem:[%s37 + $0x18] sm:$0xff]
    %v925 = vld [vmem:[%s39] sm:$0x1]
    %v927 = vlaneseq
    %v928 = vshrl.u32 %v927, 7
    %v929 = vsub.s32 0, %v928
    %v930 = vrot.slane %v925, %v929
    %v933 = vsel %vm572, %v920, 0
    %935 = vmatprep.subr.mxu0 0.0
    %936 = vmatpush1.msra.mxu0 0.0
    %937 = vmatprep.subr.mxu0 0.0
    %938 = vmatpush1.msra.mxu0 0.0
    %939 = vmatprep.subr.mxu0 0.0
    %940 = vmatpush1.msra.mxu0 0.0
    %941 = vmatprep.subr.mxu0 0.0
    %942 = vmatpush1.msra.mxu0 0.0
    %943 = vmatprep.subr.mxu0 0.0
    %944 = vmatpush1.msra.mxu0 0.0
    %945 = vmatprep.subr.mxu0 0.0
    %946 = vmatpush1.msra.mxu0 0.0
    %947 = vmatprep.subr.mxu0 0.0
    %948 = vmatpush1.msra.mxu0 0.0
    %949 = vmatprep.subr.mxu0 0.0
    %950 = vmatpush1.msra.mxu0 0.0
    %951 = vmatprep.subr.mxu0 0.0
    %952 = vmatpush1.msra.mxu0 0.0
    %953 = vmatprep.subr.mxu0 0.0
    %954 = vmatpush1.msra.mxu0 0.0
    %955 = vmatprep.subr.mxu0 0.0
    %956 = vmatpush1.msra.mxu0 0.0
    %957 = vmatprep.subr.mxu0 0.0
    %958 = vmatpush1.msra.mxu0 0.0
    %959 = vmatprep.subr.mxu0 0.0
    %960 = vmatpush1.msra.mxu0 %v924
    %961 = vmatprep.subr.mxu0 0.0
    %962 = vmatpush1.msra.mxu0 %v923
    %963 = vmatprep.subr.mxu0 0.0
    %964 = vmatpush1.msra.mxu0 %v922
    %965 = vmatprep.subr.mxu0 0.0
    %966 = vmatpush1.msra.mxu0 %v921
    %967 = vmatprep.subr.mxu0 0.0
    %968 = vmatpush2.msra.mxu0 0.0
    %969 = vmatprep.subr.mxu0 0.0
    %970 = vmatpush2.msra.mxu0 0.0
    %971 = vmatprep.subr.mxu0 0.0
    %972 = vmatpush2.msra.mxu0 0.0
    %973 = vmatprep.subr.mxu0 0.0
    %974 = vmatpush2.msra.mxu0 0.0
    %975 = vmatprep.subr.mxu0 0.0
    %976 = vmatpush2.msra.mxu0 0.0
    %977 = vmatprep.subr.mxu0 0.0
    %978 = vmatpush2.msra.mxu0 0.0
    %979 = vmatprep.subr.mxu0 0.0
    %980 = vmatpush2.msra.mxu0 0.0
    %981 = vmatprep.subr.mxu0 0.0
    %982 = vmatpush2.msra.mxu0 0.0
    %983 = vmatprep.subr.mxu0 0.0
    %984 = vmatpush2.msra.mxu0 0.0
    %985 = vmatprep.subr.mxu0 0.0
    %986 = vmatpush2.msra.mxu0 0.0
    %987 = vmatprep.subr.mxu0 0.0
    %988 = vmatpush2.msra.mxu0 0.0
    %989 = vmatprep.subr.mxu0 0.0
    %990 = vmatpush2.msra.mxu0 0.0
    %991 = vmatprep.subr.mxu0 0.0
    %992 = vmatpush2.msra.mxu0 0.0
    %993 = vmatprep.subr.mxu0 0.0
    %994 = vmatpush2.msra.mxu0 0.0
    %995 = vmatprep.subr.mxu0 0.0
    %996 = vmatpush2.msra.mxu0 0.0
    %997 = vmatprep.subr.mxu0 0.0
    %998 = vmatpush2.msra.mxu0 0.0
    %999 = vmatprep.mubr.f32.mxu0 0.0
    %1000 = vmatmul.mubr.f32.gmra.mxu0 %v933
    %v1001 = vpop.f32.mrf.mxu0
    %v1002 = vadd.f32 %v930, %v1001
    %v1003 = vpop.f32.mrf.mxu0
    %1004 = vdwg.mxu0
    %v1005 = vmul.f32 %v1002, 0.5
    %v1006 = vmul.f32 %v1005, 1.442695
    %v1007 = vpow.pop %v1006
    %v1008 = vld [vmem:[%s9] sm:$0xf]
    %1010 = vrot.lane.b32.xlu0 %v1008, 16
    %v1011 = vpop.permute.xlu0 %1010
    %v1013 = vmul.f32 %v1007, %v1011
    %1015 = vrot.lane.b32.xlu0 %v1013, 112
    %v1016 = vpop.permute.xlu0 %1015
    %v1018 = vadd.f32 %v1002, %v1016
    %v1019 = vld [vmem:[%s5] sm:$0xff]
    %v1020 = vld [vmem:[%s5 + $0x8] sm:$0xf]
    %v1021 = vld [vmem:[%s41] sm:$0xff]
    %v1022 = vld [vmem:[%s41 + $0x8] sm:$0xff]
    %v1023 = vld [vmem:[%s41 + $0x10] sm:$0xff]
    %v1024 = vld [vmem:[%s41 + $0x18] sm:$0xff]
    %v1025 = vld [vmem:[%s41 + $0x20] sm:$0xff]
    %v1026 = vld [vmem:[%s41 + $0x28] sm:$0xff]
    %v1027 = vld [vmem:[%s41 + $0x30] sm:$0xff]
    %v1028 = vld [vmem:[%s41 + $0x38] sm:$0xff]
    %v1029 = vld [vmem:[%s41 + $0x40] sm:$0xff]
    %v1030 = vld [vmem:[%s41 + $0x48] sm:$0xff]
    %v1031 = vld [vmem:[%s41 + $0x50] sm:$0xff]
    %v1032 = vld [vmem:[%s41 + $0x58] sm:$0xff]
    %v1033 = vld [vmem:[%s41 + $0x60] sm:$0xff]
    %v1034 = vld [vmem:[%s41 + $0x68] sm:$0xff]
    %v1035 = vld [vmem:[%s41 + $0x70] sm:$0xff]
    %v1036 = vld [vmem:[%s41 + $0x78] sm:$0xff]
    %v1037 = vld [vmem:[%s41 + $0x80] sm:$0xff]
    %v1038 = vld [vmem:[%s41 + $0x88] sm:$0xff]
    %v1039 = vld [vmem:[%s41 + $0x90] sm:$0xff]
    %v1040 = vld [vmem:[%s41 + $0x98] sm:$0xff]
    %v1041 = vld [vmem:[%s41 + $0xa0] sm:$0xff]
    %v1042 = vld [vmem:[%s41 + $0xa8] sm:$0xff]
    %v1043 = vld [vmem:[%s41 + $0xb0] sm:$0xff]
    %v1044 = vld [vmem:[%s41 + $0xb8] sm:$0xff]
    %v1045 = vld [vmem:[%s41 + $0xc0] sm:$0xff]
    %v1046 = vld [vmem:[%s41 + $0xc8] sm:$0xff]
    %v1047 = vld [vmem:[%s41 + $0xd0] sm:$0xff]
    %v1048 = vld [vmem:[%s41 + $0xd8] sm:$0xff]
    %v1049 = vld [vmem:[%s41 + $0xe0] sm:$0xff]
    %v1050 = vld [vmem:[%s41 + $0xe8] sm:$0xff]
    %v1051 = vld [vmem:[%s41 + $0xf0] sm:$0xff]
    %v1052 = vld [vmem:[%s41 + $0xf8] sm:$0xff]
    %v1053 = vld [vmem:[%s41 + $0x100] sm:$0xff]
    %v1054 = vld [vmem:[%s43] sm:$0x1]
    %v1056 = vlaneseq
    %v1057 = vshrl.u32 %v1056, 7
    %v1058 = vsub.s32 0, %v1057
    %v1059 = vrot.slane %v1054, %v1058
    %v1063 = vcombine.high %v1019, %v1019
    %vm1065 = vcmask 64512
    %v1066 = vsel %vm1065, %v1020, 0
    %1068 = vmatprep.subr.mxu0 0.0
    %1069 = vmatpush1.msra.mxu0 %v1036
    %1070 = vmatprep.subr.mxu0 0.0
    %1071 = vmatpush1.msra.mxu0 %v1035
    %1072 = vmatprep.subr.mxu0 0.0
    %1073 = vmatpush1.msra.mxu0 %v1034
    %1074 = vmatprep.subr.mxu0 0.0
    %1075 = vmatpush1.msra.mxu0 %v1033
    %1076 = vmatprep.subr.mxu0 0.0
    %1077 = vmatpush1.msra.mxu0 %v1032
    %1078 = vmatprep.subr.mxu0 0.0
    %1079 = vmatpush1.msra.mxu0 %v1031
    %1080 = vmatprep.subr.mxu0 0.0
    %1081 = vmatpush1.msra.mxu0 %v1030
    %1082 = vmatprep.subr.mxu0 0.0
    %1083 = vmatpush1.msra.mxu0 %v1029
    %1084 = vmatprep.subr.mxu0 0.0
    %1085 = vmatpush1.msra.mxu0 %v1028
    %1086 = vmatprep.subr.mxu0 0.0
    %1087 = vmatpush1.msra.mxu0 %v1027
    %1088 = vmatprep.subr.mxu0 0.0
    %1089 = vmatpush1.msra.mxu0 %v1026
    %1090 = vmatprep.subr.mxu0 0.0
    %1091 = vmatpush1.msra.mxu0 %v1025
    %1092 = vmatprep.subr.mxu0 0.0
    %1093 = vmatpush1.msra.mxu0 %v1024
    %1094 = vmatprep.subr.mxu0 0.0
    %1095 = vmatpush1.msra.mxu0 %v1023
    %1096 = vmatprep.subr.mxu0 0.0
    %1097 = vmatpush1.msra.mxu0 %v1022
    %1098 = vmatprep.subr.mxu0 0.0
    %1099 = vmatpush1.msra.mxu0 %v1021
    %1100 = vmatprep.subr.mxu0 0.0
    %1101 = vmatpush2.msra.mxu0 %v1052
    %1102 = vmatprep.subr.mxu0 0.0
    %1103 = vmatpush2.msra.mxu0 %v1051
    %1104 = vmatprep.subr.mxu0 0.0
    %1105 = vmatpush2.msra.mxu0 %v1050
    %1106 = vmatprep.subr.mxu0 0.0
    %1107 = vmatpush2.msra.mxu0 %v1049
    %1108 = vmatprep.subr.mxu0 0.0
    %1109 = vmatpush2.msra.mxu0 %v1048
    %1110 = vmatprep.subr.mxu0 0.0
    %1111 = vmatpush2.msra.mxu0 %v1047
    %1112 = vmatprep.subr.mxu0 0.0
    %1113 = vmatpush2.msra.mxu0 %v1046
    %1114 = vmatprep.subr.mxu0 0.0
    %1115 = vmatpush2.msra.mxu0 %v1045
    %1116 = vmatprep.subr.mxu0 0.0
    %1117 = vmatpush2.msra.mxu0 %v1044
    %1118 = vmatprep.subr.mxu0 0.0
    %1119 = vmatpush2.msra.mxu0 %v1043
    %1120 = vmatprep.subr.mxu0 0.0
    %1121 = vmatpush2.msra.mxu0 %v1042
    %1122 = vmatprep.subr.mxu0 0.0
    %1123 = vmatpush2.msra.mxu0 %v1041
    %1124 = vmatprep.subr.mxu0 0.0
    %1125 = vmatpush2.msra.mxu0 %v1040
    %1126 = vmatprep.subr.mxu0 0.0
    %1127 = vmatpush2.msra.mxu0 %v1039
    %1128 = vmatprep.subr.mxu0 0.0
    %1129 = vmatpush2.msra.mxu0 %v1038
    %1130 = vmatprep.subr.mxu0 0.0
    %1131 = vmatpush2.msra.mxu0 %v1037
    %1132 = vmatprep.mubr.f32.mxu0 %v1063
    %1133 = vmatmul.mubr.f32.gmra.mxu0 %v1019
    %v1134 = vpop.f32.mrf.mxu0
    %v1135 = vadd.f32 %v1059, %v1134
    %v1136 = vpop.f32.mrf.mxu0
    %1137 = vdwg.mxu0
    %1138 = vmatprep.subr.mxu0 0.0
    %1139 = vmatpush1.msra.mxu0 0.0
    %1140 = vmatprep.subr.mxu0 0.0
    %1141 = vmatpush1.msra.mxu0 0.0
    %1142 = vmatprep.subr.mxu0 0.0
    %1143 = vmatpush1.msra.mxu0 0.0
    %1144 = vmatprep.subr.mxu0 0.0
    %1145 = vmatpush1.msra.mxu0 0.0
    %1146 = vmatprep.subr.mxu0 0.0
    %1147 = vmatpush1.msra.mxu0 0.0
    %1148 = vmatprep.subr.mxu0 0.0
    %1149 = vmatpush1.msra.mxu0 0.0
    %1150 = vmatprep.subr.mxu0 0.0
    %1151 = vmatpush1.msra.mxu0 0.0
    %1152 = vmatprep.subr.mxu0 0.0
    %1153 = vmatpush1.msra.mxu0 0.0
    %1154 = vmatprep.subr.mxu0 0.0
    %1155 = vmatpush1.msra.mxu0 0.0
    %1156 = vmatprep.subr.mxu0 0.0
    %1157 = vmatpush1.msra.mxu0 0.0
    %1158 = vmatprep.subr.mxu0 0.0
    %1159 = vmatpush1.msra.mxu0 0.0
    %1160 = vmatprep.subr.mxu0 0.0
    %1161 = vmatpush1.msra.mxu0 0.0
    %1162 = vmatprep.subr.mxu0 0.0
    %1163 = vmatpush1.msra.mxu0 0.0
    %1164 = vmatprep.subr.mxu0 0.0
    %1165 = vmatpush1.msra.mxu0 0.0
    %1166 = vmatprep.subr.mxu0 0.0
    %1167 = vmatpush1.msra.mxu0 0.0
    %1168 = vmatprep.subr.mxu0 0.0
    %1169 = vmatpush1.msra.mxu0 %v1053
    %1170 = vmatprep.subr.mxu0 0.0
    %1171 = vmatpush2.msra.mxu0 0.0
    %1172 = vmatprep.subr.mxu0 0.0
    %1173 = vmatpush2.msra.mxu0 0.0
    %1174 = vmatprep.subr.mxu0 0.0
    %1175 = vmatpush2.msra.mxu0 0.0
    %1176 = vmatprep.subr.mxu0 0.0
    %1177 = vmatpush2.msra.mxu0 0.0
    %1178 = vmatprep.subr.mxu0 0.0
    %1179 = vmatpush2.msra.mxu0 0.0
    %1180 = vmatprep.subr.mxu0 0.0
    %1181 = vmatpush2.msra.mxu0 0.0
    %1182 = vmatprep.subr.mxu0 0.0
    %1183 = vmatpush2.msra.mxu0 0.0
    %1184 = vmatprep.subr.mxu0 0.0
    %1185 = vmatpush2.msra.mxu0 0.0
    %1186 = vmatprep.subr.mxu0 0.0
    %1187 = vmatpush2.msra.mxu0 0.0
    %1188 = vmatprep.subr.mxu0 0.0
    %1189 = vmatpush2.msra.mxu0 0.0
    %1190 = vmatprep.subr.mxu0 0.0
    %1191 = vmatpush2.msra.mxu0 0.0
    %1192 = vmatprep.subr.mxu0 0.0
    %1193 = vmatpush2.msra.mxu0 0.0
    %1194 = vmatprep.subr.mxu0 0.0
    %1195 = vmatpush2.msra.mxu0 0.0
    %1196 = vmatprep.subr.mxu0 0.0
    %1197 = vmatpush2.msra.mxu0 0.0
    %1198 = vmatprep.subr.mxu0 0.0
    %1199 = vmatpush2.msra.mxu0 0.0
    %1200 = vmatprep.subr.mxu0 0.0
    %1201 = vmatpush2.msra.mxu0 0.0
    %1202 = vmatprep.mubr.f32.mxu0 0.0
    %1203 = vmatmul.mubr.f32.gmra.mxu0 %v1066
    %v1204 = vpop.f32.mrf.mxu0
    %v1205 = vadd.f32 %v1135, %v1204
    %v1206 = vpop.f32.mrf.mxu0
    %1207 = vdwg.mxu0
    %v1208 = vmax.f32 %v1205, 0.0
    %v1209 = vld [vmem:[%s45] sm:$0xff]
    %v1210 = vld [vmem:[%s45 + $0x8] sm:$0xff]
    %v1211 = vld [vmem:[%s45 + $0x10] sm:$0xff]
    %v1212 = vld [vmem:[%s45 + $0x18] sm:$0xff]
    %v1213 = vld [vmem:[%s47] sm:$0x1]
    %v1215 = vlaneseq
    %v1216 = vshrl.u32 %v1215, 7
    %v1217 = vsub.s32 0, %v1216
    %v1218 = vrot.slane %v1213, %v1217
    %v1221 = vsel %vm572, %v1208, 0
    %1223 = vmatprep.subr.mxu0 0.0
    %1224 = vmatpush1.msra.mxu0 0.0
    %1225 = vmatprep.subr.mxu0 0.0
    %1226 = vmatpush1.msra.mxu0 0.0
    %1227 = vmatprep.subr.mxu0 0.0
    %1228 = vmatpush1.msra.mxu0 0.0
    %1229 = vmatprep.subr.mxu0 0.0
    %1230 = vmatpush1.msra.mxu0 0.0
    %1231 = vmatprep.subr.mxu0 0.0
    %1232 = vmatpush1.msra.mxu0 0.0
    %1233 = vmatprep.subr.mxu0 0.0
    %1234 = vmatpush1.msra.mxu0 0.0
    %1235 = vmatprep.subr.mxu0 0.0
    %1236 = vmatpush1.msra.mxu0 0.0
    %1237 = vmatprep.subr.mxu0 0.0
    %1238 = vmatpush1.msra.mxu0 0.0
    %1239 = vmatprep.subr.mxu0 0.0
    %1240 = vmatpush1.msra.mxu0 0.0
    %1241 = vmatprep.subr.mxu0 0.0
    %1242 = vmatpush1.msra.mxu0 0.0
    %1243 = vmatprep.subr.mxu0 0.0
    %1244 = vmatpush1.msra.mxu0 0.0
    %1245 = vmatprep.subr.mxu0 0.0
    %1246 = vmatpush1.msra.mxu0 0.0
    %1247 = vmatprep.subr.mxu0 0.0
    %1248 = vmatpush1.msra.mxu0 %v1212
    %1249 = vmatprep.subr.mxu0 0.0
    %1250 = vmatpush1.msra.mxu0 %v1211
    %1251 = vmatprep.subr.mxu0 0.0
    %1252 = vmatpush1.msra.mxu0 %v1210
    %1253 = vmatprep.subr.mxu0 0.0
    %1254 = vmatpush1.msra.mxu0 %v1209
    %1255 = vmatprep.subr.mxu0 0.0
    %1256 = vmatpush2.msra.mxu0 0.0
    %1257 = vmatprep.subr.mxu0 0.0
    %1258 = vmatpush2.msra.mxu0 0.0
    %1259 = vmatprep.subr.mxu0 0.0
    %1260 = vmatpush2.msra.mxu0 0.0
    %1261 = vmatprep.subr.mxu0 0.0
    %1262 = vmatpush2.msra.mxu0 0.0
    %1263 = vmatprep.subr.mxu0 0.0
    %1264 = vmatpush2.msra.mxu0 0.0
    %1265 = vmatprep.subr.mxu0 0.0
    %1266 = vmatpush2.msra.mxu0 0.0
    %1267 = vmatprep.subr.mxu0 0.0
    %1268 = vmatpush2.msra.mxu0 0.0
    %1269 = vmatprep.subr.mxu0 0.0
    %1270 = vmatpush2.msra.mxu0 0.0
    %1271 = vmatprep.subr.mxu0 0.0
    %1272 = vmatpush2.msra.mxu0 0.0
    %1273 = vmatprep.subr.mxu0 0.0
    %1274 = vmatpush2.msra.mxu0 0.0
    %1275 = vmatprep.subr.mxu0 0.0
    %1276 = vmatpush2.msra.mxu0 0.0
    %1277 = vmatprep.subr.mxu0 0.0
    %1278 = vmatpush2.msra.mxu0 0.0
    %1279 = vmatprep.subr.mxu0 0.0
    %1280 = vmatpush2.msra.mxu0 0.0
    %1281 = vmatprep.subr.mxu0 0.0
    %1282 = vmatpush2.msra.mxu0 0.0
    %1283 = vmatprep.subr.mxu0 0.0
    %1284 = vmatpush2.msra.mxu0 0.0
    %1285 = vmatprep.subr.mxu0 0.0
    %1286 = vmatpush2.msra.mxu0 0.0
    %1287 = vmatprep.mubr.f32.mxu0 0.0
    %1288 = vmatmul.mubr.f32.gmra.mxu0 %v1221
    %v1289 = vpop.f32.mrf.mxu0
    %v1290 = vadd.f32 %v1218, %v1289
    %v1291 = vpop.f32.mrf.mxu0
    %1292 = vdwg.mxu0
    %v1293 = vmax.f32 %v1290, 0.0
    %v1294 = vld [vmem:[%s49] sm:$0xff]
    %v1295 = vld [vmem:[%s49 + $0x8] sm:$0xff]
    %v1296 = vld [vmem:[%s49 + $0x10] sm:$0xff]
    %v1297 = vld [vmem:[%s49 + $0x18] sm:$0xff]
    %v1298 = vld [vmem:[%s51] sm:$0x1]
    %v1300 = vlaneseq
    %v1301 = vshrl.u32 %v1300, 7
    %v1302 = vsub.s32 0, %v1301
    %v1303 = vrot.slane %v1298, %v1302
    %v1306 = vsel %vm572, %v1293, 0
    %1308 = vmatprep.subr.mxu0 0.0
    %1309 = vmatpush1.msra.mxu0 0.0
    %1310 = vmatprep.subr.mxu0 0.0
    %1311 = vmatpush1.msra.mxu0 0.0
    %1312 = vmatprep.subr.mxu0 0.0
    %1313 = vmatpush1.msra.mxu0 0.0
    %1314 = vmatprep.subr.mxu0 0.0
    %1315 = vmatpush1.msra.mxu0 0.0
    %1316 = vmatprep.subr.mxu0 0.0
    %1317 = vmatpush1.msra.mxu0 0.0
    %1318 = vmatprep.subr.mxu0 0.0
    %1319 = vmatpush1.msra.mxu0 0.0
    %1320 = vmatprep.subr.mxu0 0.0
    %1321 = vmatpush1.msra.mxu0 0.0
    %1322 = vmatprep.subr.mxu0 0.0
    %1323 = vmatpush1.msra.mxu0 0.0
    %1324 = vmatprep.subr.mxu0 0.0
    %1325 = vmatpush1.msra.mxu0 0.0
    %1326 = vmatprep.subr.mxu0 0.0
    %1327 = vmatpush1.msra.mxu0 0.0
    %1328 = vmatprep.subr.mxu0 0.0
    %1329 = vmatpush1.msra.mxu0 0.0
    %1330 = vmatprep.subr.mxu0 0.0
    %1331 = vmatpush1.msra.mxu0 0.0
    %1332 = vmatprep.subr.mxu0 0.0
    %1333 = vmatpush1.msra.mxu0 %v1297
    %1334 = vmatprep.subr.mxu0 0.0
    %1335 = vmatpush1.msra.mxu0 %v1296
    %1336 = vmatprep.subr.mxu0 0.0
    %1337 = vmatpush1.msra.mxu0 %v1295
    %1338 = vmatprep.subr.mxu0 0.0
    %1339 = vmatpush1.msra.mxu0 %v1294
    %1340 = vmatprep.subr.mxu0 0.0
    %1341 = vmatpush2.msra.mxu0 0.0
    %1342 = vmatprep.subr.mxu0 0.0
    %1343 = vmatpush2.msra.mxu0 0.0
    %1344 = vmatprep.subr.mxu0 0.0
    %1345 = vmatpush2.msra.mxu0 0.0
    %1346 = vmatprep.subr.mxu0 0.0
    %1347 = vmatpush2.msra.mxu0 0.0
    %1348 = vmatprep.subr.mxu0 0.0
    %1349 = vmatpush2.msra.mxu0 0.0
    %1350 = vmatprep.subr.mxu0 0.0
    %1351 = vmatpush2.msra.mxu0 0.0
    %1352 = vmatprep.subr.mxu0 0.0
    %1353 = vmatpush2.msra.mxu0 0.0
    %1354 = vmatprep.subr.mxu0 0.0
    %1355 = vmatpush2.msra.mxu0 0.0
    %1356 = vmatprep.subr.mxu0 0.0
    %1357 = vmatpush2.msra.mxu0 0.0
    %1358 = vmatprep.subr.mxu0 0.0
    %1359 = vmatpush2.msra.mxu0 0.0
    %1360 = vmatprep.subr.mxu0 0.0
    %1361 = vmatpush2.msra.mxu0 0.0
    %1362 = vmatprep.subr.mxu0 0.0
    %1363 = vmatpush2.msra.mxu0 0.0
    %1364 = vmatprep.subr.mxu0 0.0
    %1365 = vmatpush2.msra.mxu0 0.0
    %1366 = vmatprep.subr.mxu0 0.0
    %1367 = vmatpush2.msra.mxu0 0.0
    %1368 = vmatprep.subr.mxu0 0.0
    %1369 = vmatpush2.msra.mxu0 0.0
    %1370 = vmatprep.subr.mxu0 0.0
    %1371 = vmatpush2.msra.mxu0 0.0
    %1372 = vmatprep.mubr.f32.mxu0 0.0
    %1373 = vmatmul.mubr.f32.gmra.mxu0 %v1306
    %v1374 = vpop.f32.mrf.mxu0
    %v1375 = vadd.f32 %v1303, %v1374
    %v1376 = vpop.f32.mrf.mxu0
    %1377 = vdwg.mxu0
    %v1378 = vmul.f32 %v1375, 0.5
    %v1379 = vmul.f32 %v1378, 1.442695
    %v1380 = vpow.pop %v1379
    %v1381 = vld [vmem:[%s11] sm:$0xf]
    %1383 = vrot.lane.b32.xlu0 %v1381, 16
    %v1384 = vpop.permute.xlu0 %1383
    %v1386 = vmul.f32 %v1380, %v1384
    %1388 = vrot.lane.b32.xlu0 %v1386, 112
    %v1389 = vpop.permute.xlu0 %1388
    %v1391 = vadd.f32 %v1375, %v1389
    %v1392 = vld [vmem:[%s13] sm:$0x3]
    %v1393 = vld [vmem:[%s15] sm:$0x3]
    %vm1394 = vcmask 31744
    %v1396 = vsel %vm1394, %v1392, 0
    %vm1398 = vcmask 1043456
    %v1400 = vsel %vm1398, %v1018, 0
    %1402 = vmatprep.subr.mxu0 0.0
    %1403 = vmatpush1.msra.mxu0 0.0
    %1404 = vmatprep.subr.mxu0 0.0
    %1405 = vmatpush1.msra.mxu0 0.0
    %1406 = vmatprep.subr.mxu0 0.0
    %1407 = vmatpush1.msra.mxu0 0.0
    %1408 = vmatprep.subr.mxu0 0.0
    %1409 = vmatpush1.msra.mxu0 0.0
    %1410 = vmatprep.subr.mxu0 0.0
    %1411 = vmatpush1.msra.mxu0 0.0
    %1412 = vmatprep.subr.mxu0 0.0
    %1413 = vmatpush1.msra.mxu0 0.0
    %1414 = vmatprep.subr.mxu0 0.0
    %1415 = vmatpush1.msra.mxu0 0.0
    %1416 = vmatprep.subr.mxu0 0.0
    %1417 = vmatpush1.msra.mxu0 0.0
    %1418 = vmatprep.subr.mxu0 0.0
    %1419 = vmatpush1.msra.mxu0 0.0
    %1420 = vmatprep.subr.mxu0 0.0
    %1421 = vmatpush1.msra.mxu0 0.0
    %1422 = vmatprep.subr.mxu0 0.0
    %1423 = vmatpush1.msra.mxu0 0.0
    %1424 = vmatprep.subr.mxu0 0.0
    %1425 = vmatpush1.msra.mxu0 0.0
    %1426 = vmatprep.subr.mxu0 0.0
    %1427 = vmatpush1.msra.mxu0 0.0
    %1428 = vmatprep.subr.mxu0 0.0
    %1429 = vmatpush1.msra.mxu0 0.0
    %1430 = vmatprep.subr.mxu0 0.0
    %1431 = vmatpush1.msra.mxu0 0.0
    %1432 = vmatprep.subr.mxu0 0.0
    %1433 = vmatpush1.msra.mxu0 %v1400
    %1434 = vmatprep.subr.mxu0 0.0
    %1435 = vmatpush2.msra.mxu0 0.0
    %1436 = vmatprep.subr.mxu0 0.0
    %1437 = vmatpush2.msra.mxu0 0.0
    %1438 = vmatprep.subr.mxu0 0.0
    %1439 = vmatpush2.msra.mxu0 0.0
    %1440 = vmatprep.subr.mxu0 0.0
    %1441 = vmatpush2.msra.mxu0 0.0
    %1442 = vmatprep.subr.mxu0 0.0
    %1443 = vmatpush2.msra.mxu0 0.0
    %1444 = vmatprep.subr.mxu0 0.0
    %1445 = vmatpush2.msra.mxu0 0.0
    %1446 = vmatprep.subr.mxu0 0.0
    %1447 = vmatpush2.msra.mxu0 0.0
    %1448 = vmatprep.subr.mxu0 0.0
    %1449 = vmatpush2.msra.mxu0 0.0
    %1450 = vmatprep.subr.mxu0 0.0
    %1451 = vmatpush2.msra.mxu0 0.0
    %1452 = vmatprep.subr.mxu0 0.0
    %1453 = vmatpush2.msra.mxu0 0.0
    %1454 = vmatprep.subr.mxu0 0.0
    %1455 = vmatpush2.msra.mxu0 0.0
    %1456 = vmatprep.subr.mxu0 0.0
    %1457 = vmatpush2.msra.mxu0 0.0
    %1458 = vmatprep.subr.mxu0 0.0
    %1459 = vmatpush2.msra.mxu0 0.0
    %1460 = vmatprep.subr.mxu0 0.0
    %1461 = vmatpush2.msra.mxu0 0.0
    %1462 = vmatprep.subr.mxu0 0.0
    %1463 = vmatpush2.msra.mxu0 0.0
    %1464 = vmatprep.subr.mxu0 0.0
    %1465 = vmatpush2.msra.mxu0 0.0
    %1466 = vmatprep.mubr.f32.mxu0 0.0
    %1467 = vmatmul.mubr.f32.gmra.mxu0 %v1396
    %v1468 = vpop.f32.mrf.mxu0
    %v1469 = vadd.f32 0.0, %v1468
    %v1470 = vpop.f32.mrf.mxu0
    %1471 = vdwg.mxu0
    %v1473 = vsel %vm1398, %v1002, 0
    %1475 = vmatprep.subr.mxu0 0.0
    %1476 = vmatpush1.msra.mxu0 0.0
    %1477 = vmatprep.subr.mxu0 0.0
    %1478 = vmatpush1.msra.mxu0 0.0
    %1479 = vmatprep.subr.mxu0 0.0
    %1480 = vmatpush1.msra.mxu0 0.0
    %1481 = vmatprep.subr.mxu0 0.0
    %1482 = vmatpush1.msra.mxu0 0.0
    %1483 = vmatprep.subr.mxu0 0.0
    %1484 = vmatpush1.msra.mxu0 0.0
    %1485 = vmatprep.subr.mxu0 0.0
    %1486 = vmatpush1.msra.mxu0 0.0
    %1487 = vmatprep.subr.mxu0 0.0
    %1488 = vmatpush1.msra.mxu0 0.0
    %1489 = vmatprep.subr.mxu0 0.0
    %1490 = vmatpush1.msra.mxu0 0.0
    %1491 = vmatprep.subr.mxu0 0.0
    %1492 = vmatpush1.msra.mxu0 0.0
    %1493 = vmatprep.subr.mxu0 0.0
    %1494 = vmatpush1.msra.mxu0 0.0
    %1495 = vmatprep.subr.mxu0 0.0
    %1496 = vmatpush1.msra.mxu0 0.0
    %1497 = vmatprep.subr.mxu0 0.0
    %1498 = vmatpush1.msra.mxu0 0.0
    %1499 = vmatprep.subr.mxu0 0.0
    %1500 = vmatpush1.msra.mxu0 0.0
    %1501 = vmatprep.subr.mxu0 0.0
    %1502 = vmatpush1.msra.mxu0 0.0
    %1503 = vmatprep.subr.mxu0 0.0
    %1504 = vmatpush1.msra.mxu0 0.0
    %1505 = vmatprep.subr.mxu0 0.0
    %1506 = vmatpush1.msra.mxu0 %v1473
    %1507 = vmatprep.subr.mxu0 0.0
    %1508 = vmatpush2.msra.mxu0 0.0
    %1509 = vmatprep.subr.mxu0 0.0
    %1510 = vmatpush2.msra.mxu0 0.0
    %1511 = vmatprep.subr.mxu0 0.0
    %1512 = vmatpush2.msra.mxu0 0.0
    %1513 = vmatprep.subr.mxu0 0.0
    %1514 = vmatpush2.msra.mxu0 0.0
    %1515 = vmatprep.subr.mxu0 0.0
    %1516 = vmatpush2.msra.mxu0 0.0
    %1517 = vmatprep.subr.mxu0 0.0
    %1518 = vmatpush2.msra.mxu0 0.0
    %1519 = vmatprep.subr.mxu0 0.0
    %1520 = vmatpush2.msra.mxu0 0.0
    %1521 = vmatprep.subr.mxu0 0.0
    %1522 = vmatpush2.msra.mxu0 0.0
    %1523 = vmatprep.subr.mxu0 0.0
    %1524 = vmatpush2.msra.mxu0 0.0
    %1525 = vmatprep.subr.mxu0 0.0
    %1526 = vmatpush2.msra.mxu0 0.0
    %1527 = vmatprep.subr.mxu0 0.0
    %1528 = vmatpush2.msra.mxu0 0.0
    %1529 = vmatprep.subr.mxu0 0.0
    %1530 = vmatpush2.msra.mxu0 0.0
    %1531 = vmatprep.subr.mxu0 0.0
    %1532 = vmatpush2.msra.mxu0 0.0
    %1533 = vmatprep.subr.mxu0 0.0
    %1534 = vmatpush2.msra.mxu0 0.0
    %1535 = vmatprep.subr.mxu0 0.0
    %1536 = vmatpush2.msra.mxu0 0.0
    %1537 = vmatprep.subr.mxu0 0.0
    %1538 = vmatpush2.msra.mxu0 0.0
    %1539 = vmatprep.mubr.f32.mxu0 0.0
    %1540 = vmatmul.mubr.f32.gmra.mxu0 %v1396
    %v1541 = vpop.f32.mrf.mxu0
    %v1542 = vadd.f32 0.0, %v1541
    %v1543 = vpop.f32.mrf.mxu0
    %1544 = vdwg.mxu0
    %1545 = vrot.lane.b32.xlu0 %v1002, 112
    %v1546 = vpop.permute.xlu0 %1545
    %v1547 = vsel %vm1398, %v1546, 0
    %1549 = vmatprep.subr.mxu0 0.0
    %1550 = vmatpush1.msra.mxu0 0.0
    %1551 = vmatprep.subr.mxu0 0.0
    %1552 = vmatpush1.msra.mxu0 0.0
    %1553 = vmatprep.subr.mxu0 0.0
    %1554 = vmatpush1.msra.mxu0 0.0
    %1555 = vmatprep.subr.mxu0 0.0
    %1556 = vmatpush1.msra.mxu0 0.0
    %1557 = vmatprep.subr.mxu0 0.0
    %1558 = vmatpush1.msra.mxu0 0.0
    %1559 = vmatprep.subr.mxu0 0.0
    %1560 = vmatpush1.msra.mxu0 0.0
    %1561 = vmatprep.subr.mxu0 0.0
    %1562 = vmatpush1.msra.mxu0 0.0
    %1563 = vmatprep.subr.mxu0 0.0
    %1564 = vmatpush1.msra.mxu0 0.0
    %1565 = vmatprep.subr.mxu0 0.0
    %1566 = vmatpush1.msra.mxu0 0.0
    %1567 = vmatprep.subr.mxu0 0.0
    %1568 = vmatpush1.msra.mxu0 0.0
    %1569 = vmatprep.subr.mxu0 0.0
    %1570 = vmatpush1.msra.mxu0 0.0
    %1571 = vmatprep.subr.mxu0 0.0
    %1572 = vmatpush1.msra.mxu0 0.0
    %1573 = vmatprep.subr.mxu0 0.0
    %1574 = vmatpush1.msra.mxu0 0.0
    %1575 = vmatprep.subr.mxu0 0.0
    %1576 = vmatpush1.msra.mxu0 0.0
    %1577 = vmatprep.subr.mxu0 0.0
    %1578 = vmatpush1.msra.mxu0 0.0
    %1579 = vmatprep.subr.mxu0 0.0
    %1580 = vmatpush1.msra.mxu0 %v1547
    %1581 = vmatprep.subr.mxu0 0.0
    %1582 = vmatpush2.msra.mxu0 0.0
    %1583 = vmatprep.subr.mxu0 0.0
    %1584 = vmatpush2.msra.mxu0 0.0
    %1585 = vmatprep.subr.mxu0 0.0
    %1586 = vmatpush2.msra.mxu0 0.0
    %1587 = vmatprep.subr.mxu0 0.0
    %1588 = vmatpush2.msra.mxu0 0.0
    %1589 = vmatprep.subr.mxu0 0.0
    %1590 = vmatpush2.msra.mxu0 0.0
    %1591 = vmatprep.subr.mxu0 0.0
    %1592 = vmatpush2.msra.mxu0 0.0
    %1593 = vmatprep.subr.mxu0 0.0
    %1594 = vmatpush2.msra.mxu0 0.0
    %1595 = vmatprep.subr.mxu0 0.0
    %1596 = vmatpush2.msra.mxu0 0.0
    %1597 = vmatprep.subr.mxu0 0.0
    %1598 = vmatpush2.msra.mxu0 0.0
    %1599 = vmatprep.subr.mxu0 0.0
    %1600 = vmatpush2.msra.mxu0 0.0
    %1601 = vmatprep.subr.mxu0 0.0
    %1602 = vmatpush2.msra.mxu0 0.0
    %1603 = vmatprep.subr.mxu0 0.0
    %1604 = vmatpush2.msra.mxu0 0.0
    %1605 = vmatprep.subr.mxu0 0.0
    %1606 = vmatpush2.msra.mxu0 0.0
    %1607 = vmatprep.subr.mxu0 0.0
    %1608 = vmatpush2.msra.mxu0 0.0
    %1609 = vmatprep.subr.mxu0 0.0
    %1610 = vmatpush2.msra.mxu0 0.0
    %1611 = vmatprep.subr.mxu0 0.0
    %1612 = vmatpush2.msra.mxu0 0.0
    %1613 = vmatprep.mubr.f32.mxu0 0.0
    %1614 = vmatmul.mubr.f32.gmra.mxu0 %v1396
    %v1615 = vpop.f32.mrf.mxu0
    %v1616 = vadd.f32 0.0, %v1615
    %v1617 = vpop.f32.mrf.mxu0
    %1618 = vdwg.mxu0
    %v1620 = vsel %vm1394, %v1393, 0
    %v1623 = vsel %vm1398, %v1391, 0
    %1625 = vmatprep.subr.mxu0 0.0
    %1626 = vmatpush1.msra.mxu0 0.0
    %1627 = vmatprep.subr.mxu0 0.0
    %1628 = vmatpush1.msra.mxu0 0.0
    %1629 = vmatprep.subr.mxu0 0.0
    %1630 = vmatpush1.msra.mxu0 0.0
    %1631 = vmatprep.subr.mxu0 0.0
    %1632 = vmatpush1.msra.mxu0 0.0
    %1633 = vmatprep.subr.mxu0 0.0
    %1634 = vmatpush1.msra.mxu0 0.0
    %1635 = vmatprep.subr.mxu0 0.0
    %1636 = vmatpush1.msra.mxu0 0.0
    %1637 = vmatprep.subr.mxu0 0.0
    %1638 = vmatpush1.msra.mxu0 0.0
    %1639 = vmatprep.subr.mxu0 0.0
    %1640 = vmatpush1.msra.mxu0 0.0
    %1641 = vmatprep.subr.mxu0 0.0
    %1642 = vmatpush1.msra.mxu0 0.0
    %1643 = vmatprep.subr.mxu0 0.0
    %1644 = vmatpush1.msra.mxu0 0.0
    %1645 = vmatprep.subr.mxu0 0.0
    %1646 = vmatpush1.msra.mxu0 0.0
    %1647 = vmatprep.subr.mxu0 0.0
    %1648 = vmatpush1.msra.mxu0 0.0
    %1649 = vmatprep.subr.mxu0 0.0
    %1650 = vmatpush1.msra.mxu0 0.0
    %1651 = vmatprep.subr.mxu0 0.0
    %1652 = vmatpush1.msra.mxu0 0.0
    %1653 = vmatprep.subr.mxu0 0.0
    %1654 = vmatpush1.msra.mxu0 0.0
    %1655 = vmatprep.subr.mxu0 0.0
    %1656 = vmatpush1.msra.mxu0 %v1623
    %1657 = vmatprep.subr.mxu0 0.0
    %1658 = vmatpush2.msra.mxu0 0.0
    %1659 = vmatprep.subr.mxu0 0.0
    %1660 = vmatpush2.msra.mxu0 0.0
    %1661 = vmatprep.subr.mxu0 0.0
    %1662 = vmatpush2.msra.mxu0 0.0
    %1663 = vmatprep.subr.mxu0 0.0
    %1664 = vmatpush2.msra.mxu0 0.0
    %1665 = vmatprep.subr.mxu0 0.0
    %1666 = vmatpush2.msra.mxu0 0.0
    %1667 = vmatprep.subr.mxu0 0.0
    %1668 = vmatpush2.msra.mxu0 0.0
    %1669 = vmatprep.subr.mxu0 0.0
    %1670 = vmatpush2.msra.mxu0 0.0
    %1671 = vmatprep.subr.mxu0 0.0
    %1672 = vmatpush2.msra.mxu0 0.0
    %1673 = vmatprep.subr.mxu0 0.0
    %1674 = vmatpush2.msra.mxu0 0.0
    %1675 = vmatprep.subr.mxu0 0.0
    %1676 = vmatpush2.msra.mxu0 0.0
    %1677 = vmatprep.subr.mxu0 0.0
    %1678 = vmatpush2.msra.mxu0 0.0
    %1679 = vmatprep.subr.mxu0 0.0
    %1680 = vmatpush2.msra.mxu0 0.0
    %1681 = vmatprep.subr.mxu0 0.0
    %1682 = vmatpush2.msra.mxu0 0.0
    %1683 = vmatprep.subr.mxu0 0.0
    %1684 = vmatpush2.msra.mxu0 0.0
    %1685 = vmatprep.subr.mxu0 0.0
    %1686 = vmatpush2.msra.mxu0 0.0
    %1687 = vmatprep.subr.mxu0 0.0
    %1688 = vmatpush2.msra.mxu0 0.0
    %1689 = vmatprep.mubr.f32.mxu0 0.0
    %1690 = vmatmul.mubr.f32.gmra.mxu0 %v1620
    %v1691 = vpop.f32.mrf.mxu0
    %v1692 = vadd.f32 0.0, %v1691
    %v1693 = vpop.f32.mrf.mxu0
    %1694 = vdwg.mxu0
    %v1696 = vsel %vm1398, %v1375, 0
    %1698 = vmatprep.subr.mxu0 0.0
    %1699 = vmatpush1.msra.mxu0 0.0
    %1700 = vmatprep.subr.mxu0 0.0
    %1701 = vmatpush1.msra.mxu0 0.0
    %1702 = vmatprep.subr.mxu0 0.0
    %1703 = vmatpush1.msra.mxu0 0.0
    %1704 = vmatprep.subr.mxu0 0.0
    %1705 = vmatpush1.msra.mxu0 0.0
    %1706 = vmatprep.subr.mxu0 0.0
    %1707 = vmatpush1.msra.mxu0 0.0
    %1708 = vmatprep.subr.mxu0 0.0
    %1709 = vmatpush1.msra.mxu0 0.0
    %1710 = vmatprep.subr.mxu0 0.0
    %1711 = vmatpush1.msra.mxu0 0.0
    %1712 = vmatprep.subr.mxu0 0.0
    %1713 = vmatpush1.msra.mxu0 0.0
    %1714 = vmatprep.subr.mxu0 0.0
    %1715 = vmatpush1.msra.mxu0 0.0
    %1716 = vmatprep.subr.mxu0 0.0
    %1717 = vmatpush1.msra.mxu0 0.0
    %1718 = vmatprep.subr.mxu0 0.0
    %1719 = vmatpush1.msra.mxu0 0.0
    %1720 = vmatprep.subr.mxu0 0.0
    %1721 = vmatpush1.msra.mxu0 0.0
    %1722 = vmatprep.subr.mxu0 0.0
    %1723 = vmatpush1.msra.mxu0 0.0
    %1724 = vmatprep.subr.mxu0 0.0
    %1725 = vmatpush1.msra.mxu0 0.0
    %1726 = vmatprep.subr.mxu0 0.0
    %1727 = vmatpush1.msra.mxu0 0.0
    %1728 = vmatprep.subr.mxu0 0.0
    %1729 = vmatpush1.msra.mxu0 %v1696
    %1730 = vmatprep.subr.mxu0 0.0
    %1731 = vmatpush2.msra.mxu0 0.0
    %1732 = vmatprep.subr.mxu0 0.0
    %1733 = vmatpush2.msra.mxu0 0.0
    %1734 = vmatprep.subr.mxu0 0.0
    %1735 = vmatpush2.msra.mxu0 0.0
    %1736 = vmatprep.subr.mxu0 0.0
    %1737 = vmatpush2.msra.mxu0 0.0
    %1738 = vmatprep.subr.mxu0 0.0
    %1739 = vmatpush2.msra.mxu0 0.0
    %1740 = vmatprep.subr.mxu0 0.0
    %1741 = vmatpush2.msra.mxu0 0.0
    %1742 = vmatprep.subr.mxu0 0.0
    %1743 = vmatpush2.msra.mxu0 0.0
    %1744 = vmatprep.subr.mxu0 0.0
    %1745 = vmatpush2.msra.mxu0 0.0
    %1746 = vmatprep.subr.mxu0 0.0
    %1747 = vmatpush2.msra.mxu0 0.0
    %1748 = vmatprep.subr.mxu0 0.0
    %1749 = vmatpush2.msra.mxu0 0.0
    %1750 = vmatprep.subr.mxu0 0.0
    %1751 = vmatpush2.msra.mxu0 0.0
    %1752 = vmatprep.subr.mxu0 0.0
    %1753 = vmatpush2.msra.mxu0 0.0
    %1754 = vmatprep.subr.mxu0 0.0
    %1755 = vmatpush2.msra.mxu0 0.0
    %1756 = vmatprep.subr.mxu0 0.0
    %1757 = vmatpush2.msra.mxu0 0.0
    %1758 = vmatprep.subr.mxu0 0.0
    %1759 = vmatpush2.msra.mxu0 0.0
    %1760 = vmatprep.subr.mxu0 0.0
    %1761 = vmatpush2.msra.mxu0 0.0
    %1762 = vmatprep.mubr.f32.mxu0 0.0
    %1763 = vmatmul.mubr.f32.gmra.mxu0 %v1620
    %v1764 = vpop.f32.mrf.mxu0
    %v1765 = vadd.f32 0.0, %v1764
    %v1766 = vpop.f32.mrf.mxu0
    %1767 = vdwg.mxu0
    %1768 = vrot.lane.b32.xlu0 %v1375, 112
    %v1769 = vpop.permute.xlu0 %1768
    %v1770 = vsel %vm1398, %v1769, 0
    %1772 = vmatprep.subr.mxu0 0.0
    %1773 = vmatpush1.msra.mxu0 0.0
    %1774 = vmatprep.subr.mxu0 0.0
    %1775 = vmatpush1.msra.mxu0 0.0
    %1776 = vmatprep.subr.mxu0 0.0
    %1777 = vmatpush1.msra.mxu0 0.0
    %1778 = vmatprep.subr.mxu0 0.0
    %1779 = vmatpush1.msra.mxu0 0.0
    %1780 = vmatprep.subr.mxu0 0.0
    %1781 = vmatpush1.msra.mxu0 0.0
    %1782 = vmatprep.subr.mxu0 0.0
    %1783 = vmatpush1.msra.mxu0 0.0
    %1784 = vmatprep.subr.mxu0 0.0
    %1785 = vmatpush1.msra.mxu0 0.0
    %1786 = vmatprep.subr.mxu0 0.0
    %1787 = vmatpush1.msra.mxu0 0.0
    %1788 = vmatprep.subr.mxu0 0.0
    %1789 = vmatpush1.msra.mxu0 0.0
    %1790 = vmatprep.subr.mxu0 0.0
    %1791 = vmatpush1.msra.mxu0 0.0
    %1792 = vmatprep.subr.mxu0 0.0
    %1793 = vmatpush1.msra.mxu0 0.0
    %1794 = vmatprep.subr.mxu0 0.0
    %1795 = vmatpush1.msra.mxu0 0.0
    %1796 = vmatprep.subr.mxu0 0.0
    %1797 = vmatpush1.msra.mxu0 0.0
    %1798 = vmatprep.subr.mxu0 0.0
    %1799 = vmatpush1.msra.mxu0 0.0
    %1800 = vmatprep.subr.mxu0 0.0
    %1801 = vmatpush1.msra.mxu0 0.0
    %1802 = vmatprep.subr.mxu0 0.0
    %1803 = vmatpush1.msra.mxu0 %v1770
    %1804 = vmatprep.subr.mxu0 0.0
    %1805 = vmatpush2.msra.mxu0 0.0
    %1806 = vmatprep.subr.mxu0 0.0
    %1807 = vmatpush2.msra.mxu0 0.0
    %1808 = vmatprep.subr.mxu0 0.0
    %1809 = vmatpush2.msra.mxu0 0.0
    %1810 = vmatprep.subr.mxu0 0.0
    %1811 = vmatpush2.msra.mxu0 0.0
    %1812 = vmatprep.subr.mxu0 0.0
    %1813 = vmatpush2.msra.mxu0 0.0
    %1814 = vmatprep.subr.mxu0 0.0
    %1815 = vmatpush2.msra.mxu0 0.0
    %1816 = vmatprep.subr.mxu0 0.0
    %1817 = vmatpush2.msra.mxu0 0.0
    %1818 = vmatprep.subr.mxu0 0.0
    %1819 = vmatpush2.msra.mxu0 0.0
    %1820 = vmatprep.subr.mxu0 0.0
    %1821 = vmatpush2.msra.mxu0 0.0
    %1822 = vmatprep.subr.mxu0 0.0
    %1823 = vmatpush2.msra.mxu0 0.0
    %1824 = vmatprep.subr.mxu0 0.0
    %1825 = vmatpush2.msra.mxu0 0.0
    %1826 = vmatprep.subr.mxu0 0.0
    %1827 = vmatpush2.msra.mxu0 0.0
    %1828 = vmatprep.subr.mxu0 0.0
    %1829 = vmatpush2.msra.mxu0 0.0
    %1830 = vmatprep.subr.mxu0 0.0
    %1831 = vmatpush2.msra.mxu0 0.0
    %1832 = vmatprep.subr.mxu0 0.0
    %1833 = vmatpush2.msra.mxu0 0.0
    %1834 = vmatprep.subr.mxu0 0.0
    %1835 = vmatpush2.msra.mxu0 0.0
    %1836 = vmatprep.mubr.f32.mxu0 0.0
    %1837 = vmatmul.mubr.f32.gmra.mxu0 %v1620
    %v1838 = vpop.f32.mrf.mxu0
    %v1839 = vadd.f32 0.0, %v1838
    %v1840 = vpop.f32.mrf.mxu0
    %1841 = vdwg.mxu0
    %v1842 = vadd.f32 %v728, 1.0
    %v1843 = vmul.f32 %v728, %v728
    %1845 = vrot.lane.b32.xlu0 %v1843, 16
    %v1846 = vpop.permute.xlu0 %1845
    %v1848 = vsub.f32 %v1842, %v1846
    %v1849 = vmul.f32 %v728, 1.442695
    %v1850 = vpow.pop %v1849
    %v1851 = vsub.f32 %v1848, %v1850
    %vm1852 = vcmask 255104
    %v1853 = vsel %vm1852, %v1851, 0.0
    %v1854 = vrot.slane %v1853, 4
    %v1855 = vadd.f32 %v1853, %v1854
    %v1856 = vrot.slane %v1855, 2
    %v1857 = vadd.f32 %v1855, %v1856
    %v1858 = vrot.slane %v1857, 1
    %v1859 = vadd.f32 %v1857, %v1858
    %1861 = vrot.lane.b32.xlu0 %v1859, 112
    %v1862 = vpop.permute.xlu0 %1861
    %vm1864 = vcmask 130048
    %v1865 = vsel %vm1864, %v1862, 0.0
    %1866 = vadd.xlane.f32.xlu0 %v1865
    %v1867 = vpop.xlane.xlu0 %1866
    %v1868 = vadd.f32 %v1616, 1.0
    %v1869 = vmul.f32 %v1542, %v1542
    %v1870 = vsub.f32 %v1868, %v1869
    %v1871 = vmul.f32 %v1616, 1.442695
    %v1872 = vpow.pop %v1871
    %v1873 = vsub.f32 %v1870, %v1872
    %vm1874 = vcmask 123904
    %v1875 = vsel %vm1874, %v1873, 0.0
    %v1876 = vrot.slane %v1875, 4
    %v1877 = vadd.f32 %v1875, %v1876
    %v1878 = vrot.slane %v1877, 2
    %v1879 = vadd.f32 %v1877, %v1878
    %v1880 = vrot.slane %v1879, 1
    %v1881 = vadd.f32 %v1879, %v1880
    %v1882 = vsel %vm1864, %v1881, 0.0
    %1883 = vadd.xlane.f32.xlu0 %v1882
    %v1884 = vpop.xlane.xlu0 %1883
    %v1885 = vadd.f32 %v1867, %v1884
    %v1886 = vadd.f32 %v1839, 1.0
    %v1887 = vmul.f32 %v1765, %v1765
    %v1888 = vsub.f32 %v1886, %v1887
    %v1889 = vmul.f32 %v1839, 1.442695
    %v1890 = vpow.pop %v1889
    %v1891 = vsub.f32 %v1888, %v1890
    %v1892 = vsel %vm1874, %v1891, 0.0
    %v1893 = vrot.slane %v1892, 4
    %v1894 = vadd.f32 %v1892, %v1893
    %v1895 = vrot.slane %v1894, 2
    %v1896 = vadd.f32 %v1894, %v1895
    %v1897 = vrot.slane %v1896, 1
    %v1898 = vadd.f32 %v1896, %v1897
    %v1899 = vsel %vm1864, %v1898, 0.0
    %1900 = vadd.xlane.f32.xlu0 %v1899
    %v1901 = vpop.xlane.xlu0 %1900
    %v1902 = vadd.f32 %v1885, %v1901
    %v1903 = vmul.f32 %v1902, -0.010416667
    %vm1904 = vcmask 0
    %1905 = vst.msk [vmem:[#allocation2] sm:$0x1] %vm1904, %v1903
    %v1906 = vld [vmem:[%s53] sm:$0xff]
    %v1907 = vld [vmem:[%s53 + $0x8] sm:$0xff]
    %v1908 = vld [vmem:[%s53 + $0x10] sm:$0xff]
    %v1909 = vld [vmem:[%s53 + $0x18] sm:$0xff]
    %v1910 = vld [vmem:[%s53 + $0x20] sm:$0xff]
    %v1911 = vld [vmem:[%s53 + $0x28] sm:$0xff]
    %v1912 = vld [vmem:[%s55] sm:$0x1]
    %v1913 = vld [vmem:[%s57] sm:$0xff]
    %v1914 = vld [vmem:[%s57 + $0x8] sm:$0xff]
    %v1915 = vld [vmem:[%s59] sm:$0x1]
    %v1916 = vld [vmem:[%s61] sm:$0xff]
    %v1917 = vld [vmem:[%s61 + $0x8] sm:$0xff]
    %v1918 = vld [vmem:[%s63] sm:$0x1]
    %v1920 = vsel %vm1864, %v1469, 0
    %1922 = vmatprep.subr.mxu0 0.0
    %1923 = vmatpush1.msra.mxu0 0.0
    %1924 = vmatprep.subr.mxu0 0.0
    %1925 = vmatpush1.msra.mxu0 0.0
    %1926 = vmatprep.subr.mxu0 0.0
    %1927 = vmatpush1.msra.mxu0 0.0
    %1928 = vmatprep.subr.mxu0 0.0
    %1929 = vmatpush1.msra.mxu0 0.0
    %1930 = vmatprep.subr.mxu0 0.0
    %1931 = vmatpush1.msra.mxu0 0.0
    %1932 = vmatprep.subr.mxu0 0.0
    %1933 = vmatpush1.msra.mxu0 0.0
    %1934 = vmatprep.subr.mxu0 0.0
    %1935 = vmatpush1.msra.mxu0 0.0
    %1936 = vmatprep.subr.mxu0 0.0
    %1937 = vmatpush1.msra.mxu0 0.0
    %1938 = vmatprep.subr.mxu0 0.0
    %1939 = vmatpush1.msra.mxu0 0.0
    %1940 = vmatprep.subr.mxu0 0.0
    %1941 = vmatpush1.msra.mxu0 0.0
    %1942 = vmatprep.subr.mxu0 0.0
    %1943 = vmatpush1.msra.mxu0 0.0
    %1944 = vmatprep.subr.mxu0 0.0
    %1945 = vmatpush1.msra.mxu0 0.0
    %1946 = vmatprep.subr.mxu0 0.0
    %1947 = vmatpush1.msra.mxu0 0.0
    %1948 = vmatprep.subr.mxu0 0.0
    %1949 = vmatpush1.msra.mxu0 0.0
    %1950 = vmatprep.subr.mxu0 0.0
    %1951 = vmatpush1.msra.mxu0 %v1909
    %1952 = vmatprep.subr.mxu0 0.0
    %1953 = vmatpush1.msra.mxu0 %v1908
    %1954 = vmatprep.subr.mxu0 0.0
    %1955 = vmatpush2.msra.mxu0 0.0
    %1956 = vmatprep.subr.mxu0 0.0
    %1957 = vmatpush2.msra.mxu0 0.0
    %1958 = vmatprep.subr.mxu0 0.0
    %1959 = vmatpush2.msra.mxu0 0.0
    %1960 = vmatprep.subr.mxu0 0.0
    %1961 = vmatpush2.msra.mxu0 0.0
    %1962 = vmatprep.subr.mxu0 0.0
    %1963 = vmatpush2.msra.mxu0 0.0
    %1964 = vmatprep.subr.mxu0 0.0
    %1965 = vmatpush2.msra.mxu0 0.0
    %1966 = vmatprep.subr.mxu0 0.0
    %1967 = vmatpush2.msra.mxu0 0.0
    %1968 = vmatprep.subr.mxu0 0.0
    %1969 = vmatpush2.msra.mxu0 0.0
    %1970 = vmatprep.subr.mxu0 0.0
    %1971 = vmatpush2.msra.mxu0 0.0
    %1972 = vmatprep.subr.mxu0 0.0
    %1973 = vmatpush2.msra.mxu0 0.0
    %1974 = vmatprep.subr.mxu0 0.0
    %1975 = vmatpush2.msra.mxu0 0.0
    %1976 = vmatprep.subr.mxu0 0.0
    %1977 = vmatpush2.msra.mxu0 0.0
    %1978 = vmatprep.subr.mxu0 0.0
    %1979 = vmatpush2.msra.mxu0 0.0
    %1980 = vmatprep.subr.mxu0 0.0
    %1981 = vmatpush2.msra.mxu0 0.0
    %1982 = vmatprep.subr.mxu0 0.0
    %1983 = vmatpush2.msra.mxu0 0.0
    %1984 = vmatprep.subr.mxu0 0.0
    %1985 = vmatpush2.msra.mxu0 0.0
    %1986 = vmatprep.mubr.f32.mxu0 0.0
    %1987 = vmatmul.mubr.f32.gmra.mxu0 %v1920
    %v1988 = vpop.f32.mrf.mxu0
    %v1989 = vadd.f32 0.0, %v1988
    %v1990 = vpop.f32.mrf.mxu0
    %1991 = vdwg.mxu0
    %v1993 = vsel %vm1864, %v744, 0
    %1995 = vmatprep.subr.mxu0 0.0
    %1996 = vmatpush1.msra.mxu0 0.0
    %1997 = vmatprep.subr.mxu0 0.0
    %1998 = vmatpush1.msra.mxu0 0.0
    %1999 = vmatprep.subr.mxu0 0.0
    %2000 = vmatpush1.msra.mxu0 0.0
    %2001 = vmatprep.subr.mxu0 0.0
    %2002 = vmatpush1.msra.mxu0 0.0
    %2003 = vmatprep.subr.mxu0 0.0
    %2004 = vmatpush1.msra.mxu0 0.0
    %2005 = vmatprep.subr.mxu0 0.0
    %2006 = vmatpush1.msra.mxu0 0.0
    %2007 = vmatprep.subr.mxu0 0.0
    %2008 = vmatpush1.msra.mxu0 0.0
    %2009 = vmatprep.subr.mxu0 0.0
    %2010 = vmatpush1.msra.mxu0 0.0
    %2011 = vmatprep.subr.mxu0 0.0
    %2012 = vmatpush1.msra.mxu0 0.0
    %2013 = vmatprep.subr.mxu0 0.0
    %2014 = vmatpush1.msra.mxu0 0.0
    %2015 = vmatprep.subr.mxu0 0.0
    %2016 = vmatpush1.msra.mxu0 0.0
    %2017 = vmatprep.subr.mxu0 0.0
    %2018 = vmatpush1.msra.mxu0 0.0
    %2019 = vmatprep.subr.mxu0 0.0
    %2020 = vmatpush1.msra.mxu0 0.0
    %2021 = vmatprep.subr.mxu0 0.0
    %2022 = vmatpush1.msra.mxu0 0.0
    %2023 = vmatprep.subr.mxu0 0.0
    %2024 = vmatpush1.msra.mxu0 %v1907
    %2025 = vmatprep.subr.mxu0 0.0
    %2026 = vmatpush1.msra.mxu0 %v1906
    %2027 = vmatprep.subr.mxu0 0.0
    %2028 = vmatpush2.msra.mxu0 0.0
    %2029 = vmatprep.subr.mxu0 0.0
    %2030 = vmatpush2.msra.mxu0 0.0
    %2031 = vmatprep.subr.mxu0 0.0
    %2032 = vmatpush2.msra.mxu0 0.0
    %2033 = vmatprep.subr.mxu0 0.0
    %2034 = vmatpush2.msra.mxu0 0.0
    %2035 = vmatprep.subr.mxu0 0.0
    %2036 = vmatpush2.msra.mxu0 0.0
    %2037 = vmatprep.subr.mxu0 0.0
    %2038 = vmatpush2.msra.mxu0 0.0
    %2039 = vmatprep.subr.mxu0 0.0
    %2040 = vmatpush2.msra.mxu0 0.0
    %2041 = vmatprep.subr.mxu0 0.0
    %2042 = vmatpush2.msra.mxu0 0.0
    %2043 = vmatprep.subr.mxu0 0.0
    %2044 = vmatpush2.msra.mxu0 0.0
    %2045 = vmatprep.subr.mxu0 0.0
    %2046 = vmatpush2.msra.mxu0 0.0
    %2047 = vmatprep.subr.mxu0 0.0
    %2048 = vmatpush2.msra.mxu0 0.0
    %2049 = vmatprep.subr.mxu0 0.0
    %2050 = vmatpush2.msra.mxu0 0.0
    %2051 = vmatprep.subr.mxu0 0.0
    %2052 = vmatpush2.msra.mxu0 0.0
    %2053 = vmatprep.subr.mxu0 0.0
    %2054 = vmatpush2.msra.mxu0 0.0
    %2055 = vmatprep.subr.mxu0 0.0
    %2056 = vmatpush2.msra.mxu0 0.0
    %2057 = vmatprep.subr.mxu0 0.0
    %2058 = vmatpush2.msra.mxu0 0.0
    %2059 = vmatprep.mubr.f32.mxu0 0.0
    %2060 = vmatmul.mubr.f32.gmra.mxu0 %v1993
    %v2061 = vpop.f32.mrf.mxu0
    %v2062 = vadd.f32 %v1989, %v2061
    %v2063 = vpop.f32.mrf.mxu0
    %2064 = vdwg.mxu0
    %v2066 = vsel %vm1864, %v1692, 0
    %2068 = vmatprep.subr.mxu0 0.0
    %2069 = vmatpush1.msra.mxu0 0.0
    %2070 = vmatprep.subr.mxu0 0.0
    %2071 = vmatpush1.msra.mxu0 0.0
    %2072 = vmatprep.subr.mxu0 0.0
    %2073 = vmatpush1.msra.mxu0 0.0
    %2074 = vmatprep.subr.mxu0 0.0
    %2075 = vmatpush1.msra.mxu0 0.0
    %2076 = vmatprep.subr.mxu0 0.0
    %2077 = vmatpush1.msra.mxu0 0.0
    %2078 = vmatprep.subr.mxu0 0.0
    %2079 = vmatpush1.msra.mxu0 0.0
    %2080 = vmatprep.subr.mxu0 0.0
    %2081 = vmatpush1.msra.mxu0 0.0
    %2082 = vmatprep.subr.mxu0 0.0
    %2083 = vmatpush1.msra.mxu0 0.0
    %2084 = vmatprep.subr.mxu0 0.0
    %2085 = vmatpush1.msra.mxu0 0.0
    %2086 = vmatprep.subr.mxu0 0.0
    %2087 = vmatpush1.msra.mxu0 0.0
    %2088 = vmatprep.subr.mxu0 0.0
    %2089 = vmatpush1.msra.mxu0 0.0
    %2090 = vmatprep.subr.mxu0 0.0
    %2091 = vmatpush1.msra.mxu0 0.0
    %2092 = vmatprep.subr.mxu0 0.0
    %2093 = vmatpush1.msra.mxu0 0.0
    %2094 = vmatprep.subr.mxu0 0.0
    %2095 = vmatpush1.msra.mxu0 0.0
    %2096 = vmatprep.subr.mxu0 0.0
    %2097 = vmatpush1.msra.mxu0 %v1911
    %2098 = vmatprep.subr.mxu0 0.0
    %2099 = vmatpush1.msra.mxu0 %v1910
    %2100 = vmatprep.subr.mxu0 0.0
    %2101 = vmatpush2.msra.mxu0 0.0
    %2102 = vmatprep.subr.mxu0 0.0
    %2103 = vmatpush2.msra.mxu0 0.0
    %2104 = vmatprep.subr.mxu0 0.0
    %2105 = vmatpush2.msra.mxu0 0.0
    %2106 = vmatprep.subr.mxu0 0.0
    %2107 = vmatpush2.msra.mxu0 0.0
    %2108 = vmatprep.subr.mxu0 0.0
    %2109 = vmatpush2.msra.mxu0 0.0
    %2110 = vmatprep.subr.mxu0 0.0
    %2111 = vmatpush2.msra.mxu0 0.0
    %2112 = vmatprep.subr.mxu0 0.0
    %2113 = vmatpush2.msra.mxu0 0.0
    %2114 = vmatprep.subr.mxu0 0.0
    %2115 = vmatpush2.msra.mxu0 0.0
    %2116 = vmatprep.subr.mxu0 0.0
    %2117 = vmatpush2.msra.mxu0 0.0
    %2118 = vmatprep.subr.mxu0 0.0
    %2119 = vmatpush2.msra.mxu0 0.0
    %2120 = vmatprep.subr.mxu0 0.0
    %2121 = vmatpush2.msra.mxu0 0.0
    %2122 = vmatprep.subr.mxu0 0.0
    %2123 = vmatpush2.msra.mxu0 0.0
    %2124 = vmatprep.subr.mxu0 0.0
    %2125 = vmatpush2.msra.mxu0 0.0
    %2126 = vmatprep.subr.mxu0 0.0
    %2127 = vmatpush2.msra.mxu0 0.0
    %2128 = vmatprep.subr.mxu0 0.0
    %2129 = vmatpush2.msra.mxu0 0.0
    %2130 = vmatprep.subr.mxu0 0.0
    %2131 = vmatpush2.msra.mxu0 0.0
    %2132 = vmatprep.mubr.f32.mxu0 0.0
    %2133 = vmatmul.mubr.f32.gmra.mxu0 %v2066
    %v2134 = vpop.f32.mrf.mxu0
    %v2135 = vadd.f32 0.0, %v2134
    %v2136 = vpop.f32.mrf.mxu0
    %2137 = vdwg.mxu0
    %v2138 = vadd.f32 %v2062, %v2135
    %v2140 = vlaneseq
    %v2141 = vshrl.u32 %v2140, 7
    %v2142 = vsub.s32 0, %v2141
    %v2143 = vrot.slane %v1912, %v2142
    %v2145 = vadd.f32 %v2138, %v2143
    %v2146 = vmax.f32 %v2145, 0.0
    %v2148 = vlaneseq
    %v2149 = vshrl.u32 %v2148, 7
    %v2150 = vsub.s32 0, %v2149
    %v2151 = vrot.slane %v1915, %v2150
    %v2154 = vsel %vm1864, %v2146, 0
    %2156 = vmatprep.subr.mxu0 0.0
    %2157 = vmatpush1.msra.mxu0 0.0
    %2158 = vmatprep.subr.mxu0 0.0
    %2159 = vmatpush1.msra.mxu0 0.0
    %2160 = vmatprep.subr.mxu0 0.0
    %2161 = vmatpush1.msra.mxu0 0.0
    %2162 = vmatprep.subr.mxu0 0.0
    %2163 = vmatpush1.msra.mxu0 0.0
    %2164 = vmatprep.subr.mxu0 0.0
    %2165 = vmatpush1.msra.mxu0 0.0
    %2166 = vmatprep.subr.mxu0 0.0
    %2167 = vmatpush1.msra.mxu0 0.0
    %2168 = vmatprep.subr.mxu0 0.0
    %2169 = vmatpush1.msra.mxu0 0.0
    %2170 = vmatprep.subr.mxu0 0.0
    %2171 = vmatpush1.msra.mxu0 0.0
    %2172 = vmatprep.subr.mxu0 0.0
    %2173 = vmatpush1.msra.mxu0 0.0
    %2174 = vmatprep.subr.mxu0 0.0
    %2175 = vmatpush1.msra.mxu0 0.0
    %2176 = vmatprep.subr.mxu0 0.0
    %2177 = vmatpush1.msra.mxu0 0.0
    %2178 = vmatprep.subr.mxu0 0.0
    %2179 = vmatpush1.msra.mxu0 0.0
    %2180 = vmatprep.subr.mxu0 0.0
    %2181 = vmatpush1.msra.mxu0 0.0
    %2182 = vmatprep.subr.mxu0 0.0
    %2183 = vmatpush1.msra.mxu0 0.0
    %2184 = vmatprep.subr.mxu0 0.0
    %2185 = vmatpush1.msra.mxu0 %v1914
    %2186 = vmatprep.subr.mxu0 0.0
    %2187 = vmatpush1.msra.mxu0 %v1913
    %2188 = vmatprep.subr.mxu0 0.0
    %2189 = vmatpush2.msra.mxu0 0.0
    %2190 = vmatprep.subr.mxu0 0.0
    %2191 = vmatpush2.msra.mxu0 0.0
    %2192 = vmatprep.subr.mxu0 0.0
    %2193 = vmatpush2.msra.mxu0 0.0
    %2194 = vmatprep.subr.mxu0 0.0
    %2195 = vmatpush2.msra.mxu0 0.0
    %2196 = vmatprep.subr.mxu0 0.0
    %2197 = vmatpush2.msra.mxu0 0.0
    %2198 = vmatprep.subr.mxu0 0.0
    %2199 = vmatpush2.msra.mxu0 0.0
    %2200 = vmatprep.subr.mxu0 0.0
    %2201 = vmatpush2.msra.mxu0 0.0
    %2202 = vmatprep.subr.mxu0 0.0
    %2203 = vmatpush2.msra.mxu0 0.0
    %2204 = vmatprep.subr.mxu0 0.0
    %2205 = vmatpush2.msra.mxu0 0.0
    %2206 = vmatprep.subr.mxu0 0.0
    %2207 = vmatpush2.msra.mxu0 0.0
    %2208 = vmatprep.subr.mxu0 0.0
    %2209 = vmatpush2.msra.mxu0 0.0
    %2210 = vmatprep.subr.mxu0 0.0
    %2211 = vmatpush2.msra.mxu0 0.0
    %2212 = vmatprep.subr.mxu0 0.0
    %2213 = vmatpush2.msra.mxu0 0.0
    %2214 = vmatprep.subr.mxu0 0.0
    %2215 = vmatpush2.msra.mxu0 0.0
    %2216 = vmatprep.subr.mxu0 0.0
    %2217 = vmatpush2.msra.mxu0 0.0
    %2218 = vmatprep.subr.mxu0 0.0
    %2219 = vmatpush2.msra.mxu0 0.0
    %2220 = vmatprep.mubr.f32.mxu0 0.0
    %2221 = vmatmul.mubr.f32.gmra.mxu0 %v2154
    %v2222 = vpop.f32.mrf.mxu0
    %v2223 = vadd.f32 %v2151, %v2222
    %v2224 = vpop.f32.mrf.mxu0
    %2225 = vdwg.mxu0
    %v2226 = vmax.f32 %v2223, 0.0
    %v2228 = vlaneseq
    %v2229 = vshrl.u32 %v2228, 7
    %v2230 = vsub.s32 0, %v2229
    %v2231 = vrot.slane %v1918, %v2230
    %v2234 = vsel %vm1864, %v2226, 0
    %2236 = vmatprep.subr.mxu0 0.0
    %2237 = vmatpush1.msra.mxu0 0.0
    %2238 = vmatprep.subr.mxu0 0.0
    %2239 = vmatpush1.msra.mxu0 0.0
    %2240 = vmatprep.subr.mxu0 0.0
    %2241 = vmatpush1.msra.mxu0 0.0
    %2242 = vmatprep.subr.mxu0 0.0
    %2243 = vmatpush1.msra.mxu0 0.0
    %2244 = vmatprep.subr.mxu0 0.0
    %2245 = vmatpush1.msra.mxu0 0.0
    %2246 = vmatprep.subr.mxu0 0.0
    %2247 = vmatpush1.msra.mxu0 0.0
    %2248 = vmatprep.subr.mxu0 0.0
    %2249 = vmatpush1.msra.mxu0 0.0
    %2250 = vmatprep.subr.mxu0 0.0
    %2251 = vmatpush1.msra.mxu0 0.0
    %2252 = vmatprep.subr.mxu0 0.0
    %2253 = vmatpush1.msra.mxu0 0.0
    %2254 = vmatprep.subr.mxu0 0.0
    %2255 = vmatpush1.msra.mxu0 0.0
    %2256 = vmatprep.subr.mxu0 0.0
    %2257 = vmatpush1.msra.mxu0 0.0
    %2258 = vmatprep.subr.mxu0 0.0
    %2259 = vmatpush1.msra.mxu0 0.0
    %2260 = vmatprep.subr.mxu0 0.0
    %2261 = vmatpush1.msra.mxu0 0.0
    %2262 = vmatprep.subr.mxu0 0.0
    %2263 = vmatpush1.msra.mxu0 0.0
    %2264 = vmatprep.subr.mxu0 0.0
    %2265 = vmatpush1.msra.mxu0 %v1917
    %2266 = vmatprep.subr.mxu0 0.0
    %2267 = vmatpush1.msra.mxu0 %v1916
    %2268 = vmatprep.subr.mxu0 0.0
    %2269 = vmatpush2.msra.mxu0 0.0
    %2270 = vmatprep.subr.mxu0 0.0
    %2271 = vmatpush2.msra.mxu0 0.0
    %2272 = vmatprep.subr.mxu0 0.0
    %2273 = vmatpush2.msra.mxu0 0.0
    %2274 = vmatprep.subr.mxu0 0.0
    %2275 = vmatpush2.msra.mxu0 0.0
    %2276 = vmatprep.subr.mxu0 0.0
    %2277 = vmatpush2.msra.mxu0 0.0
    %2278 = vmatprep.subr.mxu0 0.0
    %2279 = vmatpush2.msra.mxu0 0.0
    %2280 = vmatprep.subr.mxu0 0.0
    %2281 = vmatpush2.msra.mxu0 0.0
    %2282 = vmatprep.subr.mxu0 0.0
    %2283 = vmatpush2.msra.mxu0 0.0
    %2284 = vmatprep.subr.mxu0 0.0
    %2285 = vmatpush2.msra.mxu0 0.0
    %2286 = vmatprep.subr.mxu0 0.0
    %2287 = vmatpush2.msra.mxu0 0.0
    %2288 = vmatprep.subr.mxu0 0.0
    %2289 = vmatpush2.msra.mxu0 0.0
    %2290 = vmatprep.subr.mxu0 0.0
    %2291 = vmatpush2.msra.mxu0 0.0
    %2292 = vmatprep.subr.mxu0 0.0
    %2293 = vmatpush2.msra.mxu0 0.0
    %2294 = vmatprep.subr.mxu0 0.0
    %2295 = vmatpush2.msra.mxu0 0.0
    %2296 = vmatprep.subr.mxu0 0.0
    %2297 = vmatpush2.msra.mxu0 0.0
    %2298 = vmatprep.subr.mxu0 0.0
    %2299 = vmatpush2.msra.mxu0 0.0
    %2300 = vmatprep.mubr.f32.mxu0 0.0
    %2301 = vmatmul.mubr.f32.gmra.mxu0 %v2234
    %v2302 = vpop.f32.mrf.mxu0
    %v2303 = vadd.f32 %v2231, %v2302
    %v2304 = vpop.f32.mrf.mxu0
    %2305 = vdwg.mxu0
    %vm2306 = vcmask 17408
    %v2307 = vsel %vm2306, %v2303, -inf
    %2308 = vmax.xlane.f32.xlu0 %v2307
    %v2309 = vpop.xlane.xlu0 %2308
    %v2310 = vsub.f32 %v2303, %v2309
    %v2311 = vmul.f32 %v2310, 1.442695
    %v2312 = vpow.pop %v2311
    %v2313 = vsel %vm2306, %v2312, 0.0
    %2314 = vadd.xlane.f32.xlu0 %v2313
    %v2315 = vpop.xlane.xlu0 %2314
    %v2316 = vrcp.pop %v2315
    %v2317 = vmul.f32 %v2312, %v2316
    %2319 = vset.pattern.permute.xlu0 0
    %2320 = vperm.xlu0 %2319, %v2317
    %v2321 = vpop.permute.xlu0 %2320
    %v2323 = vmul.f32 %v2321, %v744
    %2324 = vset.pattern.permute.xlu0 1
    %2325 = vperm.xlu0 %2324, %v2317
    %v2326 = vpop.permute.xlu0 %2325
    %v2328 = vmul.f32 %v2326, %v1469
    %v2329 = vadd.f32 %v2323, %v2328
    %2330 = vset.pattern.permute.xlu0 2
    %2331 = vperm.xlu0 %2330, %v2317
    %v2332 = vpop.permute.xlu0 %2331
    %v2334 = vmul.f32 %v2332, %v1692
    %v2335 = vadd.f32 %v2329, %v2334
    %v2337 = vsel %vm1864, %v1542, 0
    %2339 = vmatprep.subr.mxu0 0.0
    %2340 = vmatpush1.msra.mxu0 0.0
    %2341 = vmatprep.subr.mxu0 0.0
    %2342 = vmatpush1.msra.mxu0 0.0
    %2343 = vmatprep.subr.mxu0 0.0
    %2344 = vmatpush1.msra.mxu0 0.0
    %2345 = vmatprep.subr.mxu0 0.0
    %2346 = vmatpush1.msra.mxu0 0.0
    %2347 = vmatprep.subr.mxu0 0.0
    %2348 = vmatpush1.msra.mxu0 0.0
    %2349 = vmatprep.subr.mxu0 0.0
    %2350 = vmatpush1.msra.mxu0 0.0
    %2351 = vmatprep.subr.mxu0 0.0
    %2352 = vmatpush1.msra.mxu0 0.0
    %2353 = vmatprep.subr.mxu0 0.0
    %2354 = vmatpush1.msra.mxu0 0.0
    %2355 = vmatprep.subr.mxu0 0.0
    %2356 = vmatpush1.msra.mxu0 0.0
    %2357 = vmatprep.subr.mxu0 0.0
    %2358 = vmatpush1.msra.mxu0 0.0
    %2359 = vmatprep.subr.mxu0 0.0
    %2360 = vmatpush1.msra.mxu0 0.0
    %2361 = vmatprep.subr.mxu0 0.0
    %2362 = vmatpush1.msra.mxu0 0.0
    %2363 = vmatprep.subr.mxu0 0.0
    %2364 = vmatpush1.msra.mxu0 0.0
    %2365 = vmatprep.subr.mxu0 0.0
    %2366 = vmatpush1.msra.mxu0 0.0
    %2367 = vmatprep.subr.mxu0 0.0
    %2368 = vmatpush1.msra.mxu0 %v1909
    %2369 = vmatprep.subr.mxu0 0.0
    %2370 = vmatpush1.msra.mxu0 %v1908
    %2371 = vmatprep.subr.mxu0 0.0
    %2372 = vmatpush2.msra.mxu0 0.0
    %2373 = vmatprep.subr.mxu0 0.0
    %2374 = vmatpush2.msra.mxu0 0.0
    %2375 = vmatprep.subr.mxu0 0.0
    %2376 = vmatpush2.msra.mxu0 0.0
    %2377 = vmatprep.subr.mxu0 0.0
    %2378 = vmatpush2.msra.mxu0 0.0
    %2379 = vmatprep.subr.mxu0 0.0
    %2380 = vmatpush2.msra.mxu0 0.0
    %2381 = vmatprep.subr.mxu0 0.0
    %2382 = vmatpush2.msra.mxu0 0.0
    %2383 = vmatprep.subr.mxu0 0.0
    %2384 = vmatpush2.msra.mxu0 0.0
    %2385 = vmatprep.subr.mxu0 0.0
    %2386 = vmatpush2.msra.mxu0 0.0
    %2387 = vmatprep.subr.mxu0 0.0
    %2388 = vmatpush2.msra.mxu0 0.0
    %2389 = vmatprep.subr.mxu0 0.0
    %2390 = vmatpush2.msra.mxu0 0.0
    %2391 = vmatprep.subr.mxu0 0.0
    %2392 = vmatpush2.msra.mxu0 0.0
    %2393 = vmatprep.subr.mxu0 0.0
    %2394 = vmatpush2.msra.mxu0 0.0
    %2395 = vmatprep.subr.mxu0 0.0
    %2396 = vmatpush2.msra.mxu0 0.0
    %2397 = vmatprep.subr.mxu0 0.0
    %2398 = vmatpush2.msra.mxu0 0.0
    %2399 = vmatprep.subr.mxu0 0.0
    %2400 = vmatpush2.msra.mxu0 0.0
    %2401 = vmatprep.subr.mxu0 0.0
    %2402 = vmatpush2.msra.mxu0 0.0
    %2403 = vmatprep.mubr.f32.mxu0 0.0
    %2404 = vmatmul.mubr.f32.gmra.mxu0 %v2337
    %v2405 = vpop.f32.mrf.mxu0
    %v2406 = vadd.f32 0.0, %v2405
    %v2407 = vpop.f32.mrf.mxu0
    %2408 = vdwg.mxu0
    %v2410 = vsel %vm1864, %v728, 0
    %2412 = vmatprep.subr.mxu0 0.0
    %2413 = vmatpush1.msra.mxu0 0.0
    %2414 = vmatprep.subr.mxu0 0.0
    %2415 = vmatpush1.msra.mxu0 0.0
    %2416 = vmatprep.subr.mxu0 0.0
    %2417 = vmatpush1.msra.mxu0 0.0
    %2418 = vmatprep.subr.mxu0 0.0
    %2419 = vmatpush1.msra.mxu0 0.0
    %2420 = vmatprep.subr.mxu0 0.0
    %2421 = vmatpush1.msra.mxu0 0.0
    %2422 = vmatprep.subr.mxu0 0.0
    %2423 = vmatpush1.msra.mxu0 0.0
    %2424 = vmatprep.subr.mxu0 0.0
    %2425 = vmatpush1.msra.mxu0 0.0
    %2426 = vmatprep.subr.mxu0 0.0
    %2427 = vmatpush1.msra.mxu0 0.0
    %2428 = vmatprep.subr.mxu0 0.0
    %2429 = vmatpush1.msra.mxu0 0.0
    %2430 = vmatprep.subr.mxu0 0.0
    %2431 = vmatpush1.msra.mxu0 0.0
    %2432 = vmatprep.subr.mxu0 0.0
    %2433 = vmatpush1.msra.mxu0 0.0
    %2434 = vmatprep.subr.mxu0 0.0
    %2435 = vmatpush1.msra.mxu0 0.0
    %2436 = vmatprep.subr.mxu0 0.0
    %2437 = vmatpush1.msra.mxu0 0.0
    %2438 = vmatprep.subr.mxu0 0.0
    %2439 = vmatpush1.msra.mxu0 0.0
    %2440 = vmatprep.subr.mxu0 0.0
    %2441 = vmatpush1.msra.mxu0 %v1907
    %2442 = vmatprep.subr.mxu0 0.0
    %2443 = vmatpush1.msra.mxu0 %v1906
    %2444 = vmatprep.subr.mxu0 0.0
    %2445 = vmatpush2.msra.mxu0 0.0
    %2446 = vmatprep.subr.mxu0 0.0
    %2447 = vmatpush2.msra.mxu0 0.0
    %2448 = vmatprep.subr.mxu0 0.0
    %2449 = vmatpush2.msra.mxu0 0.0
    %2450 = vmatprep.subr.mxu0 0.0
    %2451 = vmatpush2.msra.mxu0 0.0
    %2452 = vmatprep.subr.mxu0 0.0
    %2453 = vmatpush2.msra.mxu0 0.0
    %2454 = vmatprep.subr.mxu0 0.0
    %2455 = vmatpush2.msra.mxu0 0.0
    %2456 = vmatprep.subr.mxu0 0.0
    %2457 = vmatpush2.msra.mxu0 0.0
    %2458 = vmatprep.subr.mxu0 0.0
    %2459 = vmatpush2.msra.mxu0 0.0
    %2460 = vmatprep.subr.mxu0 0.0
    %2461 = vmatpush2.msra.mxu0 0.0
    %2462 = vmatprep.subr.mxu0 0.0
    %2463 = vmatpush2.msra.mxu0 0.0
    %2464 = vmatprep.subr.mxu0 0.0
    %2465 = vmatpush2.msra.mxu0 0.0
    %2466 = vmatprep.subr.mxu0 0.0
    %2467 = vmatpush2.msra.mxu0 0.0
    %2468 = vmatprep.subr.mxu0 0.0
    %2469 = vmatpush2.msra.mxu0 0.0
    %2470 = vmatprep.subr.mxu0 0.0
    %2471 = vmatpush2.msra.mxu0 0.0
    %2472 = vmatprep.subr.mxu0 0.0
    %2473 = vmatpush2.msra.mxu0 0.0
    %2474 = vmatprep.subr.mxu0 0.0
    %2475 = vmatpush2.msra.mxu0 0.0
    %2476 = vmatprep.mubr.f32.mxu0 0.0
    %2477 = vmatmul.mubr.f32.gmra.mxu0 %v2410
    %v2478 = vpop.f32.mrf.mxu0
    %v2479 = vadd.f32 %v2406, %v2478
    %v2480 = vpop.f32.mrf.mxu0
    %2481 = vdwg.mxu0
    %v2483 = vsel %vm1864, %v1765, 0
    %2485 = vmatprep.subr.mxu0 0.0
    %2486 = vmatpush1.msra.mxu0 0.0
    %2487 = vmatprep.subr.mxu0 0.0
    %2488 = vmatpush1.msra.mxu0 0.0
    %2489 = vmatprep.subr.mxu0 0.0
    %2490 = vmatpush1.msra.mxu0 0.0
    %2491 = vmatprep.subr.mxu0 0.0
    %2492 = vmatpush1.msra.mxu0 0.0
    %2493 = vmatprep.subr.mxu0 0.0
    %2494 = vmatpush1.msra.mxu0 0.0
    %2495 = vmatprep.subr.mxu0 0.0
    %2496 = vmatpush1.msra.mxu0 0.0
    %2497 = vmatprep.subr.mxu0 0.0
    %2498 = vmatpush1.msra.mxu0 0.0
    %2499 = vmatprep.subr.mxu0 0.0
    %2500 = vmatpush1.msra.mxu0 0.0
    %2501 = vmatprep.subr.mxu0 0.0
    %2502 = vmatpush1.msra.mxu0 0.0
    %2503 = vmatprep.subr.mxu0 0.0
    %2504 = vmatpush1.msra.mxu0 0.0
    %2505 = vmatprep.subr.mxu0 0.0
    %2506 = vmatpush1.msra.mxu0 0.0
    %2507 = vmatprep.subr.mxu0 0.0
    %2508 = vmatpush1.msra.mxu0 0.0
    %2509 = vmatprep.subr.mxu0 0.0
    %2510 = vmatpush1.msra.mxu0 0.0
    %2511 = vmatprep.subr.mxu0 0.0
    %2512 = vmatpush1.msra.mxu0 0.0
    %2513 = vmatprep.subr.mxu0 0.0
    %2514 = vmatpush1.msra.mxu0 %v1911
    %2515 = vmatprep.subr.mxu0 0.0
    %2516 = vmatpush1.msra.mxu0 %v1910
    %2517 = vmatprep.subr.mxu0 0.0
    %2518 = vmatpush2.msra.mxu0 0.0
    %2519 = vmatprep.subr.mxu0 0.0
    %2520 = vmatpush2.msra.mxu0 0.0
    %2521 = vmatprep.subr.mxu0 0.0
    %2522 = vmatpush2.msra.mxu0 0.0
    %2523 = vmatprep.subr.mxu0 0.0
    %2524 = vmatpush2.msra.mxu0 0.0
    %2525 = vmatprep.subr.mxu0 0.0
    %2526 = vmatpush2.msra.mxu0 0.0
    %2527 = vmatprep.subr.mxu0 0.0
    %2528 = vmatpush2.msra.mxu0 0.0
    %2529 = vmatprep.subr.mxu0 0.0
    %2530 = vmatpush2.msra.mxu0 0.0
    %2531 = vmatprep.subr.mxu0 0.0
    %2532 = vmatpush2.msra.mxu0 0.0
    %2533 = vmatprep.subr.mxu0 0.0
    %2534 = vmatpush2.msra.mxu0 0.0
    %2535 = vmatprep.subr.mxu0 0.0
    %2536 = vmatpush2.msra.mxu0 0.0
    %2537 = vmatprep.subr.mxu0 0.0
    %2538 = vmatpush2.msra.mxu0 0.0
    %2539 = vmatprep.subr.mxu0 0.0
    %2540 = vmatpush2.msra.mxu0 0.0
    %2541 = vmatprep.subr.mxu0 0.0
    %2542 = vmatpush2.msra.mxu0 0.0
    %2543 = vmatprep.subr.mxu0 0.0
    %2544 = vmatpush2.msra.mxu0 0.0
    %2545 = vmatprep.subr.mxu0 0.0
    %2546 = vmatpush2.msra.mxu0 0.0
    %2547 = vmatprep.subr.mxu0 0.0
    %2548 = vmatpush2.msra.mxu0 0.0
    %2549 = vmatprep.mubr.f32.mxu0 0.0
    %2550 = vmatmul.mubr.f32.gmra.mxu0 %v2483
    %v2551 = vpop.f32.mrf.mxu0
    %v2552 = vadd.f32 0.0, %v2551
    %v2553 = vpop.f32.mrf.mxu0
    %2554 = vdwg.mxu0
    %v2555 = vadd.f32 %v2479, %v2552
    %v2556 = vadd.f32 %v2555, %v2143
    %v2557 = vmax.f32 %v2556, 0.0
    %v2559 = vsel %vm1864, %v2557, 0
    %2561 = vmatprep.subr.mxu0 0.0
    %2562 = vmatpush1.msra.mxu0 0.0
    %2563 = vmatprep.subr.mxu0 0.0
    %2564 = vmatpush1.msra.mxu0 0.0
    %2565 = vmatprep.subr.mxu0 0.0
    %2566 = vmatpush1.msra.mxu0 0.0
    %2567 = vmatprep.subr.mxu0 0.0
    %2568 = vmatpush1.msra.mxu0 0.0
    %2569 = vmatprep.subr.mxu0 0.0
    %2570 = vmatpush1.msra.mxu0 0.0
    %2571 = vmatprep.subr.mxu0 0.0
    %2572 = vmatpush1.msra.mxu0 0.0
    %2573 = vmatprep.subr.mxu0 0.0
    %2574 = vmatpush1.msra.mxu0 0.0
    %2575 = vmatprep.subr.mxu0 0.0
    %2576 = vmatpush1.msra.mxu0 0.0
    %2577 = vmatprep.subr.mxu0 0.0
    %2578 = vmatpush1.msra.mxu0 0.0
    %2579 = vmatprep.subr.mxu0 0.0
    %2580 = vmatpush1.msra.mxu0 0.0
    %2581 = vmatprep.subr.mxu0 0.0
    %2582 = vmatpush1.msra.mxu0 0.0
    %2583 = vmatprep.subr.mxu0 0.0
    %2584 = vmatpush1.msra.mxu0 0.0
    %2585 = vmatprep.subr.mxu0 0.0
    %2586 = vmatpush1.msra.mxu0 0.0
    %2587 = vmatprep.subr.mxu0 0.0
    %2588 = vmatpush1.msra.mxu0 0.0
    %2589 = vmatprep.subr.mxu0 0.0
    %2590 = vmatpush1.msra.mxu0 %v1914
    %2591 = vmatprep.subr.mxu0 0.0
    %2592 = vmatpush1.msra.mxu0 %v1913
    %2593 = vmatprep.subr.mxu0 0.0
    %2594 = vmatpush2.msra.mxu0 0.0
    %2595 = vmatprep.subr.mxu0 0.0
    %2596 = vmatpush2.msra.mxu0 0.0
    %2597 = vmatprep.subr.mxu0 0.0
    %2598 = vmatpush2.msra.mxu0 0.0
    %2599 = vmatprep.subr.mxu0 0.0
    %2600 = vmatpush2.msra.mxu0 0.0
    %2601 = vmatprep.subr.mxu0 0.0
    %2602 = vmatpush2.msra.mxu0 0.0
    %2603 = vmatprep.subr.mxu0 0.0
    %2604 = vmatpush2.msra.mxu0 0.0
    %2605 = vmatprep.subr.mxu0 0.0
    %2606 = vmatpush2.msra.mxu0 0.0
    %2607 = vmatprep.subr.mxu0 0.0
    %2608 = vmatpush2.msra.mxu0 0.0
    %2609 = vmatprep.subr.mxu0 0.0
    %2610 = vmatpush2.msra.mxu0 0.0
    %2611 = vmatprep.subr.mxu0 0.0
    %2612 = vmatpush2.msra.mxu0 0.0
    %2613 = vmatprep.subr.mxu0 0.0
    %2614 = vmatpush2.msra.mxu0 0.0
    %2615 = vmatprep.subr.mxu0 0.0
    %2616 = vmatpush2.msra.mxu0 0.0
    %2617 = vmatprep.subr.mxu0 0.0
    %2618 = vmatpush2.msra.mxu0 0.0
    %2619 = vmatprep.subr.mxu0 0.0
    %2620 = vmatpush2.msra.mxu0 0.0
    %2621 = vmatprep.subr.mxu0 0.0
    %2622 = vmatpush2.msra.mxu0 0.0
    %2623 = vmatprep.subr.mxu0 0.0
    %2624 = vmatpush2.msra.mxu0 0.0
    %2625 = vmatprep.mubr.f32.mxu0 0.0
    %2626 = vmatmul.mubr.f32.gmra.mxu0 %v2559
    %v2627 = vpop.f32.mrf.mxu0
    %v2628 = vadd.f32 %v2151, %v2627
    %v2629 = vpop.f32.mrf.mxu0
    %2630 = vdwg.mxu0
    %v2631 = vmax.f32 %v2628, 0.0
    %v2633 = vsel %vm1864, %v2631, 0
    %2635 = vmatprep.subr.mxu0 0.0
    %2636 = vmatpush1.msra.mxu0 0.0
    %2637 = vmatprep.subr.mxu0 0.0
    %2638 = vmatpush1.msra.mxu0 0.0
    %2639 = vmatprep.subr.mxu0 0.0
    %2640 = vmatpush1.msra.mxu0 0.0
    %2641 = vmatprep.subr.mxu0 0.0
    %2642 = vmatpush1.msra.mxu0 0.0
    %2643 = vmatprep.subr.mxu0 0.0
    %2644 = vmatpush1.msra.mxu0 0.0
    %2645 = vmatprep.subr.mxu0 0.0
    %2646 = vmatpush1.msra.mxu0 0.0
    %2647 = vmatprep.subr.mxu0 0.0
    %2648 = vmatpush1.msra.mxu0 0.0
    %2649 = vmatprep.subr.mxu0 0.0
    %2650 = vmatpush1.msra.mxu0 0.0
    %2651 = vmatprep.subr.mxu0 0.0
    %2652 = vmatpush1.msra.mxu0 0.0
    %2653 = vmatprep.subr.mxu0 0.0
    %2654 = vmatpush1.msra.mxu0 0.0
    %2655 = vmatprep.subr.mxu0 0.0
    %2656 = vmatpush1.msra.mxu0 0.0
    %2657 = vmatprep.subr.mxu0 0.0
    %2658 = vmatpush1.msra.mxu0 0.0
    %2659 = vmatprep.subr.mxu0 0.0
    %2660 = vmatpush1.msra.mxu0 0.0
    %2661 = vmatprep.subr.mxu0 0.0
    %2662 = vmatpush1.msra.mxu0 0.0
    %2663 = vmatprep.subr.mxu0 0.0
    %2664 = vmatpush1.msra.mxu0 %v1917
    %2665 = vmatprep.subr.mxu0 0.0
    %2666 = vmatpush1.msra.mxu0 %v1916
    %2667 = vmatprep.subr.mxu0 0.0
    %2668 = vmatpush2.msra.mxu0 0.0
    %2669 = vmatprep.subr.mxu0 0.0
    %2670 = vmatpush2.msra.mxu0 0.0
    %2671 = vmatprep.subr.mxu0 0.0
    %2672 = vmatpush2.msra.mxu0 0.0
    %2673 = vmatprep.subr.mxu0 0.0
    %2674 = vmatpush2.msra.mxu0 0.0
    %2675 = vmatprep.subr.mxu0 0.0
    %2676 = vmatpush2.msra.mxu0 0.0
    %2677 = vmatprep.subr.mxu0 0.0
    %2678 = vmatpush2.msra.mxu0 0.0
    %2679 = vmatprep.subr.mxu0 0.0
    %2680 = vmatpush2.msra.mxu0 0.0
    %2681 = vmatprep.subr.mxu0 0.0
    %2682 = vmatpush2.msra.mxu0 0.0
    %2683 = vmatprep.subr.mxu0 0.0
    %2684 = vmatpush2.msra.mxu0 0.0
    %2685 = vmatprep.subr.mxu0 0.0
    %2686 = vmatpush2.msra.mxu0 0.0
    %2687 = vmatprep.subr.mxu0 0.0
    %2688 = vmatpush2.msra.mxu0 0.0
    %2689 = vmatprep.subr.mxu0 0.0
    %2690 = vmatpush2.msra.mxu0 0.0
    %2691 = vmatprep.subr.mxu0 0.0
    %2692 = vmatpush2.msra.mxu0 0.0
    %2693 = vmatprep.subr.mxu0 0.0
    %2694 = vmatpush2.msra.mxu0 0.0
    %2695 = vmatprep.subr.mxu0 0.0
    %2696 = vmatpush2.msra.mxu0 0.0
    %2697 = vmatprep.subr.mxu0 0.0
    %2698 = vmatpush2.msra.mxu0 0.0
    %2699 = vmatprep.mubr.f32.mxu0 0.0
    %2700 = vmatmul.mubr.f32.gmra.mxu0 %v2633
    %v2701 = vpop.f32.mrf.mxu0
    %v2702 = vadd.f32 %v2231, %v2701
    %v2703 = vpop.f32.mrf.mxu0
    %2704 = vdwg.mxu0
    %v2705 = vsel %vm2306, %v2702, -inf
    %2706 = vmax.xlane.f32.xlu0 %v2705
    %v2707 = vpop.xlane.xlu0 %2706
    %v2708 = vsub.f32 %v2702, %v2707
    %v2709 = vmul.f32 %v2708, 1.442695
    %v2710 = vpow.pop %v2709
    %v2711 = vsel %vm2306, %v2710, 0.0
    %2712 = vadd.xlane.f32.xlu0 %v2711
    %v2713 = vpop.xlane.xlu0 %2712
    %v2714 = vrcp.pop %v2713
    %v2715 = vmul.f32 %v2710, %v2714
    %2717 = vset.pattern.permute.xlu0 0
    %2718 = vperm.xlu0 %2717, %v2715
    %v2719 = vpop.permute.xlu0 %2718
    %v2721 = vmul.f32 %v2719, %v728
    %2722 = vset.pattern.permute.xlu0 1
    %2723 = vperm.xlu0 %2722, %v2715
    %v2724 = vpop.permute.xlu0 %2723
    %v2726 = vmul.f32 %v2724, %v1542
    %v2727 = vadd.f32 %v2721, %v2726
    %2728 = vset.pattern.permute.xlu0 2
    %2729 = vperm.xlu0 %2728, %v2715
    %v2730 = vpop.permute.xlu0 %2729
    %v2732 = vmul.f32 %v2730, %v1765
    %v2733 = vadd.f32 %v2727, %v2732
    %2734 = vst.msk [vmem:[#allocation4] sm:$0x3] %vm1874, %v2335
    %2735 = vst.msk [vmem:[#allocation6] sm:$0x3] %vm1874, %v2733
    %v2736 = vld [vmem:[%s65] sm:$0xff]
    %v2737 = vld [vmem:[%s65 + $0x8] sm:$0xff]
    %v2738 = vld [vmem:[%s67] sm:$0x1]
    %v2740 = vlaneseq
    %v2741 = vshrl.u32 %v2740, 7
    %v2742 = vsub.s32 0, %v2741
    %v2743 = vrot.slane %v2738, %v2742
    %v2746 = vsel %vm1864, %v2335, 0
    %2748 = vmatprep.subr.mxu0 0.0
    %2749 = vmatpush1.msra.mxu0 0.0
    %2750 = vmatprep.subr.mxu0 0.0
    %2751 = vmatpush1.msra.mxu0 0.0
    %2752 = vmatprep.subr.mxu0 0.0
    %2753 = vmatpush1.msra.mxu0 0.0
    %2754 = vmatprep.subr.mxu0 0.0
    %2755 = vmatpush1.msra.mxu0 0.0
    %2756 = vmatprep.subr.mxu0 0.0
    %2757 = vmatpush1.msra.mxu0 0.0
    %2758 = vmatprep.subr.mxu0 0.0
    %2759 = vmatpush1.msra.mxu0 0.0
    %2760 = vmatprep.subr.mxu0 0.0
    %2761 = vmatpush1.msra.mxu0 0.0
    %2762 = vmatprep.subr.mxu0 0.0
    %2763 = vmatpush1.msra.mxu0 0.0
    %2764 = vmatprep.subr.mxu0 0.0
    %2765 = vmatpush1.msra.mxu0 0.0
    %2766 = vmatprep.subr.mxu0 0.0
    %2767 = vmatpush1.msra.mxu0 0.0
    %2768 = vmatprep.subr.mxu0 0.0
    %2769 = vmatpush1.msra.mxu0 0.0
    %2770 = vmatprep.subr.mxu0 0.0
    %2771 = vmatpush1.msra.mxu0 0.0
    %2772 = vmatprep.subr.mxu0 0.0
    %2773 = vmatpush1.msra.mxu0 0.0
    %2774 = vmatprep.subr.mxu0 0.0
    %2775 = vmatpush1.msra.mxu0 0.0
    %2776 = vmatprep.subr.mxu0 0.0
    %2777 = vmatpush1.msra.mxu0 %v2737
    %2778 = vmatprep.subr.mxu0 0.0
    %2779 = vmatpush1.msra.mxu0 %v2736
    %2780 = vmatprep.subr.mxu0 0.0
    %2781 = vmatpush2.msra.mxu0 0.0
    %2782 = vmatprep.subr.mxu0 0.0
    %2783 = vmatpush2.msra.mxu0 0.0
    %2784 = vmatprep.subr.mxu0 0.0
    %2785 = vmatpush2.msra.mxu0 0.0
    %2786 = vmatprep.subr.mxu0 0.0
    %2787 = vmatpush2.msra.mxu0 0.0
    %2788 = vmatprep.subr.mxu0 0.0
    %2789 = vmatpush2.msra.mxu0 0.0
    %2790 = vmatprep.subr.mxu0 0.0
    %2791 = vmatpush2.msra.mxu0 0.0
    %2792 = vmatprep.subr.mxu0 0.0
    %2793 = vmatpush2.msra.mxu0 0.0
    %2794 = vmatprep.subr.mxu0 0.0
    %2795 = vmatpush2.msra.mxu0 0.0
    %2796 = vmatprep.subr.mxu0 0.0
    %2797 = vmatpush2.msra.mxu0 0.0
    %2798 = vmatprep.subr.mxu0 0.0
    %2799 = vmatpush2.msra.mxu0 0.0
    %2800 = vmatprep.subr.mxu0 0.0
    %2801 = vmatpush2.msra.mxu0 0.0
    %2802 = vmatprep.subr.mxu0 0.0
    %2803 = vmatpush2.msra.mxu0 0.0
    %2804 = vmatprep.subr.mxu0 0.0
    %2805 = vmatpush2.msra.mxu0 0.0
    %2806 = vmatprep.subr.mxu0 0.0
    %2807 = vmatpush2.msra.mxu0 0.0
    %2808 = vmatprep.subr.mxu0 0.0
    %2809 = vmatpush2.msra.mxu0 0.0
    %2810 = vmatprep.subr.mxu0 0.0
    %2811 = vmatpush2.msra.mxu0 0.0
    %2812 = vmatprep.mubr.f32.mxu0 0.0
    %2813 = vmatmul.mubr.f32.gmra.mxu0 %v2746
    %v2814 = vpop.f32.mrf.mxu0
    %v2815 = vadd.f32 %v2743, %v2814
    %v2816 = vpop.f32.mrf.mxu0
    %2817 = vdwg.mxu0
    %v2818 = vmax.f32 %v2815, 0.0
    %v2819 = vld [vmem:[%s69] sm:$0xff]
    %v2820 = vld [vmem:[%s69 + $0x8] sm:$0xff]
    %v2821 = vld [vmem:[%s69 + $0x10] sm:$0xff]
    %v2822 = vld [vmem:[%s69 + $0x18] sm:$0xff]
    %v2823 = vld [vmem:[%s71] sm:$0x1]
    %v2825 = vlaneseq
    %v2826 = vshrl.u32 %v2825, 7
    %v2827 = vsub.s32 0, %v2826
    %v2828 = vrot.slane %v2823, %v2827
    %v2831 = vsel %vm572, %v2818, 0
    %2833 = vmatprep.subr.mxu0 0.0
    %2834 = vmatpush1.msra.mxu0 0.0
    %2835 = vmatprep.subr.mxu0 0.0
    %2836 = vmatpush1.msra.mxu0 0.0
    %2837 = vmatprep.subr.mxu0 0.0
    %2838 = vmatpush1.msra.mxu0 0.0
    %2839 = vmatprep.subr.mxu0 0.0
    %2840 = vmatpush1.msra.mxu0 0.0
    %2841 = vmatprep.subr.mxu0 0.0
    %2842 = vmatpush1.msra.mxu0 0.0
    %2843 = vmatprep.subr.mxu0 0.0
    %2844 = vmatpush1.msra.mxu0 0.0
    %2845 = vmatprep.subr.mxu0 0.0
    %2846 = vmatpush1.msra.mxu0 0.0
    %2847 = vmatprep.subr.mxu0 0.0
    %2848 = vmatpush1.msra.mxu0 0.0
    %2849 = vmatprep.subr.mxu0 0.0
    %2850 = vmatpush1.msra.mxu0 0.0
    %2851 = vmatprep.subr.mxu0 0.0
    %2852 = vmatpush1.msra.mxu0 0.0
    %2853 = vmatprep.subr.mxu0 0.0
    %2854 = vmatpush1.msra.mxu0 0.0
    %2855 = vmatprep.subr.mxu0 0.0
    %2856 = vmatpush1.msra.mxu0 0.0
    %2857 = vmatprep.subr.mxu0 0.0
    %2858 = vmatpush1.msra.mxu0 %v2822
    %2859 = vmatprep.subr.mxu0 0.0
    %2860 = vmatpush1.msra.mxu0 %v2821
    %2861 = vmatprep.subr.mxu0 0.0
    %2862 = vmatpush1.msra.mxu0 %v2820
    %2863 = vmatprep.subr.mxu0 0.0
    %2864 = vmatpush1.msra.mxu0 %v2819
    %2865 = vmatprep.subr.mxu0 0.0
    %2866 = vmatpush2.msra.mxu0 0.0
    %2867 = vmatprep.subr.mxu0 0.0
    %2868 = vmatpush2.msra.mxu0 0.0
    %2869 = vmatprep.subr.mxu0 0.0
    %2870 = vmatpush2.msra.mxu0 0.0
    %2871 = vmatprep.subr.mxu0 0.0
    %2872 = vmatpush2.msra.mxu0 0.0
    %2873 = vmatprep.subr.mxu0 0.0
    %2874 = vmatpush2.msra.mxu0 0.0
    %2875 = vmatprep.subr.mxu0 0.0
    %2876 = vmatpush2.msra.mxu0 0.0
    %2877 = vmatprep.subr.mxu0 0.0
    %2878 = vmatpush2.msra.mxu0 0.0
    %2879 = vmatprep.subr.mxu0 0.0
    %2880 = vmatpush2.msra.mxu0 0.0
    %2881 = vmatprep.subr.mxu0 0.0
    %2882 = vmatpush2.msra.mxu0 0.0
    %2883 = vmatprep.subr.mxu0 0.0
    %2884 = vmatpush2.msra.mxu0 0.0
    %2885 = vmatprep.subr.mxu0 0.0
    %2886 = vmatpush2.msra.mxu0 0.0
    %2887 = vmatprep.subr.mxu0 0.0
    %2888 = vmatpush2.msra.mxu0 0.0
    %2889 = vmatprep.subr.mxu0 0.0
    %2890 = vmatpush2.msra.mxu0 0.0
    %2891 = vmatprep.subr.mxu0 0.0
    %2892 = vmatpush2.msra.mxu0 0.0
    %2893 = vmatprep.subr.mxu0 0.0
    %2894 = vmatpush2.msra.mxu0 0.0
    %2895 = vmatprep.subr.mxu0 0.0
    %2896 = vmatpush2.msra.mxu0 0.0
    %2897 = vmatprep.mubr.f32.mxu0 0.0
    %2898 = vmatmul.mubr.f32.gmra.mxu0 %v2831
    %v2899 = vpop.f32.mrf.mxu0
    %v2900 = vadd.f32 %v2828, %v2899
    %v2901 = vpop.f32.mrf.mxu0
    %2902 = vdwg.mxu0
    %v2903 = vmax.f32 %v2900, 0.0
    %v2904 = vld [vmem:[%s73] sm:$0xff]
    %v2905 = vld [vmem:[%s73 + $0x8] sm:$0xff]
    %v2906 = vld [vmem:[%s73 + $0x10] sm:$0xff]
    %v2907 = vld [vmem:[%s73 + $0x18] sm:$0xff]
    %v2908 = vld [vmem:[%s73 + $0x20] sm:$0xff]
    %v2909 = vld [vmem:[%s73 + $0x28] sm:$0xff]
    %v2910 = vld [vmem:[%s73 + $0x30] sm:$0xff]
    %v2911 = vld [vmem:[%s73 + $0x38] sm:$0xff]
    %v2912 = vld [vmem:[%s73 + $0x40] sm:$0xff]
    %v2913 = vld [vmem:[%s73 + $0x48] sm:$0xff]
    %v2914 = vld [vmem:[%s73 + $0x50] sm:$0xff]
    %v2915 = vld [vmem:[%s73 + $0x58] sm:$0xff]
    %v2916 = vld [vmem:[%s75] sm:$0x7]
    %v2918 = vlaneseq
    %v2919 = vshrl.u32 %v2918, 7
    %v2920 = vsub.s32 0, %v2919
    %v2921 = vrot.slane %v2916, %v2920
    %v2922 = vlaneseq
    %v2923 = vshrl.u32 %v2922, 7
    %v2924 = vsub.s32 1, %v2923
    %v2925 = vrot.slane %v2916, %v2924
    %v2926 = vlaneseq
    %v2927 = vshrl.u32 %v2926, 7
    %v2928 = vsub.s32 2, %v2927
    %v2929 = vrot.slane %v2916, %v2928
    %v2934 = vsel %vm572, %v2903, 0
    %2936 = vmatprep.subr.mxu0 0.0
    %2937 = vmatpush1.msra.mxu0 0.0
    %2938 = vmatprep.subr.mxu0 0.0
    %2939 = vmatpush1.msra.mxu0 0.0
    %2940 = vmatprep.subr.mxu0 0.0
    %2941 = vmatpush1.msra.mxu0 0.0
    %2942 = vmatprep.subr.mxu0 0.0
    %2943 = vmatpush1.msra.mxu0 0.0
    %2944 = vmatprep.subr.mxu0 0.0
    %2945 = vmatpush1.msra.mxu0 0.0
    %2946 = vmatprep.subr.mxu0 0.0
    %2947 = vmatpush1.msra.mxu0 0.0
    %2948 = vmatprep.subr.mxu0 0.0
    %2949 = vmatpush1.msra.mxu0 0.0
    %2950 = vmatprep.subr.mxu0 0.0
    %2951 = vmatpush1.msra.mxu0 0.0
    %2952 = vmatprep.subr.mxu0 0.0
    %2953 = vmatpush1.msra.mxu0 0.0
    %2954 = vmatprep.subr.mxu0 0.0
    %2955 = vmatpush1.msra.mxu0 0.0
    %2956 = vmatprep.subr.mxu0 0.0
    %2957 = vmatpush1.msra.mxu0 0.0
    %2958 = vmatprep.subr.mxu0 0.0
    %2959 = vmatpush1.msra.mxu0 0.0
    %2960 = vmatprep.subr.mxu0 %v2914
    %2961 = vmatpush1.msra.mxu0 %v2913
    %2962 = vmatprep.subr.mxu0 %v2911
    %2963 = vmatpush1.msra.mxu0 %v2910
    %2964 = vmatprep.subr.mxu0 %v2908
    %2965 = vmatpush1.msra.mxu0 %v2907
    %2966 = vmatprep.subr.mxu0 %v2905
    %2967 = vmatpush1.msra.mxu0 %v2904
    %2968 = vmatprep.subr.mxu0 0.0
    %2969 = vmatpush2.msra.mxu0 0.0
    %2970 = vmatprep.subr.mxu0 0.0
    %2971 = vmatpush2.msra.mxu0 0.0
    %2972 = vmatprep.subr.mxu0 0.0
    %2973 = vmatpush2.msra.mxu0 0.0
    %2974 = vmatprep.subr.mxu0 0.0
    %2975 = vmatpush2.msra.mxu0 0.0
    %2976 = vmatprep.subr.mxu0 0.0
    %2977 = vmatpush2.msra.mxu0 0.0
    %2978 = vmatprep.subr.mxu0 0.0
    %2979 = vmatpush2.msra.mxu0 0.0
    %2980 = vmatprep.subr.mxu0 0.0
    %2981 = vmatpush2.msra.mxu0 0.0
    %2982 = vmatprep.subr.mxu0 0.0
    %2983 = vmatpush2.msra.mxu0 0.0
    %2984 = vmatprep.subr.mxu0 0.0
    %2985 = vmatpush2.msra.mxu0 0.0
    %2986 = vmatprep.subr.mxu0 0.0
    %2987 = vmatpush2.msra.mxu0 0.0
    %2988 = vmatprep.subr.mxu0 0.0
    %2989 = vmatpush2.msra.mxu0 0.0
    %2990 = vmatprep.subr.mxu0 0.0
    %2991 = vmatpush2.msra.mxu0 0.0
    %2992 = vmatprep.subr.mxu0 0.0
    %2993 = vmatpush2.msra.mxu0 0.0
    %2994 = vmatprep.subr.mxu0 0.0
    %2995 = vmatpush2.msra.mxu0 0.0
    %2996 = vmatprep.subr.mxu0 0.0
    %2997 = vmatpush2.msra.mxu0 0.0
    %2998 = vmatprep.subr.mxu0 0.0
    %2999 = vmatpush2.msra.mxu0 0.0
    %3000 = vmatprep.mubr.f32.mxu0 0.0
    %3001 = vmatmul.mubr.f32.gmra.mxu0 %v2934
    %v3002 = vpop.f32.mrf.mxu0
    %v3003 = vadd.f32 %v2921, %v3002
    %v3004 = vpop.f32.mrf.mxu0
    %v3005 = vadd.f32 %v2925, %v3004
    %3006 = vdwg.mxu0
    %3007 = vmatprep.subr.mxu0 0.0
    %3008 = vmatpush1.msra.mxu0 0.0
    %3009 = vmatprep.subr.mxu0 0.0
    %3010 = vmatpush1.msra.mxu0 0.0
    %3011 = vmatprep.subr.mxu0 0.0
    %3012 = vmatpush1.msra.mxu0 0.0
    %3013 = vmatprep.subr.mxu0 0.0
    %3014 = vmatpush1.msra.mxu0 0.0
    %3015 = vmatprep.subr.mxu0 0.0
    %3016 = vmatpush1.msra.mxu0 0.0
    %3017 = vmatprep.subr.mxu0 0.0
    %3018 = vmatpush1.msra.mxu0 0.0
    %3019 = vmatprep.subr.mxu0 0.0
    %3020 = vmatpush1.msra.mxu0 0.0
    %3021 = vmatprep.subr.mxu0 0.0
    %3022 = vmatpush1.msra.mxu0 0.0
    %3023 = vmatprep.subr.mxu0 0.0
    %3024 = vmatpush1.msra.mxu0 0.0
    %3025 = vmatprep.subr.mxu0 0.0
    %3026 = vmatpush1.msra.mxu0 0.0
    %3027 = vmatprep.subr.mxu0 0.0
    %3028 = vmatpush1.msra.mxu0 0.0
    %3029 = vmatprep.subr.mxu0 0.0
    %3030 = vmatpush1.msra.mxu0 0.0
    %3031 = vmatprep.subr.mxu0 0.0
    %3032 = vmatpush1.msra.mxu0 %v2915
    %3033 = vmatprep.subr.mxu0 0.0
    %3034 = vmatpush1.msra.mxu0 %v2912
    %3035 = vmatprep.subr.mxu0 0.0
    %3036 = vmatpush1.msra.mxu0 %v2909
    %3037 = vmatprep.subr.mxu0 0.0
    %3038 = vmatpush1.msra.mxu0 %v2906
    %3039 = vmatprep.subr.mxu0 0.0
    %3040 = vmatpush2.msra.mxu0 0.0
    %3041 = vmatprep.subr.mxu0 0.0
    %3042 = vmatpush2.msra.mxu0 0.0
    %3043 = vmatprep.subr.mxu0 0.0
    %3044 = vmatpush2.msra.mxu0 0.0
    %3045 = vmatprep.subr.mxu0 0.0
    %3046 = vmatpush2.msra.mxu0 0.0
    %3047 = vmatprep.subr.mxu0 0.0
    %3048 = vmatpush2.msra.mxu0 0.0
    %3049 = vmatprep.subr.mxu0 0.0
    %3050 = vmatpush2.msra.mxu0 0.0
    %3051 = vmatprep.subr.mxu0 0.0
    %3052 = vmatpush2.msra.mxu0 0.0
    %3053 = vmatprep.subr.mxu0 0.0
    %3054 = vmatpush2.msra.mxu0 0.0
    %3055 = vmatprep.subr.mxu0 0.0
    %3056 = vmatpush2.msra.mxu0 0.0
    %3057 = vmatprep.subr.mxu0 0.0
    %3058 = vmatpush2.msra.mxu0 0.0
    %3059 = vmatprep.subr.mxu0 0.0
    %3060 = vmatpush2.msra.mxu0 0.0
    %3061 = vmatprep.subr.mxu0 0.0
    %3062 = vmatpush2.msra.mxu0 0.0
    %3063 = vmatprep.subr.mxu0 0.0
    %3064 = vmatpush2.msra.mxu0 0.0
    %3065 = vmatprep.subr.mxu0 0.0
    %3066 = vmatpush2.msra.mxu0 0.0
    %3067 = vmatprep.subr.mxu0 0.0
    %3068 = vmatpush2.msra.mxu0 0.0
    %3069 = vmatprep.subr.mxu0 0.0
    %3070 = vmatpush2.msra.mxu0 0.0
    %3071 = vmatprep.mubr.f32.mxu0 0.0
    %3072 = vmatmul.mubr.f32.gmra.mxu0 %v2934
    %v3073 = vpop.f32.mrf.mxu0
    %v3074 = vadd.f32 %v2929, %v3073
    %v3075 = vpop.f32.mrf.mxu0
    %3076 = vdwg.mxu0
    %v3080 = vcombine.low %v3003, %v3005
    %v3082 = vunpack.c.l.s4 1983009808
    %v3083 = vunpack.c.0.s8 %v3082
    %v3084 = vlaneseq
    %v3085 = vshrl.u32 %v3084, 7
    %v3086 = vsub.s32 %v3083, %v3085
    %v3087 = vrot.slane %v3080, %v3086
    %v3089 = vunpack.c.l.s4 1983009808
    %v3090 = vunpack.c.0.s8 %v3089
    %v3091 = vlaneseq
    %v3092 = vshrl.u32 %v3091, 7
    %v3093 = vsub.s32 %v3090, %v3092
    %v3094 = vrot.slane %v3074, %v3093
    %v3095 = vcombine.low %v3087, %v3094
    %vm3097 = vcmask 1041408
    %vm3098 = vcmask 1043458
    %vm3099 = vmor %vm3098, %vm3097
    %vm3100 = vcmask 979972
    %vm3101 = vmor %vm3100, %vm3099
    %3102 = vst.msk [vmem:[%s101] sm:$0x3f] %vm3101, %v3095
    %v3103 = vld [vmem:[%s77] sm:$0xff]
    %v3104 = vld [vmem:[%s77 + $0x8] sm:$0xff]
    %v3105 = vld [vmem:[%s79] sm:$0x1]
    %v3107 = vlaneseq
    %v3108 = vshrl.u32 %v3107, 7
    %v3109 = vsub.s32 0, %v3108
    %v3110 = vrot.slane %v3105, %v3109
    %3112 = vmatprep.subr.mxu0 0.0
    %3113 = vmatpush1.msra.mxu0 0.0
    %3114 = vmatprep.subr.mxu0 0.0
    %3115 = vmatpush1.msra.mxu0 0.0
    %3116 = vmatprep.subr.mxu0 0.0
    %3117 = vmatpush1.msra.mxu0 0.0
    %3118 = vmatprep.subr.mxu0 0.0
    %3119 = vmatpush1.msra.mxu0 0.0
    %3120 = vmatprep.subr.mxu0 0.0
    %3121 = vmatpush1.msra.mxu0 0.0
    %3122 = vmatprep.subr.mxu0 0.0
    %3123 = vmatpush1.msra.mxu0 0.0
    %3124 = vmatprep.subr.mxu0 0.0
    %3125 = vmatpush1.msra.mxu0 0.0
    %3126 = vmatprep.subr.mxu0 0.0
    %3127 = vmatpush1.msra.mxu0 0.0
    %3128 = vmatprep.subr.mxu0 0.0
    %3129 = vmatpush1.msra.mxu0 0.0
    %3130 = vmatprep.subr.mxu0 0.0
    %3131 = vmatpush1.msra.mxu0 0.0
    %3132 = vmatprep.subr.mxu0 0.0
    %3133 = vmatpush1.msra.mxu0 0.0
    %3134 = vmatprep.subr.mxu0 0.0
    %3135 = vmatpush1.msra.mxu0 0.0
    %3136 = vmatprep.subr.mxu0 0.0
    %3137 = vmatpush1.msra.mxu0 0.0
    %3138 = vmatprep.subr.mxu0 0.0
    %3139 = vmatpush1.msra.mxu0 0.0
    %3140 = vmatprep.subr.mxu0 0.0
    %3141 = vmatpush1.msra.mxu0 %v3104
    %3142 = vmatprep.subr.mxu0 0.0
    %3143 = vmatpush1.msra.mxu0 %v3103
    %3144 = vmatprep.subr.mxu0 0.0
    %3145 = vmatpush2.msra.mxu0 0.0
    %3146 = vmatprep.subr.mxu0 0.0
    %3147 = vmatpush2.msra.mxu0 0.0
    %3148 = vmatprep.subr.mxu0 0.0
    %3149 = vmatpush2.msra.mxu0 0.0
    %3150 = vmatprep.subr.mxu0 0.0
    %3151 = vmatpush2.msra.mxu0 0.0
    %3152 = vmatprep.subr.mxu0 0.0
    %3153 = vmatpush2.msra.mxu0 0.0
    %3154 = vmatprep.subr.mxu0 0.0
    %3155 = vmatpush2.msra.mxu0 0.0
    %3156 = vmatprep.subr.mxu0 0.0
    %3157 = vmatpush2.msra.mxu0 0.0
    %3158 = vmatprep.subr.mxu0 0.0
    %3159 = vmatpush2.msra.mxu0 0.0
    %3160 = vmatprep.subr.mxu0 0.0
    %3161 = vmatpush2.msra.mxu0 0.0
    %3162 = vmatprep.subr.mxu0 0.0
    %3163 = vmatpush2.msra.mxu0 0.0
    %3164 = vmatprep.subr.mxu0 0.0
    %3165 = vmatpush2.msra.mxu0 0.0
    %3166 = vmatprep.subr.mxu0 0.0
    %3167 = vmatpush2.msra.mxu0 0.0
    %3168 = vmatprep.subr.mxu0 0.0
    %3169 = vmatpush2.msra.mxu0 0.0
    %3170 = vmatprep.subr.mxu0 0.0
    %3171 = vmatpush2.msra.mxu0 0.0
    %3172 = vmatprep.subr.mxu0 0.0
    %3173 = vmatpush2.msra.mxu0 0.0
    %3174 = vmatprep.subr.mxu0 0.0
    %3175 = vmatpush2.msra.mxu0 0.0
    %3176 = vmatprep.mubr.f32.mxu0 0.0
    %3177 = vmatmul.mubr.f32.gmra.mxu0 %v2746
    %v3178 = vpop.f32.mrf.mxu0
    %v3179 = vadd.f32 %v3110, %v3178
    %v3180 = vpop.f32.mrf.mxu0
    %3181 = vdwg.mxu0
    %v3182 = vmax.f32 %v3179, 0.0
    %v3183 = vld [vmem:[%s81] sm:$0xff]
    %v3184 = vld [vmem:[%s81 + $0x8] sm:$0xff]
    %v3185 = vld [vmem:[%s81 + $0x10] sm:$0xff]
    %v3186 = vld [vmem:[%s81 + $0x18] sm:$0xff]
    %v3187 = vld [vmem:[%s83] sm:$0x1]
    %v3189 = vlaneseq
    %v3190 = vshrl.u32 %v3189, 7
    %v3191 = vsub.s32 0, %v3190
    %v3192 = vrot.slane %v3187, %v3191
    %v3195 = vsel %vm572, %v3182, 0
    %3197 = vmatprep.subr.mxu0 0.0
    %3198 = vmatpush1.msra.mxu0 0.0
    %3199 = vmatprep.subr.mxu0 0.0
    %3200 = vmatpush1.msra.mxu0 0.0
    %3201 = vmatprep.subr.mxu0 0.0
    %3202 = vmatpush1.msra.mxu0 0.0
    %3203 = vmatprep.subr.mxu0 0.0
    %3204 = vmatpush1.msra.mxu0 0.0
    %3205 = vmatprep.subr.mxu0 0.0
    %3206 = vmatpush1.msra.mxu0 0.0
    %3207 = vmatprep.subr.mxu0 0.0
    %3208 = vmatpush1.msra.mxu0 0.0
    %3209 = vmatprep.subr.mxu0 0.0
    %3210 = vmatpush1.msra.mxu0 0.0
    %3211 = vmatprep.subr.mxu0 0.0
    %3212 = vmatpush1.msra.mxu0 0.0
    %3213 = vmatprep.subr.mxu0 0.0
    %3214 = vmatpush1.msra.mxu0 0.0
    %3215 = vmatprep.subr.mxu0 0.0
    %3216 = vmatpush1.msra.mxu0 0.0
    %3217 = vmatprep.subr.mxu0 0.0
    %3218 = vmatpush1.msra.mxu0 0.0
    %3219 = vmatprep.subr.mxu0 0.0
    %3220 = vmatpush1.msra.mxu0 0.0
    %3221 = vmatprep.subr.mxu0 0.0
    %3222 = vmatpush1.msra.mxu0 %v3186
    %3223 = vmatprep.subr.mxu0 0.0
    %3224 = vmatpush1.msra.mxu0 %v3185
    %3225 = vmatprep.subr.mxu0 0.0
    %3226 = vmatpush1.msra.mxu0 %v3184
    %3227 = vmatprep.subr.mxu0 0.0
    %3228 = vmatpush1.msra.mxu0 %v3183
    %3229 = vmatprep.subr.mxu0 0.0
    %3230 = vmatpush2.msra.mxu0 0.0
    %3231 = vmatprep.subr.mxu0 0.0
    %3232 = vmatpush2.msra.mxu0 0.0
    %3233 = vmatprep.subr.mxu0 0.0
    %3234 = vmatpush2.msra.mxu0 0.0
    %3235 = vmatprep.subr.mxu0 0.0
    %3236 = vmatpush2.msra.mxu0 0.0
    %3237 = vmatprep.subr.mxu0 0.0
    %3238 = vmatpush2.msra.mxu0 0.0
    %3239 = vmatprep.subr.mxu0 0.0
    %3240 = vmatpush2.msra.mxu0 0.0
    %3241 = vmatprep.subr.mxu0 0.0
    %3242 = vmatpush2.msra.mxu0 0.0
    %3243 = vmatprep.subr.mxu0 0.0
    %3244 = vmatpush2.msra.mxu0 0.0
    %3245 = vmatprep.subr.mxu0 0.0
    %3246 = vmatpush2.msra.mxu0 0.0
    %3247 = vmatprep.subr.mxu0 0.0
    %3248 = vmatpush2.msra.mxu0 0.0
    %3249 = vmatprep.subr.mxu0 0.0
    %3250 = vmatpush2.msra.mxu0 0.0
    %3251 = vmatprep.subr.mxu0 0.0
    %3252 = vmatpush2.msra.mxu0 0.0
    %3253 = vmatprep.subr.mxu0 0.0
    %3254 = vmatpush2.msra.mxu0 0.0
    %3255 = vmatprep.subr.mxu0 0.0
    %3256 = vmatpush2.msra.mxu0 0.0
    %3257 = vmatprep.subr.mxu0 0.0
    %3258 = vmatpush2.msra.mxu0 0.0
    %3259 = vmatprep.subr.mxu0 0.0
    %3260 = vmatpush2.msra.mxu0 0.0
    %3261 = vmatprep.mubr.f32.mxu0 0.0
    %3262 = vmatmul.mubr.f32.gmra.mxu0 %v3195
    %v3263 = vpop.f32.mrf.mxu0
    %v3264 = vadd.f32 %v3192, %v3263
    %v3265 = vpop.f32.mrf.mxu0
    %3266 = vdwg.mxu0
    %v3267 = vmax.f32 %v3264, 0.0
    %v3268 = vld [vmem:[%s85] sm:$0xff]
    %v3269 = vld [vmem:[%s85 + $0x8] sm:$0xff]
    %v3270 = vld [vmem:[%s85 + $0x10] sm:$0xff]
    %v3271 = vld [vmem:[%s85 + $0x18] sm:$0xff]
    %v3272 = vld [vmem:[%s87] sm:$0x1]
    %v3274 = vlaneseq
    %v3275 = vshrl.u32 %v3274, 7
    %v3276 = vsub.s32 0, %v3275
    %v3277 = vrot.slane %v3272, %v3276
    %v3280 = vsel %vm572, %v3267, 0
    %3282 = vmatprep.subr.mxu0 0.0
    %3283 = vmatpush1.msra.mxu0 0.0
    %3284 = vmatprep.subr.mxu0 0.0
    %3285 = vmatpush1.msra.mxu0 0.0
    %3286 = vmatprep.subr.mxu0 0.0
    %3287 = vmatpush1.msra.mxu0 0.0
    %3288 = vmatprep.subr.mxu0 0.0
    %3289 = vmatpush1.msra.mxu0 0.0
    %3290 = vmatprep.subr.mxu0 0.0
    %3291 = vmatpush1.msra.mxu0 0.0
    %3292 = vmatprep.subr.mxu0 0.0
    %3293 = vmatpush1.msra.mxu0 0.0
    %3294 = vmatprep.subr.mxu0 0.0
    %3295 = vmatpush1.msra.mxu0 0.0
    %3296 = vmatprep.subr.mxu0 0.0
    %3297 = vmatpush1.msra.mxu0 0.0
    %3298 = vmatprep.subr.mxu0 0.0
    %3299 = vmatpush1.msra.mxu0 0.0
    %3300 = vmatprep.subr.mxu0 0.0
    %3301 = vmatpush1.msra.mxu0 0.0
    %3302 = vmatprep.subr.mxu0 0.0
    %3303 = vmatpush1.msra.mxu0 0.0
    %3304 = vmatprep.subr.mxu0 0.0
    %3305 = vmatpush1.msra.mxu0 0.0
    %3306 = vmatprep.subr.mxu0 0.0
    %3307 = vmatpush1.msra.mxu0 %v3271
    %3308 = vmatprep.subr.mxu0 0.0
    %3309 = vmatpush1.msra.mxu0 %v3270
    %3310 = vmatprep.subr.mxu0 0.0
    %3311 = vmatpush1.msra.mxu0 %v3269
    %3312 = vmatprep.subr.mxu0 0.0
    %3313 = vmatpush1.msra.mxu0 %v3268
    %3314 = vmatprep.subr.mxu0 0.0
    %3315 = vmatpush2.msra.mxu0 0.0
    %3316 = vmatprep.subr.mxu0 0.0
    %3317 = vmatpush2.msra.mxu0 0.0
    %3318 = vmatprep.subr.mxu0 0.0
    %3319 = vmatpush2.msra.mxu0 0.0
    %3320 = vmatprep.subr.mxu0 0.0
    %3321 = vmatpush2.msra.mxu0 0.0
    %3322 = vmatprep.subr.mxu0 0.0
    %3323 = vmatpush2.msra.mxu0 0.0
    %3324 = vmatprep.subr.mxu0 0.0
    %3325 = vmatpush2.msra.mxu0 0.0
    %3326 = vmatprep.subr.mxu0 0.0
    %3327 = vmatpush2.msra.mxu0 0.0
    %3328 = vmatprep.subr.mxu0 0.0
    %3329 = vmatpush2.msra.mxu0 0.0
    %3330 = vmatprep.subr.mxu0 0.0
    %3331 = vmatpush2.msra.mxu0 0.0
    %3332 = vmatprep.subr.mxu0 0.0
    %3333 = vmatpush2.msra.mxu0 0.0
    %3334 = vmatprep.subr.mxu0 0.0
    %3335 = vmatpush2.msra.mxu0 0.0
    %3336 = vmatprep.subr.mxu0 0.0
    %3337 = vmatpush2.msra.mxu0 0.0
    %3338 = vmatprep.subr.mxu0 0.0
    %3339 = vmatpush2.msra.mxu0 0.0
    %3340 = vmatprep.subr.mxu0 0.0
    %3341 = vmatpush2.msra.mxu0 0.0
    %3342 = vmatprep.subr.mxu0 0.0
    %3343 = vmatpush2.msra.mxu0 0.0
    %3344 = vmatprep.subr.mxu0 0.0
    %3345 = vmatpush2.msra.mxu0 0.0
    %3346 = vmatprep.mubr.f32.mxu0 0.0
    %3347 = vmatmul.mubr.f32.gmra.mxu0 %v3280
    %v3348 = vpop.f32.mrf.mxu0
    %v3349 = vadd.f32 %v3277, %v3348
    %v3350 = vpop.f32.mrf.mxu0
    %3351 = vdwg.mxu0
    %vm3352 = vcmask 320512
    %3353 = vst.msk [vmem:[%s103] sm:$0x3] %vm3352, %v3349
    %v3354 = vld [vmem:[%s89] sm:$0xff]
    %v3355 = vld [vmem:[%s89 + $0x8] sm:$0xff]
    %v3356 = vld [vmem:[%s91] sm:$0x1]
    %v3358 = vlaneseq
    %v3359 = vshrl.u32 %v3358, 7
    %v3360 = vsub.s32 0, %v3359
    %v3361 = vrot.slane %v3356, %v3360
    %3363 = vmatprep.subr.mxu0 0.0
    %3364 = vmatpush1.msra.mxu0 0.0
    %3365 = vmatprep.subr.mxu0 0.0
    %3366 = vmatpush1.msra.mxu0 0.0
    %3367 = vmatprep.subr.mxu0 0.0
    %3368 = vmatpush1.msra.mxu0 0.0
    %3369 = vmatprep.subr.mxu0 0.0
    %3370 = vmatpush1.msra.mxu0 0.0
    %3371 = vmatprep.subr.mxu0 0.0
    %3372 = vmatpush1.msra.mxu0 0.0
    %3373 = vmatprep.subr.mxu0 0.0
    %3374 = vmatpush1.msra.mxu0 0.0
    %3375 = vmatprep.subr.mxu0 0.0
    %3376 = vmatpush1.msra.mxu0 0.0
    %3377 = vmatprep.subr.mxu0 0.0
    %3378 = vmatpush1.msra.mxu0 0.0
    %3379 = vmatprep.subr.mxu0 0.0
    %3380 = vmatpush1.msra.mxu0 0.0
    %3381 = vmatprep.subr.mxu0 0.0
    %3382 = vmatpush1.msra.mxu0 0.0
    %3383 = vmatprep.subr.mxu0 0.0
    %3384 = vmatpush1.msra.mxu0 0.0
    %3385 = vmatprep.subr.mxu0 0.0
    %3386 = vmatpush1.msra.mxu0 0.0
    %3387 = vmatprep.subr.mxu0 0.0
    %3388 = vmatpush1.msra.mxu0 0.0
    %3389 = vmatprep.subr.mxu0 0.0
    %3390 = vmatpush1.msra.mxu0 0.0
    %3391 = vmatprep.subr.mxu0 0.0
    %3392 = vmatpush1.msra.mxu0 %v3355
    %3393 = vmatprep.subr.mxu0 0.0
    %3394 = vmatpush1.msra.mxu0 %v3354
    %3395 = vmatprep.subr.mxu0 0.0
    %3396 = vmatpush2.msra.mxu0 0.0
    %3397 = vmatprep.subr.mxu0 0.0
    %3398 = vmatpush2.msra.mxu0 0.0
    %3399 = vmatprep.subr.mxu0 0.0
    %3400 = vmatpush2.msra.mxu0 0.0
    %3401 = vmatprep.subr.mxu0 0.0
    %3402 = vmatpush2.msra.mxu0 0.0
    %3403 = vmatprep.subr.mxu0 0.0
    %3404 = vmatpush2.msra.mxu0 0.0
    %3405 = vmatprep.subr.mxu0 0.0
    %3406 = vmatpush2.msra.mxu0 0.0
    %3407 = vmatprep.subr.mxu0 0.0
    %3408 = vmatpush2.msra.mxu0 0.0
    %3409 = vmatprep.subr.mxu0 0.0
    %3410 = vmatpush2.msra.mxu0 0.0
    %3411 = vmatprep.subr.mxu0 0.0
    %3412 = vmatpush2.msra.mxu0 0.0
    %3413 = vmatprep.subr.mxu0 0.0
    %3414 = vmatpush2.msra.mxu0 0.0
    %3415 = vmatprep.subr.mxu0 0.0
    %3416 = vmatpush2.msra.mxu0 0.0
    %3417 = vmatprep.subr.mxu0 0.0
    %3418 = vmatpush2.msra.mxu0 0.0
    %3419 = vmatprep.subr.mxu0 0.0
    %3420 = vmatpush2.msra.mxu0 0.0
    %3421 = vmatprep.subr.mxu0 0.0
    %3422 = vmatpush2.msra.mxu0 0.0
    %3423 = vmatprep.subr.mxu0 0.0
    %3424 = vmatpush2.msra.mxu0 0.0
    %3425 = vmatprep.subr.mxu0 0.0
    %3426 = vmatpush2.msra.mxu0 0.0
    %3427 = vmatprep.mubr.f32.mxu0 0.0
    %3428 = vmatmul.mubr.f32.gmra.mxu0 %v2746
    %v3429 = vpop.f32.mrf.mxu0
    %v3430 = vadd.f32 %v3361, %v3429
    %v3431 = vpop.f32.mrf.mxu0
    %3432 = vdwg.mxu0
    %v3433 = vmax.f32 %v3430, 0.0
    %v3434 = vld [vmem:[%s93] sm:$0xff]
    %v3435 = vld [vmem:[%s93 + $0x8] sm:$0xff]
    %v3436 = vld [vmem:[%s93 + $0x10] sm:$0xff]
    %v3437 = vld [vmem:[%s93 + $0x18] sm:$0xff]
    %v3438 = vld [vmem:[%s95] sm:$0x1]
    %v3440 = vlaneseq
    %v3441 = vshrl.u32 %v3440, 7
    %v3442 = vsub.s32 0, %v3441
    %v3443 = vrot.slane %v3438, %v3442
    %v3446 = vsel %vm572, %v3433, 0
    %3448 = vmatprep.subr.mxu0 0.0
    %3449 = vmatpush1.msra.mxu0 0.0
    %3450 = vmatprep.subr.mxu0 0.0
    %3451 = vmatpush1.msra.mxu0 0.0
    %3452 = vmatprep.subr.mxu0 0.0
    %3453 = vmatpush1.msra.mxu0 0.0
    %3454 = vmatprep.subr.mxu0 0.0
    %3455 = vmatpush1.msra.mxu0 0.0
    %3456 = vmatprep.subr.mxu0 0.0
    %3457 = vmatpush1.msra.mxu0 0.0
    %3458 = vmatprep.subr.mxu0 0.0
    %3459 = vmatpush1.msra.mxu0 0.0
    %3460 = vmatprep.subr.mxu0 0.0
    %3461 = vmatpush1.msra.mxu0 0.0
    %3462 = vmatprep.subr.mxu0 0.0
    %3463 = vmatpush1.msra.mxu0 0.0
    %3464 = vmatprep.subr.mxu0 0.0
    %3465 = vmatpush1.msra.mxu0 0.0
    %3466 = vmatprep.subr.mxu0 0.0
    %3467 = vmatpush1.msra.mxu0 0.0
    %3468 = vmatprep.subr.mxu0 0.0
    %3469 = vmatpush1.msra.mxu0 0.0
    %3470 = vmatprep.subr.mxu0 0.0
    %3471 = vmatpush1.msra.mxu0 0.0
    %3472 = vmatprep.subr.mxu0 0.0
    %3473 = vmatpush1.msra.mxu0 %v3437
    %3474 = vmatprep.subr.mxu0 0.0
    %3475 = vmatpush1.msra.mxu0 %v3436
    %3476 = vmatprep.subr.mxu0 0.0
    %3477 = vmatpush1.msra.mxu0 %v3435
    %3478 = vmatprep.subr.mxu0 0.0
    %3479 = vmatpush1.msra.mxu0 %v3434
    %3480 = vmatprep.subr.mxu0 0.0
    %3481 = vmatpush2.msra.mxu0 0.0
    %3482 = vmatprep.subr.mxu0 0.0
    %3483 = vmatpush2.msra.mxu0 0.0
    %3484 = vmatprep.subr.mxu0 0.0
    %3485 = vmatpush2.msra.mxu0 0.0
    %3486 = vmatprep.subr.mxu0 0.0
    %3487 = vmatpush2.msra.mxu0 0.0
    %3488 = vmatprep.subr.mxu0 0.0
    %3489 = vmatpush2.msra.mxu0 0.0
    %3490 = vmatprep.subr.mxu0 0.0
    %3491 = vmatpush2.msra.mxu0 0.0
    %3492 = vmatprep.subr.mxu0 0.0
    %3493 = vmatpush2.msra.mxu0 0.0
    %3494 = vmatprep.subr.mxu0 0.0
    %3495 = vmatpush2.msra.mxu0 0.0
    %3496 = vmatprep.subr.mxu0 0.0
    %3497 = vmatpush2.msra.mxu0 0.0
    %3498 = vmatprep.subr.mxu0 0.0
    %3499 = vmatpush2.msra.mxu0 0.0
    %3500 = vmatprep.subr.mxu0 0.0
    %3501 = vmatpush2.msra.mxu0 0.0
    %3502 = vmatprep.subr.mxu0 0.0
    %3503 = vmatpush2.msra.mxu0 0.0
    %3504 = vmatprep.subr.mxu0 0.0
    %3505 = vmatpush2.msra.mxu0 0.0
    %3506 = vmatprep.subr.mxu0 0.0
    %3507 = vmatpush2.msra.mxu0 0.0
    %3508 = vmatprep.subr.mxu0 0.0
    %3509 = vmatpush2.msra.mxu0 0.0
    %3510 = vmatprep.subr.mxu0 0.0
    %3511 = vmatpush2.msra.mxu0 0.0
    %3512 = vmatprep.mubr.f32.mxu0 0.0
    %3513 = vmatmul.mubr.f32.gmra.mxu0 %v3446
    %v3514 = vpop.f32.mrf.mxu0
    %v3515 = vadd.f32 %v3443, %v3514
    %v3516 = vpop.f32.mrf.mxu0
    %3517 = vdwg.mxu0
    %v3518 = vmax.f32 %v3515, 0.0
    %v3519 = vld [vmem:[%s97] sm:$0xff]
    %v3520 = vld [vmem:[%s97 + $0x8] sm:$0xff]
    %v3521 = vld [vmem:[%s97 + $0x10] sm:$0xff]
    %v3522 = vld [vmem:[%s97 + $0x18] sm:$0xff]
    %v3523 = vld [vmem:[%s99] sm:$0x1]
    %v3525 = vlaneseq
    %v3526 = vshrl.u32 %v3525, 7
    %v3527 = vsub.s32 0, %v3526
    %v3528 = vrot.slane %v3523, %v3527
    %v3531 = vsel %vm572, %v3518, 0
    %3533 = vmatprep.subr.mxu0 0.0
    %3534 = vmatpush1.msra.mxu0 0.0
    %3535 = vmatprep.subr.mxu0 0.0
    %3536 = vmatpush1.msra.mxu0 0.0
    %3537 = vmatprep.subr.mxu0 0.0
    %3538 = vmatpush1.msra.mxu0 0.0
    %3539 = vmatprep.subr.mxu0 0.0
    %3540 = vmatpush1.msra.mxu0 0.0
    %3541 = vmatprep.subr.mxu0 0.0
    %3542 = vmatpush1.msra.mxu0 0.0
    %3543 = vmatprep.subr.mxu0 0.0
    %3544 = vmatpush1.msra.mxu0 0.0
    %3545 = vmatprep.subr.mxu0 0.0
    %3546 = vmatpush1.msra.mxu0 0.0
    %3547 = vmatprep.subr.mxu0 0.0
    %3548 = vmatpush1.msra.mxu0 0.0
    %3549 = vmatprep.subr.mxu0 0.0
    %3550 = vmatpush1.msra.mxu0 0.0
    %3551 = vmatprep.subr.mxu0 0.0
    %3552 = vmatpush1.msra.mxu0 0.0
    %3553 = vmatprep.subr.mxu0 0.0
    %3554 = vmatpush1.msra.mxu0 0.0
    %3555 = vmatprep.subr.mxu0 0.0
    %3556 = vmatpush1.msra.mxu0 0.0
    %3557 = vmatprep.subr.mxu0 0.0
    %3558 = vmatpush1.msra.mxu0 %v3522
    %3559 = vmatprep.subr.mxu0 0.0
    %3560 = vmatpush1.msra.mxu0 %v3521
    %3561 = vmatprep.subr.mxu0 0.0
    %3562 = vmatpush1.msra.mxu0 %v3520
    %3563 = vmatprep.subr.mxu0 0.0
    %3564 = vmatpush1.msra.mxu0 %v3519
    %3565 = vmatprep.subr.mxu0 0.0
    %3566 = vmatpush2.msra.mxu0 0.0
    %3567 = vmatprep.subr.mxu0 0.0
    %3568 = vmatpush2.msra.mxu0 0.0
    %3569 = vmatprep.subr.mxu0 0.0
    %3570 = vmatpush2.msra.mxu0 0.0
    %3571 = vmatprep.subr.mxu0 0.0
    %3572 = vmatpush2.msra.mxu0 0.0
    %3573 = vmatprep.subr.mxu0 0.0
    %3574 = vmatpush2.msra.mxu0 0.0
    %3575 = vmatprep.subr.mxu0 0.0
    %3576 = vmatpush2.msra.mxu0 0.0
    %3577 = vmatprep.subr.mxu0 0.0
    %3578 = vmatpush2.msra.mxu0 0.0
    %3579 = vmatprep.subr.mxu0 0.0
    %3580 = vmatpush2.msra.mxu0 0.0
    %3581 = vmatprep.subr.mxu0 0.0
    %3582 = vmatpush2.msra.mxu0 0.0
    %3583 = vmatprep.subr.mxu0 0.0
    %3584 = vmatpush2.msra.mxu0 0.0
    %3585 = vmatprep.subr.mxu0 0.0
    %3586 = vmatpush2.msra.mxu0 0.0
    %3587 = vmatprep.subr.mxu0 0.0
    %3588 = vmatpush2.msra.mxu0 0.0
    %3589 = vmatprep.subr.mxu0 0.0
    %3590 = vmatpush2.msra.mxu0 0.0
    %3591 = vmatprep.subr.mxu0 0.0
    %3592 = vmatpush2.msra.mxu0 0.0
    %3593 = vmatprep.subr.mxu0 0.0
    %3594 = vmatpush2.msra.mxu0 0.0
    %3595 = vmatprep.subr.mxu0 0.0
    %3596 = vmatpush2.msra.mxu0 0.0
    %3597 = vmatprep.mubr.f32.mxu0 0.0
    %3598 = vmatmul.mubr.f32.gmra.mxu0 %v3531
    %v3599 = vpop.f32.mrf.mxu0
    %v3600 = vadd.f32 %v3528, %v3599
    %v3601 = vpop.f32.mrf.mxu0
    %3602 = vdwg.mxu0
    %vm3603 = vcmask 975872
    %3604 = vst.msk [vmem:[%s105] sm:$0x3] %vm3603, %v3600
    // Predicated region
    $region202: #{timeseries_vae_forward.3} parent=1 // pred_check
      _
    $region203: #{timeseries_vae_forward.3} parent=1 // pred_check_branch
      %3606 = sbr.rel (0) target = $region205
    $region204: #{timeseries_vae_forward.3} parent=1 // pred_region
      _
    $region205: #{timeseries_vae_forward.3} parent=1 // pred_fallthru
      _
    // Predicated region
    $region206: #{timeseries_vae_forward.3} parent=1 // pred_check
      _
    $region207: #{timeseries_vae_forward.3} parent=1 // pred_check_branch
      %3608 = sbr.rel (0) target = $region209
    $region208: #{timeseries_vae_forward.3} parent=1 // pred_region
      _
    $region209: #{timeseries_vae_forward.3} parent=1 // pred_fallthru
      _
    // Predicated region
    $region210: #{timeseries_vae_forward.3} parent=1 // pred_check
      _
    $region211: #{timeseries_vae_forward.3} parent=1 // pred_check_branch
      %3610 = sbr.rel (0) target = $region213
    $region212: #{timeseries_vae_forward.3} parent=1 // pred_region
      _
    $region213: #{timeseries_vae_forward.3} parent=1 // pred_fallthru
      _
    // Predicated region
    $region214: #{timeseries_vae_forward.3} parent=1 // pred_check
      _
    $region215: #{timeseries_vae_forward.3} parent=1 // pred_check_branch
      %3612 = sbr.rel (0) target = $region217
    $region216: #{timeseries_vae_forward.3} parent=1 // pred_region
      %s3614 = ssub.s32 16, 16
      %3615 = vsyncadd [#allocation3], %s3614
      %s3617 = sshll.u32 [#allocation2], 4
      %s3618 = int_to_ptr.vmem [resolvable:$true] %s3617
      %3620 = dma.vmem_to_hbm [thread:$0]  %s3618, 16, %s107, [#allocation3]
    $region217: #{timeseries_vae_forward.3} parent=1 // pred_fallthru
      _
    // Predicated region
    $region218: #{timeseries_vae_forward.3} parent=1 // pred_check
      _
    $region219: #{timeseries_vae_forward.3} parent=1 // pred_check_branch
      %3622 = sbr.rel (0) target = $region221
    $region220: #{timeseries_vae_forward.3} parent=1 // pred_region
      %s3624 = ssub.s32 32, 32
      %3625 = vsyncadd [#allocation5], %s3624
      %s3627 = sshll.u32 [#allocation4], 4
      %s3628 = int_to_ptr.vmem [resolvable:$true] %s3627
      %3630 = dma.vmem_to_hbm [thread:$0]  %s3628, 32, %s109, [#allocation5]
    $region221: #{timeseries_vae_forward.3} parent=1 // pred_fallthru
      _
    // Predicated region
    $region222: #{timeseries_vae_forward.3} parent=1 // pred_check
      _
    $region223: #{timeseries_vae_forward.3} parent=1 // pred_check_branch
      %3632 = sbr.rel (0) target = $region225
    $region224: #{timeseries_vae_forward.3} parent=1 // pred_region
      %s3634 = ssub.s32 32, 32
      %3635 = vsyncadd [#allocation5], %s3634
      %s3637 = sshll.u32 [#allocation6], 4
      %s3638 = int_to_ptr.vmem [resolvable:$true] %s3637
      %3640 = dma.vmem_to_hbm [thread:$0]  %s3638, 32, %s111, [#allocation5]
    $region225: #{timeseries_vae_forward.3} parent=1 // pred_fallthru
      _
    // Predicated region
    $region226: #{timeseries_vae_forward.3} parent=1 // pred_check
      _
    $region227: #{timeseries_vae_forward.3} parent=1 // pred_check_branch
      %3642 = sbr.rel (0) target = $region229
    $region228: #{timeseries_vae_forward.3} parent=1 // pred_region
      _
    $region229: #{timeseries_vae_forward.3} parent=1 // pred_fallthru
      _
    // Predicated region
    $region230: #{timeseries_vae_forward.3} parent=1 // pred_check
      _
    $region231: #{timeseries_vae_forward.3} parent=1 // pred_check_branch
      %3644 = sbr.rel (0) target = $region233
    $region232: #{timeseries_vae_forward.3} parent=1 // pred_region
      _
    $region233: #{timeseries_vae_forward.3} parent=1 // pred_fallthru
      _
    // Predicated region
    $region234: #{timeseries_vae_forward.3} parent=1 // pred_check
      _
    $region235: #{timeseries_vae_forward.3} parent=1 // pred_check_branch
      %3646 = sbr.rel (0) target = $region237
    $region236: #{timeseries_vae_forward.3} parent=1 // pred_region
      _
    $region237: #{timeseries_vae_forward.3} parent=1 // pred_fallthru
      _
    // Predicated region
    $region238: #{timeseries_vae_forward.3} parent=1 // pred_check
      _
    $region239: #{timeseries_vae_forward.3} parent=1 // pred_check_branch
      %3648 = sbr.rel (0) target = $region241
    $region240: #{timeseries_vae_forward.3} parent=1 // pred_region
      %3649 = dma.done [#allocation3], 16
    $region241: #{timeseries_vae_forward.3} parent=1 // pred_fallthru
      _
    // Predicated region
    $region242: #{timeseries_vae_forward.3} parent=1 // pred_check
      _
    $region243: #{timeseries_vae_forward.3} parent=1 // pred_check_branch
      %3651 = sbr.rel (0) target = $region245
    $region244: #{timeseries_vae_forward.3} parent=1 // pred_region
      %3652 = dma.done [#allocation5], 32
    $region245: #{timeseries_vae_forward.3} parent=1 // pred_fallthru
      _
    // Predicated region
    $region246: #{timeseries_vae_forward.3} parent=1 // pred_check
      _
    $region247: #{timeseries_vae_forward.3} parent=1 // pred_check_branch
      %3654 = sbr.rel (0) target = $region249
    $region248: #{timeseries_vae_forward.3} parent=1 // pred_region
      %3655 = dma.done [#allocation5], 32
    $region249: #{timeseries_vae_forward.3} parent=1 // pred_fallthru
      _
    %3656 = vsyncpa [#allocation3], 1
    %3657 = vsyncpa [#allocation5], 1

</llo_original>
